<compile_context>
chip_gen: v5e
topology: v5e:2x2
jax: 0.10.0
libtpu: 0.0.40
codegen_flags: <defaults>
</compile_context>

<pallas_src>
import functools

import jax
import jax.numpy as jnp
from jax import lax
from jax.experimental import pallas as pl
from jax.experimental.pallas import tpu as pltpu


def _basic_block_kernel(H, W, C,
                        x_ref, w1_ref, w2_ref,
                        s1_ref, b1_ref, s2_ref, b2_ref,
                        out_ref, pad_ref, slab_ref):
    """One grid step = one image of the batch.

    x_ref    : (1, H, W, C)       unpadded input tile (VMEM)
    w1_ref   : (9*C, C)  bf16     conv1 weights, tap-major (kh, kw, cin)
    w2_ref   : (9*C, C)  bf16     conv2 weights, tap-major
    s*/b*    : (1, C)    f32      folded BN scale / bias
    out_ref  : (1, H, W, C)
    pad_ref  : (H+2, W+2, C) f32  persistent padded scratch (reused for
                                  both the input and the mid activation)
    slab_ref : (H*W, 9*C)    f32  im2col slab scratch (one matmul per conv)
    """
    # --- keep the zero halo valid: re-zero only the thin strips.  The
    #     scratch persists across grid steps, the interior is fully
    #     overwritten every step and never touches the halo, and this is
    #     safe under any per-core sharding of the (parallel) batch axis. ---
    zrow = jnp.zeros((1, W + 2, C), jnp.float32)
    zcol = jnp.zeros((H, 1, C), jnp.float32)
    pad_ref[0:1, :, :] = zrow
    pad_ref[H + 1:H + 2, :, :] = zrow
    pad_ref[1:H + 1, 0:1, :] = zcol
    pad_ref[1:H + 1, W + 1:W + 2, :] = zcol

    # --- stage the input interior (padding done in-kernel, no wrapper pad) ---
    x = x_ref[0]                                   # (H, W, C) f32
    pad_ref[1:H + 1, 1:W + 1, :] = x

    def conv3x3(w_ref):
        # Build the tap-major (H*W, 9*C) slab from the current contents of
        # pad_ref, then a single MXU matmul with K = 9*C (bf16 operands,
        # f32 accumulation).
        for kh in range(3):
            for kw in range(3):
                t = kh * 3 + kw
                slab_ref[:, t * C:(t + 1) * C] = (
                    pad_ref[kh:kh + H, kw:kw + W, :].reshape(H * W, C))
        return jnp.dot(slab_ref[...].astype(jnp.bfloat16), w_ref[...],
                       preferred_element_type=jnp.float32)

    # --- conv1 -> folded BN1 -> ReLU ---
    y = jnp.maximum(conv3x3(w1_ref) * s1_ref[...] + b1_ref[...], 0.0)

    # Reuse the padded scratch for the intermediate activation (the padded
    # input is dead now; the residual comes from x_ref).  Halo stays zero.
    pad_ref[1:H + 1, 1:W + 1, :] = y.reshape(H, W, C)

    # --- conv2 -> folded BN2 -> residual add -> ReLU ---
    z = conv3x3(w2_ref) * s2_ref[...] + b2_ref[...]
    z = z + x.reshape(H * W, C)                    # identity residual (f32)
    out_ref[...] = jnp.maximum(z, 0.0).reshape(1, H, W, C)


def basic_block(x_nhwc, w1_hwio, w2_hwio,
                g1, be1, m1, v1, g2, be2, m2, v2, eps=1e-5):
    """x_nhwc: (N, H, W, C) float32; w*_hwio: (3, 3, C, C)."""
    N, H, W, C = x_nhwc.shape

    # Fold eval-mode BatchNorm into per-channel scale / bias.
    inv1 = g1 / jnp.sqrt(v1 + eps)
    inv2 = g2 / jnp.sqrt(v2 + eps)
    s1 = inv1.reshape(1, C).astype(jnp.float32)
    b1 = (be1 - m1 * inv1).reshape(1, C).astype(jnp.float32)
    s2 = inv2.reshape(1, C).astype(jnp.float32)
    b2 = (be2 - m2 * inv2).reshape(1, C).astype(jnp.float32)

    x = x_nhwc.astype(jnp.float32)
    # Tap-major (kh, kw, cin) x cout weight matrices, bf16 for the MXU.
    w1m = w1_hwio.reshape(9 * C, C).astype(jnp.bfloat16)
    w2m = w2_hwio.reshape(9 * C, C).astype(jnp.bfloat16)

    kernel = functools.partial(_basic_block_kernel, H, W, C)

    # Advisory cost hint for XLA's scheduler around the custom call.
    flops = 2 * (2 * N * H * W * (9 * C) * C)          # two convs
    bytes_accessed = (x.size * 4 + N * H * W * C * 4   # in + out
                      + 2 * 9 * C * C * 2 + 4 * C * 4)  # weights + BN
    cost = pl.CostEstimate(flops=flops, transcendentals=0,
                           bytes_accessed=bytes_accessed)

    return pl.pallas_call(
        kernel,
        out_shape=jax.ShapeDtypeStruct((N, H, W, C), jnp.float32),
        grid_spec=pltpu.PrefetchScalarGridSpec(
            num_scalar_prefetch=0,
            grid=(N,),
            in_specs=[
                pl.BlockSpec((1, H, W, C), lambda n: (n, 0, 0, 0)),
                pl.BlockSpec((9 * C, C), lambda n: (0, 0)),
                pl.BlockSpec((9 * C, C), lambda n: (0, 0)),
                pl.BlockSpec((1, C), lambda n: (0, 0)),
                pl.BlockSpec((1, C), lambda n: (0, 0)),
                pl.BlockSpec((1, C), lambda n: (0, 0)),
                pl.BlockSpec((1, C), lambda n: (0, 0)),
            ],
            out_specs=pl.BlockSpec((1, H, W, C), lambda n: (n, 0, 0, 0)),
            scratch_shapes=[
                pltpu.VMEM((H + 2, W + 2, C), jnp.float32),   # padded (reused)
                pltpu.VMEM((H * W, 9 * C), jnp.float32),      # im2col slab
            ],
        ),
        compiler_params=pltpu.CompilerParams(
            dimension_semantics=("parallel",),
            vmem_limit_bytes=32 * 1024 * 1024),
        cost_estimate=cost,
    )(x, w1m, w2m, s1, b1, s2, b2)


def _reference(x_nhwc, w1_hwio, w2_hwio, g1, be1, m1, v1, g2, be2, m2, v2,
               eps=1e-5, conv_dtype=jnp.float32):
    """Pure-JAX reference. conv_dtype=bfloat16 mirrors the kernel's MXU cast."""
    dn = lax.conv_dimension_numbers(x_nhwc.shape, w1_hwio.shape,
                                    ("NHWC", "HWIO", "NHWC"))

    def conv(a, w):
        return lax.conv_general_dilated(
            a.astype(conv_dtype), w.astype(conv_dtype), (1, 1),
            ((1, 1), (1, 1)), dimension_numbers=dn,
            preferred_element_type=jnp.float32)

    out = conv(x_nhwc, w1_hwio)
    out = (out - m1) * (g1 / jnp.sqrt(v1 + eps)) + be1
    out = jnp.maximum(out, 0.0)
    out = conv(out, w2_hwio)
    out = (out - m2) * (g2 / jnp.sqrt(v2 + eps)) + be2
    out = out + x_nhwc
    return jnp.maximum(out, 0.0)


if __name__ == "__main__":
    # Small shapes consistent with the module: inplanes == planes, stride=1,
    # downsample=None (identity residual). PyTorch input would be NCHW
    # (2, 4, 16, 16); the kernel uses the NHWC equivalent (2, 16, 16, 4).
    N, H, W, C = 2, 16, 16, 4

    key = jax.random.PRNGKey(0)
    kx, kw1, kw2, km1, km2, kv1, kv2 = jax.random.split(key, 7)

    x = jax.random.normal(kx, (N, H, W, C), jnp.float32)
    w1 = jax.random.normal(kw1, (3, 3, C, C), jnp.float32) * 0.1
    w2 = jax.random.normal(kw2, (3, 3, C, C), jnp.float32) * 0.1

    # BatchNorm2d parameters / running stats (inference mode).
    g1 = jnp.ones((C,), jnp.float32)
    be1 = jnp.zeros((C,), jnp.float32)
    m1 = jax.random.normal(km1, (C,), jnp.float32) * 0.1
    v1 = jnp.abs(jax.random.normal(kv1, (C,), jnp.float32)) * 0.5 + 0.5
    g2 = jnp.ones((C,), jnp.float32)
    be2 = jnp.zeros((C,), jnp.float32)
    m2 = jax.random.normal(km2, (C,), jnp.float32) * 0.1
    v2 = jnp.abs(jax.random.normal(kv2, (C,), jnp.float32)) * 0.5 + 0.5

    # TODO(synk): inference_pkg bookkeeping (input_dict/output_dict clones) is
    # host-side side-effect logging with no kernel equivalent; omitted.

    out = jax.block_until_ready(
        basic_block(x, w1, w2, g1, be1, m1, v1, g2, be2, m2, v2))
    assert out.shape == (N, H, W, C)

    # Tight check against a reference that mirrors the kernel's bf16 MXU
    # inputs (f32 accumulation, f32 BN / residual).
    ref_bf16 = _reference(x, w1, w2, g1, be1, m1, v1, g2, be2, m2, v2,
                          conv_dtype=jnp.bfloat16)
    assert jnp.allclose(out, ref_bf16, atol=5e-3, rtol=5e-3), (
        float(jnp.max(jnp.abs(out - ref_bf16))))

    # Loose check against the exact f32 module semantics (bf16 matmul inputs
    # are the only source of difference).
    ref_f32 = _reference(x, w1, w2, g1, be1, m1, v1, g2, be2, m2, v2)
    assert jnp.allclose(out, ref_f32, atol=5e-2, rtol=5e-2), (
        float(jnp.max(jnp.abs(out - ref_f32))))

    print("KERNEL_OK")
</pallas_src>

<mosaic_0001>
module attributes {stable_mosaic.version = 11 : i64} {
  func.func @_basic_block_kernel(%arg0: i32, %arg1: memref<1x16x16x4xf32, #tpu.memory_space<vmem>>, %arg2: memref<36x4xbf16, #tpu.memory_space<vmem>>, %arg3: memref<36x4xbf16, #tpu.memory_space<vmem>>, %arg4: memref<1x4xf32, #tpu.memory_space<vmem>>, %arg5: memref<1x4xf32, #tpu.memory_space<vmem>>, %arg6: memref<1x4xf32, #tpu.memory_space<vmem>>, %arg7: memref<1x4xf32, #tpu.memory_space<vmem>>, %arg8: memref<1x16x16x4xf32, #tpu.memory_space<vmem>>, %arg9: memref<18x18x4xf32, #tpu.memory_space<vmem>>, %arg10: memref<256x36xf32, #tpu.memory_space<vmem>>) attributes {dimension_semantics = [#tpu.dimension_semantics<parallel>], iteration_bounds = array<i64: 2>, scalar_prefetch = 0 : i64, scratch_operands = 2 : i64, tpu.core_type = #tpu.core_type<tc>, window_params = [{transform_indices = @transform_0, window_bounds = array<i64: 1, 16, 16, 4>}, {pipeline_mode = #tpu.pipeline_mode<synchronous>, transform_indices = @transform_1, window_bounds = array<i64: 36, 4>}, {pipeline_mode = #tpu.pipeline_mode<synchronous>, transform_indices = @transform_2, window_bounds = array<i64: 36, 4>}, {pipeline_mode = #tpu.pipeline_mode<synchronous>, transform_indices = @transform_3, window_bounds = array<i64: 1, 4>}, {pipeline_mode = #tpu.pipeline_mode<synchronous>, transform_indices = @transform_4, window_bounds = array<i64: 1, 4>}, {pipeline_mode = #tpu.pipeline_mode<synchronous>, transform_indices = @transform_5, window_bounds = array<i64: 1, 4>}, {pipeline_mode = #tpu.pipeline_mode<synchronous>, transform_indices = @transform_6, window_bounds = array<i64: 1, 4>}, {transform_indices = @transform_7, window_bounds = array<i64: 1, 16, 16, 4>}]} {
    %cst = arith.constant 0.000000e+00 : f32
    %0 = vector.broadcast %cst : f32 to vector<1x18x4xf32>
    %cst_0 = arith.constant 0.000000e+00 : f32
    %1 = vector.broadcast %cst_0 : f32 to vector<16x1x4xf32>
    %c0 = arith.constant 0 : index
    %c0_1 = arith.constant 0 : index
    %c0_2 = arith.constant 0 : index
    %2 = vector.load %arg9[%c0, %c0_1, %c0_2] : memref<18x18x4xf32, #tpu.memory_space<vmem>>, vector<1x18x4xf32>
    tpu.vector_store %arg9[%c0, %c0_1, %c0_2], %0 {strides = array<i32>} : memref<18x18x4xf32, #tpu.memory_space<vmem>>, vector<1x18x4xf32>,
    %c17 = arith.constant 17 : index
    %c0_3 = arith.constant 0 : index
    %c0_4 = arith.constant 0 : index
    %3 = vector.load %arg9[%c17, %c0_3, %c0_4] : memref<18x18x4xf32, #tpu.memory_space<vmem>>, vector<1x18x4xf32>
    tpu.vector_store %arg9[%c17, %c0_3, %c0_4], %0 {strides = array<i32>} : memref<18x18x4xf32, #tpu.memory_space<vmem>>, vector<1x18x4xf32>,
    %c1 = arith.constant 1 : index
    %c0_5 = arith.constant 0 : index
    %c0_6 = arith.constant 0 : index
    %4 = vector.load %arg9[%c1, %c0_5, %c0_6] : memref<18x18x4xf32, #tpu.memory_space<vmem>>, vector<16x1x4xf32>
    tpu.vector_store %arg9[%c1, %c0_5, %c0_6], %1 {strides = array<i32>} : memref<18x18x4xf32, #tpu.memory_space<vmem>>, vector<16x1x4xf32>,
    %c1_7 = arith.constant 1 : index
    %c17_8 = arith.constant 17 : index
    %c0_9 = arith.constant 0 : index
    %5 = vector.load %arg9[%c1_7, %c17_8, %c0_9] : memref<18x18x4xf32, #tpu.memory_space<vmem>>, vector<16x1x4xf32>
    tpu.vector_store %arg9[%c1_7, %c17_8, %c0_9], %1 {strides = array<i32>} : memref<18x18x4xf32, #tpu.memory_space<vmem>>, vector<16x1x4xf32>,
    %c0_10 = arith.constant 0 : index
    %c0_11 = arith.constant 0 : index
    %c0_12 = arith.constant 0 : index
    %c0_13 = arith.constant 0 : index
    %6 = vector.load %arg1[%c0_10, %c0_11, %c0_12, %c0_13] : memref<1x16x16x4xf32, #tpu.memory_space<vmem>>, vector<1x16x16x4xf32>
    %7 = vector.shape_cast %6 : vector<1x16x16x4xf32> to vector<16x16x4xf32>
    %c1_14 = arith.constant 1 : index
    %c1_15 = arith.constant 1 : index
    %c0_16 = arith.constant 0 : index
    %8 = vector.load %arg9[%c1_14, %c1_15, %c0_16] : memref<18x18x4xf32, #tpu.memory_space<vmem>>, vector<16x16x4xf32>
    tpu.vector_store %arg9[%c1_14, %c1_15, %c0_16], %7 {strides = array<i32>} : memref<18x18x4xf32, #tpu.memory_space<vmem>>, vector<16x16x4xf32>,
    %c0_17 = arith.constant 0 : index
    %c0_18 = arith.constant 0 : index
    %c0_19 = arith.constant 0 : index
    %9 = vector.load %arg9[%c0_17, %c0_18, %c0_19] : memref<18x18x4xf32, #tpu.memory_space<vmem>>, vector<16x16x4xf32>
    %10 = vector.shape_cast %9 : vector<16x16x4xf32> to vector<256x4xf32>
    %c0_20 = arith.constant 0 : index
    %c0_21 = arith.constant 0 : index
    %11 = vector.load %arg10[%c0_20, %c0_21] : memref<256x36xf32, #tpu.memory_space<vmem>>, vector<256x4xf32>
    tpu.vector_store %arg10[%c0_20, %c0_21], %10 {strides = array<i32>} : memref<256x36xf32, #tpu.memory_space<vmem>>, vector<256x4xf32>,
    %c0_22 = arith.constant 0 : index
    %c1_23 = arith.constant 1 : index
    %c0_24 = arith.constant 0 : index
    %12 = vector.load %arg9[%c0_22, %c1_23, %c0_24] : memref<18x18x4xf32, #tpu.memory_space<vmem>>, vector<16x16x4xf32>
    %13 = vector.shape_cast %12 : vector<16x16x4xf32> to vector<256x4xf32>
    %c0_25 = arith.constant 0 : index
    %c4 = arith.constant 4 : index
    %14 = vector.load %arg10[%c0_25, %c4] : memref<256x36xf32, #tpu.memory_space<vmem>>, vector<256x4xf32>
    tpu.vector_store %arg10[%c0_25, %c4], %13 {strides = array<i32>} : memref<256x36xf32, #tpu.memory_space<vmem>>, vector<256x4xf32>,
    %c0_26 = arith.constant 0 : index
    %c2 = arith.constant 2 : index
    %c0_27 = arith.constant 0 : index
    %15 = vector.load %arg9[%c0_26, %c2, %c0_27] : memref<18x18x4xf32, #tpu.memory_space<vmem>>, vector<16x16x4xf32>
    %16 = vector.shape_cast %15 : vector<16x16x4xf32> to vector<256x4xf32>
    %c0_28 = arith.constant 0 : index
    %c8 = arith.constant 8 : index
    %17 = vector.load %arg10[%c0_28, %c8] : memref<256x36xf32, #tpu.memory_space<vmem>>, vector<256x4xf32>
    tpu.vector_store %arg10[%c0_28, %c8], %16 {strides = array<i32>} : memref<256x36xf32, #tpu.memory_space<vmem>>, vector<256x4xf32>,
    %c1_29 = arith.constant 1 : index
    %c0_30 = arith.constant 0 : index
    %c0_31 = arith.constant 0 : index
    %18 = vector.load %arg9[%c1_29, %c0_30, %c0_31] : memref<18x18x4xf32, #tpu.memory_space<vmem>>, vector<16x16x4xf32>
    %19 = vector.shape_cast %18 : vector<16x16x4xf32> to vector<256x4xf32>
    %c0_32 = arith.constant 0 : index
    %c12 = arith.constant 12 : index
    %20 = vector.load %arg10[%c0_32, %c12] : memref<256x36xf32, #tpu.memory_space<vmem>>, vector<256x4xf32>
    tpu.vector_store %arg10[%c0_32, %c12], %19 {strides = array<i32>} : memref<256x36xf32, #tpu.memory_space<vmem>>, vector<256x4xf32>,
    %c1_33 = arith.constant 1 : index
    %c1_34 = arith.constant 1 : index
    %c0_35 = arith.constant 0 : index
    %21 = vector.load %arg9[%c1_33, %c1_34, %c0_35] : memref<18x18x4xf32, #tpu.memory_space<vmem>>, vector<16x16x4xf32>
    %22 = vector.shape_cast %21 : vector<16x16x4xf32> to vector<256x4xf32>
    %c0_36 = arith.constant 0 : index
    %c16 = arith.constant 16 : index
    %23 = vector.load %arg10[%c0_36, %c16] : memref<256x36xf32, #tpu.memory_space<vmem>>, vector<256x4xf32>
    tpu.vector_store %arg10[%c0_36, %c16], %22 {strides = array<i32>} : memref<256x36xf32, #tpu.memory_space<vmem>>, vector<256x4xf32>,
    %c1_37 = arith.constant 1 : index
    %c2_38 = arith.constant 2 : index
    %c0_39 = arith.constant 0 : index
    %24 = vector.load %arg9[%c1_37, %c2_38, %c0_39] : memref<18x18x4xf32, #tpu.memory_space<vmem>>, vector<16x16x4xf32>
    %25 = vector.shape_cast %24 : vector<16x16x4xf32> to vector<256x4xf32>
    %c0_40 = arith.constant 0 : index
    %c20 = arith.constant 20 : index
    %26 = vector.load %arg10[%c0_40, %c20] : memref<256x36xf32, #tpu.memory_space<vmem>>, vector<256x4xf32>
    tpu.vector_store %arg10[%c0_40, %c20], %25 {strides = array<i32>} : memref<256x36xf32, #tpu.memory_space<vmem>>, vector<256x4xf32>,
    %c2_41 = arith.constant 2 : index
    %c0_42 = arith.constant 0 : index
    %c0_43 = arith.constant 0 : index
    %27 = vector.load %arg9[%c2_41, %c0_42, %c0_43] : memref<18x18x4xf32, #tpu.memory_space<vmem>>, vector<16x16x4xf32>
    %28 = vector.shape_cast %27 : vector<16x16x4xf32> to vector<256x4xf32>
    %c0_44 = arith.constant 0 : index
    %c24 = arith.constant 24 : index
    %29 = vector.load %arg10[%c0_44, %c24] : memref<256x36xf32, #tpu.memory_space<vmem>>, vector<256x4xf32>
    tpu.vector_store %arg10[%c0_44, %c24], %28 {strides = array<i32>} : memref<256x36xf32, #tpu.memory_space<vmem>>, vector<256x4xf32>,
    %c2_45 = arith.constant 2 : index
    %c1_46 = arith.constant 1 : index
    %c0_47 = arith.constant 0 : index
    %30 = vector.load %arg9[%c2_45, %c1_46, %c0_47] : memref<18x18x4xf32, #tpu.memory_space<vmem>>, vector<16x16x4xf32>
    %31 = vector.shape_cast %30 : vector<16x16x4xf32> to vector<256x4xf32>
    %c0_48 = arith.constant 0 : index
    %c28 = arith.constant 28 : index
    %32 = vector.load %arg10[%c0_48, %c28] : memref<256x36xf32, #tpu.memory_space<vmem>>, vector<256x4xf32>
    tpu.vector_store %arg10[%c0_48, %c28], %31 {strides = array<i32>} : memref<256x36xf32, #tpu.memory_space<vmem>>, vector<256x4xf32>,
    %c2_49 = arith.constant 2 : index
    %c2_50 = arith.constant 2 : index
    %c0_51 = arith.constant 0 : index
    %33 = vector.load %arg9[%c2_49, %c2_50, %c0_51] : memref<18x18x4xf32, #tpu.memory_space<vmem>>, vector<16x16x4xf32>
    %34 = vector.shape_cast %33 : vector<16x16x4xf32> to vector<256x4xf32>
    %c0_52 = arith.constant 0 : index
    %c32 = arith.constant 32 : index
    %35 = vector.load %arg10[%c0_52, %c32] : memref<256x36xf32, #tpu.memory_space<vmem>>, vector<256x4xf32>
    tpu.vector_store %arg10[%c0_52, %c32], %34 {strides = array<i32>} : memref<256x36xf32, #tpu.memory_space<vmem>>, vector<256x4xf32>,
    %c0_53 = arith.constant 0 : index
    %c0_54 = arith.constant 0 : index
    %36 = vector.load %arg10[%c0_53, %c0_54] : memref<256x36xf32, #tpu.memory_space<vmem>>, vector<256x36xf32>
    %37 = arith.truncf %36 : vector<256x36xf32> to vector<256x36xbf16>
    %c0_55 = arith.constant 0 : index
    %c0_56 = arith.constant 0 : index
    %38 = vector.load %arg2[%c0_55, %c0_56] : memref<36x4xbf16, #tpu.memory_space<vmem>>, vector<36x4xbf16>
    %cst_57 = arith.constant dense<0.000000e+00> : vector<256x4xf32>
    %39 = tpu.matmul %37, %38, %cst_57 {dimension_numbers = #tpu.dot_dimension_numbers<[1], [0], [0], [1], [0, 0, 1, 1], [], []>} : vector<256x36xbf16>, vector<36x4xbf16>, vector<256x4xf32> -> vector<256x4xf32>
    %c0_58 = arith.constant 0 : index
    %c0_59 = arith.constant 0 : index
    %40 = vector.load %arg4[%c0_58, %c0_59] : memref<1x4xf32, #tpu.memory_space<vmem>>, vector<1x4xf32>
    %41 = vector.broadcast %40 : vector<1x4xf32> to vector<256x4xf32>
    %42 = arith.mulf %39, %41 : vector<256x4xf32>
    %c0_60 = arith.constant 0 : index
    %c0_61 = arith.constant 0 : index
    %43 = vector.load %arg5[%c0_60, %c0_61] : memref<1x4xf32, #tpu.memory_space<vmem>>, vector<1x4xf32>
    %44 = vector.broadcast %43 : vector<1x4xf32> to vector<256x4xf32>
    %45 = arith.addf %42, %44 : vector<256x4xf32>
    %cst_62 = arith.constant 0.000000e+00 : f32
    %46 = vector.broadcast %cst_62 : f32 to vector<256x4xf32>
    %47 = arith.maximumf %45, %46 : vector<256x4xf32>
    %48 = vector.shape_cast %47 : vector<256x4xf32> to vector<16x16x4xf32>
    %c1_63 = arith.constant 1 : index
    %c1_64 = arith.constant 1 : index
    %c0_65 = arith.constant 0 : index
    %49 = vector.load %arg9[%c1_63, %c1_64, %c0_65] : memref<18x18x4xf32, #tpu.memory_space<vmem>>, vector<16x16x4xf32>
    tpu.vector_store %arg9[%c1_63, %c1_64, %c0_65], %48 {strides = array<i32>} : memref<18x18x4xf32, #tpu.memory_space<vmem>>, vector<16x16x4xf32>,
    %c0_66 = arith.constant 0 : index
    %c0_67 = arith.constant 0 : index
    %c0_68 = arith.constant 0 : index
    %50 = vector.load %arg9[%c0_66, %c0_67, %c0_68] : memref<18x18x4xf32, #tpu.memory_space<vmem>>, vector<16x16x4xf32>
    %51 = vector.shape_cast %50 : vector<16x16x4xf32> to vector<256x4xf32>
    %c0_69 = arith.constant 0 : index
    %c0_70 = arith.constant 0 : index
    %52 = vector.load %arg10[%c0_69, %c0_70] : memref<256x36xf32, #tpu.memory_space<vmem>>, vector<256x4xf32>
    tpu.vector_store %arg10[%c0_69, %c0_70], %51 {strides = array<i32>} : memref<256x36xf32, #tpu.memory_space<vmem>>, vector<256x4xf32>,
    %c0_71 = arith.constant 0 : index
    %c1_72 = arith.constant 1 : index
    %c0_73 = arith.constant 0 : index
    %53 = vector.load %arg9[%c0_71, %c1_72, %c0_73] : memref<18x18x4xf32, #tpu.memory_space<vmem>>, vector<16x16x4xf32>
    %54 = vector.shape_cast %53 : vector<16x16x4xf32> to vector<256x4xf32>
    %c0_74 = arith.constant 0 : index
    %c4_75 = arith.constant 4 : index
    %55 = vector.load %arg10[%c0_74, %c4_75] : memref<256x36xf32, #tpu.memory_space<vmem>>, vector<256x4xf32>
    tpu.vector_store %arg10[%c0_74, %c4_75], %54 {strides = array<i32>} : memref<256x36xf32, #tpu.memory_space<vmem>>, vector<256x4xf32>,
    %c0_76 = arith.constant 0 : index
    %c2_77 = arith.constant 2 : index
    %c0_78 = arith.constant 0 : index
    %56 = vector.load %arg9[%c0_76, %c2_77, %c0_78] : memref<18x18x4xf32, #tpu.memory_space<vmem>>, vector<16x16x4xf32>
    %57 = vector.shape_cast %56 : vector<16x16x4xf32> to vector<256x4xf32>
    %c0_79 = arith.constant 0 : index
    %c8_80 = arith.constant 8 : index
    %58 = vector.load %arg10[%c0_79, %c8_80] : memref<256x36xf32, #tpu.memory_space<vmem>>, vector<256x4xf32>
    tpu.vector_store %arg10[%c0_79, %c8_80], %57 {strides = array<i32>} : memref<256x36xf32, #tpu.memory_space<vmem>>, vector<256x4xf32>,
    %c1_81 = arith.constant 1 : index
    %c0_82 = arith.constant 0 : index
    %c0_83 = arith.constant 0 : index
    %59 = vector.load %arg9[%c1_81, %c0_82, %c0_83] : memref<18x18x4xf32, #tpu.memory_space<vmem>>, vector<16x16x4xf32>
    %60 = vector.shape_cast %59 : vector<16x16x4xf32> to vector<256x4xf32>
    %c0_84 = arith.constant 0 : index
    %c12_85 = arith.constant 12 : index
    %61 = vector.load %arg10[%c0_84, %c12_85] : memref<256x36xf32, #tpu.memory_space<vmem>>, vector<256x4xf32>
    tpu.vector_store %arg10[%c0_84, %c12_85], %60 {strides = array<i32>} : memref<256x36xf32, #tpu.memory_space<vmem>>, vector<256x4xf32>,
    %c1_86 = arith.constant 1 : index
    %c1_87 = arith.constant 1 : index
    %c0_88 = arith.constant 0 : index
    %62 = vector.load %arg9[%c1_86, %c1_87, %c0_88] : memref<18x18x4xf32, #tpu.memory_space<vmem>>, vector<16x16x4xf32>
    %63 = vector.shape_cast %62 : vector<16x16x4xf32> to vector<256x4xf32>
    %c0_89 = arith.constant 0 : index
    %c16_90 = arith.constant 16 : index
    %64 = vector.load %arg10[%c0_89, %c16_90] : memref<256x36xf32, #tpu.memory_space<vmem>>, vector<256x4xf32>
    tpu.vector_store %arg10[%c0_89, %c16_90], %63 {strides = array<i32>} : memref<256x36xf32, #tpu.memory_space<vmem>>, vector<256x4xf32>,
    %c1_91 = arith.constant 1 : index
    %c2_92 = arith.constant 2 : index
    %c0_93 = arith.constant 0 : index
    %65 = vector.load %arg9[%c1_91, %c2_92, %c0_93] : memref<18x18x4xf32, #tpu.memory_space<vmem>>, vector<16x16x4xf32>
    %66 = vector.shape_cast %65 : vector<16x16x4xf32> to vector<256x4xf32>
    %c0_94 = arith.constant 0 : index
    %c20_95 = arith.constant 20 : index
    %67 = vector.load %arg10[%c0_94, %c20_95] : memref<256x36xf32, #tpu.memory_space<vmem>>, vector<256x4xf32>
    tpu.vector_store %arg10[%c0_94, %c20_95], %66 {strides = array<i32>} : memref<256x36xf32, #tpu.memory_space<vmem>>, vector<256x4xf32>,
    %c2_96 = arith.constant 2 : index
    %c0_97 = arith.constant 0 : index
    %c0_98 = arith.constant 0 : index
    %68 = vector.load %arg9[%c2_96, %c0_97, %c0_98] : memref<18x18x4xf32, #tpu.memory_space<vmem>>, vector<16x16x4xf32>
    %69 = vector.shape_cast %68 : vector<16x16x4xf32> to vector<256x4xf32>
    %c0_99 = arith.constant 0 : index
    %c24_100 = arith.constant 24 : index
    %70 = vector.load %arg10[%c0_99, %c24_100] : memref<256x36xf32, #tpu.memory_space<vmem>>, vector<256x4xf32>
    tpu.vector_store %arg10[%c0_99, %c24_100], %69 {strides = array<i32>} : memref<256x36xf32, #tpu.memory_space<vmem>>, vector<256x4xf32>,
    %c2_101 = arith.constant 2 : index
    %c1_102 = arith.constant 1 : index
    %c0_103 = arith.constant 0 : index
    %71 = vector.load %arg9[%c2_101, %c1_102, %c0_103] : memref<18x18x4xf32, #tpu.memory_space<vmem>>, vector<16x16x4xf32>
    %72 = vector.shape_cast %71 : vector<16x16x4xf32> to vector<256x4xf32>
    %c0_104 = arith.constant 0 : index
    %c28_105 = arith.constant 28 : index
    %73 = vector.load %arg10[%c0_104, %c28_105] : memref<256x36xf32, #tpu.memory_space<vmem>>, vector<256x4xf32>
    tpu.vector_store %arg10[%c0_104, %c28_105], %72 {strides = array<i32>} : memref<256x36xf32, #tpu.memory_space<vmem>>, vector<256x4xf32>,
    %c2_106 = arith.constant 2 : index
    %c2_107 = arith.constant 2 : index
    %c0_108 = arith.constant 0 : index
    %74 = vector.load %arg9[%c2_106, %c2_107, %c0_108] : memref<18x18x4xf32, #tpu.memory_space<vmem>>, vector<16x16x4xf32>
    %75 = vector.shape_cast %74 : vector<16x16x4xf32> to vector<256x4xf32>
    %c0_109 = arith.constant 0 : index
    %c32_110 = arith.constant 32 : index
    %76 = vector.load %arg10[%c0_109, %c32_110] : memref<256x36xf32, #tpu.memory_space<vmem>>, vector<256x4xf32>
    tpu.vector_store %arg10[%c0_109, %c32_110], %75 {strides = array<i32>} : memref<256x36xf32, #tpu.memory_space<vmem>>, vector<256x4xf32>,
    %c0_111 = arith.constant 0 : index
    %c0_112 = arith.constant 0 : index
    %77 = vector.load %arg10[%c0_111, %c0_112] : memref<256x36xf32, #tpu.memory_space<vmem>>, vector<256x36xf32>
    %78 = arith.truncf %77 : vector<256x36xf32> to vector<256x36xbf16>
    %c0_113 = arith.constant 0 : index
    %c0_114 = arith.constant 0 : index
    %79 = vector.load %arg3[%c0_113, %c0_114] : memref<36x4xbf16, #tpu.memory_space<vmem>>, vector<36x4xbf16>
    %cst_115 = arith.constant dense<0.000000e+00> : vector<256x4xf32>
    %80 = tpu.matmul %78, %79, %cst_115 {dimension_numbers = #tpu.dot_dimension_numbers<[1], [0], [0], [1], [0, 0, 1, 1], [], []>} : vector<256x36xbf16>, vector<36x4xbf16>, vector<256x4xf32> -> vector<256x4xf32>
    %c0_116 = arith.constant 0 : index
    %c0_117 = arith.constant 0 : index
    %81 = vector.load %arg6[%c0_116, %c0_117] : memref<1x4xf32, #tpu.memory_space<vmem>>, vector<1x4xf32>
    %82 = vector.broadcast %81 : vector<1x4xf32> to vector<256x4xf32>
    %83 = arith.mulf %80, %82 : vector<256x4xf32>
    %c0_118 = arith.constant 0 : index
    %c0_119 = arith.constant 0 : index
    %84 = vector.load %arg7[%c0_118, %c0_119] : memref<1x4xf32, #tpu.memory_space<vmem>>, vector<1x4xf32>
    %85 = vector.broadcast %84 : vector<1x4xf32> to vector<256x4xf32>
    %86 = arith.addf %83, %85 : vector<256x4xf32>
    %87 = vector.shape_cast %7 : vector<16x16x4xf32> to vector<256x4xf32>
    %88 = arith.addf %86, %87 : vector<256x4xf32>
    %cst_120 = arith.constant 0.000000e+00 : f32
    %89 = vector.broadcast %cst_120 : f32 to vector<256x4xf32>
    %90 = arith.maximumf %88, %89 : vector<256x4xf32>
    %91 = vector.shape_cast %90 : vector<256x4xf32> to vector<1x16x16x4xf32>
    %c0_121 = arith.constant 0 : index
    %c0_122 = arith.constant 0 : index
    %c0_123 = arith.constant 0 : index
    %c0_124 = arith.constant 0 : index
    %92 = vector.load %arg8[%c0_121, %c0_122, %c0_123, %c0_124] : memref<1x16x16x4xf32, #tpu.memory_space<vmem>>, vector<1x16x16x4xf32>
    tpu.vector_store %arg8[%c0_121, %c0_122, %c0_123, %c0_124], %91 {strides = array<i32>} : memref<1x16x16x4xf32, #tpu.memory_space<vmem>>, vector<1x16x16x4xf32>,
    return
  }
  func.func @transform_0(%arg0: i32) -> (i32, i32, i32, i32) {
    %c0_i32 = arith.constant 0 : i32
    %c0_i32_0 = arith.constant 0 : i32
    %c0_i32_1 = arith.constant 0 : i32
    %c0_i32_2 = arith.constant 0 : i32
    return %arg0, %c0_i32, %c0_i32_0, %c0_i32_1 : i32, i32, i32, i32
  }
  func.func @transform_1(%arg0: i32) -> (i32, i32) {
    %c0_i32 = arith.constant 0 : i32
    %c0_i32_0 = arith.constant 0 : i32
    %c0_i32_1 = arith.constant 0 : i32
    return %c0_i32, %c0_i32_0 : i32, i32
  }
  func.func @transform_2(%arg0: i32) -> (i32, i32) {
    %c0_i32 = arith.constant 0 : i32
    %c0_i32_0 = arith.constant 0 : i32
    %c0_i32_1 = arith.constant 0 : i32
    return %c0_i32, %c0_i32_0 : i32, i32
  }
  func.func @transform_3(%arg0: i32) -> (i32, i32) {
    %c0_i32 = arith.constant 0 : i32
    %c0_i32_0 = arith.constant 0 : i32
    %c0_i32_1 = arith.constant 0 : i32
    return %c0_i32, %c0_i32_0 : i32, i32
  }
  func.func @transform_4(%arg0: i32) -> (i32, i32) {
    %c0_i32 = arith.constant 0 : i32
    %c0_i32_0 = arith.constant 0 : i32
    %c0_i32_1 = arith.constant 0 : i32
    return %c0_i32, %c0_i32_0 : i32, i32
  }
  func.func @transform_5(%arg0: i32) -> (i32, i32) {
    %c0_i32 = arith.constant 0 : i32
    %c0_i32_0 = arith.constant 0 : i32
    %c0_i32_1 = arith.constant 0 : i32
    return %c0_i32, %c0_i32_0 : i32, i32
  }
  func.func @transform_6(%arg0: i32) -> (i32, i32) {
    %c0_i32 = arith.constant 0 : i32
    %c0_i32_0 = arith.constant 0 : i32
    %c0_i32_1 = arith.constant 0 : i32
    return %c0_i32, %c0_i32_0 : i32, i32
  }
  func.func @transform_7(%arg0: i32) -> (i32, i32, i32, i32) {
    %c0_i32 = arith.constant 0 : i32
    %c0_i32_0 = arith.constant 0 : i32
    %c0_i32_1 = arith.constant 0 : i32
    %c0_i32_2 = arith.constant 0 : i32
    return %arg0, %c0_i32, %c0_i32_0, %c0_i32_1 : i32, i32, i32, i32
  }
}

</mosaic_0001>

<llo_original>
// kernel: tpu_custom_call.1
$region0: #{tpu_custom_call.1}
  #allocation0 [shape = 'u32[]', space=smem, size = 0x4, offset = 0x4, fixed_abs, tag = 'smem constant byte address 0x4 - core index']
  #allocation1 [shape = 'u32[72,128]{1,0:T(1,128)}', space=vmem, size = 0x9000, scoped, tag = 'internal scratch']
  #allocation2 [shape = 'f32[18,18,4]{2,1,0:T(8,128)}', space=vmem, size = 0x36000, scoped, tag = 'scratch operand']
  #allocation3 [shape = 'f32[256,36]{1,0:T(8,128)}', space=vmem, size = 0x20000, scoped, tag = 'scratch operand']
  %s0 = inlined_call_operand.vmem [shape: f32[2,16,16,4], index: 0, kind: input, shape index: {}]
  %s1 = inlined_call_operand.vmem [shape: bf16[36,4], index: 1, kind: input, shape index: {}]
  %s2 = inlined_call_operand.vmem [shape: bf16[36,4], index: 2, kind: input, shape index: {}]
  %s3 = inlined_call_operand.vmem [shape: f32[1,4], index: 3, kind: input, shape index: {}]
  %s4 = inlined_call_operand.vmem [shape: f32[1,4], index: 4, kind: input, shape index: {}]
  %s5 = inlined_call_operand.vmem [shape: f32[1,4], index: 5, kind: input, shape index: {}]
  %s6 = inlined_call_operand.vmem [shape: f32[1,4], index: 6, kind: input, shape index: {}]
  %s7 = inlined_call_operand.vmem [shape: f32[2,16,16,4], index: 7, kind: output, shape index: {}]
  %s8 = sld [smem:[#allocation0]]
  $region61: #{tpu_custom_call.1} parent=0
    _
  %s10 = ssub.s32 1, %s8
  %s11 = scalar_select 0, %s10, %s8
  loop: start=0, step=1, limit=4
  $region2: #{tpu_custom_call.1} parent=0 // loop_pre_header
    _
  $region3: #{tpu_custom_call.1} parent=0 // loop_header
    %s13 = sphi 0, %s17
    %p14 = scmp.ge.s32.totalorder %s13, 4
    %s23 = sphi 0, %s25
    %s26 = sphi 0, %s23
    %s27 = sphi 0, %s26
    %s43 = sphi 0, %s27
    %s47 = sphi 0, %s47
    %s49 = sphi 0, %s47
    %s50 = sphi 0, %s49
    %s64 = sphi 0, %s50
    %s68 = sphi 0, %s68
    %s70 = sphi 0, %s68
    %s71 = sphi 0, %s70
    %s85 = sphi 0, %s71
    %s89 = sphi 0, %s89
    %s91 = sphi 0, %s89
    %s92 = sphi 0, %s91
    %s106 = sphi 0, %s92
    %s110 = sphi 0, %s110
    %s112 = sphi 0, %s110
    %s113 = sphi 0, %s112
    %s127 = sphi 0, %s113
    %s131 = sphi 0, %s131
    %s133 = sphi 0, %s131
    %s134 = sphi 0, %s133
    %s148 = sphi 0, %s134
    %s152 = sphi 0, %s152
    %s154 = sphi 0, %s152
    %s155 = sphi 0, %s154
    %s169 = sphi 0, %s155
    %s175 = sphi 0, %s177
    %s178 = sphi 0, %s175
    %s179 = sphi 0, %s178
    %s195 = sphi 0, %s179
  $region4: #{tpu_custom_call.1} parent=0 // loop_header_branch
    %16 = sbr.rel (%p14) target = $region8
  $region5: #{tpu_custom_call.1} parent=0 // loop_body
    %s18 = ssub.s32 %s13, 1
    %s19 = ssub.s32 %s13, 2
    %s20 = sadd.s32 %s13, 1
    %s21 = ssub.s32 %s13, %s20
    %p22 = scmp.eq.s32.totalorder %s21, 0
    %s24 = sadd.s32 %s23, 1
    %s25 = scalar_select %p22, %s23, %s24
    %p28 = pneg %p22
    %p29 = scmp.eq.s32.totalorder %s13, 1
    %p30 = por %p28, %p29
    %p31 = scmp.ne.s32.totalorder %s23, %s26
    %p32 = scmp.eq.s32.totalorder %s13, 0
    %p33 = por %p31, %p32
    %p34 = scmp.ne.s32.totalorder %s23, %s26
    %p35 = scmp.eq.s32.totalorder %s18, 1
    %p36 = por %p34, %p35
    %p37 = scmp.ne.s32.totalorder %s26, %s27
    %p38 = scmp.eq.s32.totalorder %s18, 0
    %p39 = por %p37, %p38
    %p40 = scmp.ne.s32.totalorder %s26, %s27
    %p41 = scmp.eq.s32.totalorder %s19, 1
    %p42 = por %p40, %p41
    %p44 = scmp.ne.s32.totalorder %s27, %s43
    %p45 = scmp.eq.s32.totalorder %s19, 0
    %p46 = por %p44, %p45
    %s48 = sadd.s32 %s47, 1
    %p51 = scmp.eq.s32.totalorder %s13, 1
    %p52 = scmp.ne.s32.totalorder %s47, %s49
    %p53 = scmp.eq.s32.totalorder %s13, 0
    %p54 = por %p52, %p53
    %p55 = scmp.ne.s32.totalorder %s47, %s49
    %p56 = scmp.eq.s32.totalorder %s18, 1
    %p57 = por %p55, %p56
    %p58 = scmp.ne.s32.totalorder %s49, %s50
    %p59 = scmp.eq.s32.totalorder %s18, 0
    %p60 = por %p58, %p59
    %p61 = scmp.ne.s32.totalorder %s49, %s50
    %p62 = scmp.eq.s32.totalorder %s19, 1
    %p63 = por %p61, %p62
    %p65 = scmp.ne.s32.totalorder %s50, %s64
    %p66 = scmp.eq.s32.totalorder %s19, 0
    %p67 = por %p65, %p66
    %s69 = sadd.s32 %s68, 1
    %p72 = scmp.eq.s32.totalorder %s13, 1
    %p73 = scmp.ne.s32.totalorder %s68, %s70
    %p74 = scmp.eq.s32.totalorder %s13, 0
    %p75 = por %p73, %p74
    %p76 = scmp.ne.s32.totalorder %s68, %s70
    %p77 = scmp.eq.s32.totalorder %s18, 1
    %p78 = por %p76, %p77
    %p79 = scmp.ne.s32.totalorder %s70, %s71
    %p80 = scmp.eq.s32.totalorder %s18, 0
    %p81 = por %p79, %p80
    %p82 = scmp.ne.s32.totalorder %s70, %s71
    %p83 = scmp.eq.s32.totalorder %s19, 1
    %p84 = por %p82, %p83
    %p86 = scmp.ne.s32.totalorder %s71, %s85
    %p87 = scmp.eq.s32.totalorder %s19, 0
    %p88 = por %p86, %p87
    %s90 = sadd.s32 %s89, 1
    %p93 = scmp.eq.s32.totalorder %s13, 1
    %p94 = scmp.ne.s32.totalorder %s89, %s91
    %p95 = scmp.eq.s32.totalorder %s13, 0
    %p96 = por %p94, %p95
    %p97 = scmp.ne.s32.totalorder %s89, %s91
    %p98 = scmp.eq.s32.totalorder %s18, 1
    %p99 = por %p97, %p98
    %p100 = scmp.ne.s32.totalorder %s91, %s92
    %p101 = scmp.eq.s32.totalorder %s18, 0
    %p102 = por %p100, %p101
    %p103 = scmp.ne.s32.totalorder %s91, %s92
    %p104 = scmp.eq.s32.totalorder %s19, 1
    %p105 = por %p103, %p104
    %p107 = scmp.ne.s32.totalorder %s92, %s106
    %p108 = scmp.eq.s32.totalorder %s19, 0
    %p109 = por %p107, %p108
    %s111 = sadd.s32 %s110, 1
    %p114 = scmp.eq.s32.totalorder %s13, 1
    %p115 = scmp.ne.s32.totalorder %s110, %s112
    %p116 = scmp.eq.s32.totalorder %s13, 0
    %p117 = por %p115, %p116
    %p118 = scmp.ne.s32.totalorder %s110, %s112
    %p119 = scmp.eq.s32.totalorder %s18, 1
    %p120 = por %p118, %p119
    %p121 = scmp.ne.s32.totalorder %s112, %s113
    %p122 = scmp.eq.s32.totalorder %s18, 0
    %p123 = por %p121, %p122
    %p124 = scmp.ne.s32.totalorder %s112, %s113
    %p125 = scmp.eq.s32.totalorder %s19, 1
    %p126 = por %p124, %p125
    %p128 = scmp.ne.s32.totalorder %s113, %s127
    %p129 = scmp.eq.s32.totalorder %s19, 0
    %p130 = por %p128, %p129
    %s132 = sadd.s32 %s131, 1
    %p135 = scmp.eq.s32.totalorder %s13, 1
    %p136 = scmp.ne.s32.totalorder %s131, %s133
    %p137 = scmp.eq.s32.totalorder %s13, 0
    %p138 = por %p136, %p137
    %p139 = scmp.ne.s32.totalorder %s131, %s133
    %p140 = scmp.eq.s32.totalorder %s18, 1
    %p141 = por %p139, %p140
    %p142 = scmp.ne.s32.totalorder %s133, %s134
    %p143 = scmp.eq.s32.totalorder %s18, 0
    %p144 = por %p142, %p143
    %p145 = scmp.ne.s32.totalorder %s133, %s134
    %p146 = scmp.eq.s32.totalorder %s19, 1
    %p147 = por %p145, %p146
    %p149 = scmp.ne.s32.totalorder %s134, %s148
    %p150 = scmp.eq.s32.totalorder %s19, 0
    %p151 = por %p149, %p150
    %s153 = sadd.s32 %s152, 1
    %p156 = scmp.eq.s32.totalorder %s13, 1
    %p157 = scmp.ne.s32.totalorder %s152, %s154
    %p158 = scmp.eq.s32.totalorder %s13, 0
    %p159 = por %p157, %p158
    %p160 = scmp.ne.s32.totalorder %s152, %s154
    %p161 = scmp.eq.s32.totalorder %s18, 1
    %p162 = por %p160, %p161
    %p163 = scmp.ne.s32.totalorder %s154, %s155
    %p164 = scmp.eq.s32.totalorder %s18, 0
    %p165 = por %p163, %p164
    %p166 = scmp.ne.s32.totalorder %s154, %s155
    %p167 = scmp.eq.s32.totalorder %s19, 1
    %p168 = por %p166, %p167
    %p170 = scmp.ne.s32.totalorder %s155, %s169
    %p171 = scmp.eq.s32.totalorder %s19, 0
    %p172 = por %p170, %p171
    %s173 = ssub.s32 %s13, %s20
    %p174 = scmp.eq.s32.totalorder %s173, 0
    %s176 = sadd.s32 %s175, 1
    %s177 = scalar_select %p174, %s175, %s176
    %p180 = pneg %p174
    %p181 = scmp.eq.s32.totalorder %s13, 1
    %p182 = por %p180, %p181
    %p183 = scmp.ne.s32.totalorder %s175, %s178
    %p184 = scmp.eq.s32.totalorder %s13, 0
    %p185 = por %p183, %p184
    %p186 = scmp.ne.s32.totalorder %s175, %s178
    %p187 = scmp.eq.s32.totalorder %s18, 1
    %p188 = por %p186, %p187
    %p189 = scmp.ne.s32.totalorder %s178, %s179
    %p190 = scmp.eq.s32.totalorder %s18, 0
    %p191 = por %p189, %p190
    %p192 = scmp.ne.s32.totalorder %s178, %s179
    %p193 = scmp.eq.s32.totalorder %s19, 1
    %p194 = por %p192, %p193
    %p196 = scmp.ne.s32.totalorder %s179, %s195
    %p197 = scmp.eq.s32.totalorder %s19, 0
    %p198 = por %p196, %p197
    %p199 = scmp.le.s32.totalorder 1, %s13
    %p200 = scmp.lt.s32.totalorder %s13, 3
    %p201 = pnand %p199, %p200
    %p202 = pneg %p201
    // Predicated region
    $region9: #{tpu_custom_call.1} parent=5 // pred_check
      _
    $region10: #{tpu_custom_call.1} parent=5 // pred_check_branch
      %204 = sbr.rel (%p201) target = $region12
    $region11: #{tpu_custom_call.1} parent=5 // pred_region
      %s205 = ssub.s32 %s13, 1
      // Predicated region
      $region13: #{tpu_custom_call.1} parent=11 // pred_check
        %p206 = pneg %p60
      $region14: #{tpu_custom_call.1} parent=11 // pred_check_branch
        %208 = sbr.rel (%p206) target = $region16
      $region15: #{tpu_custom_call.1} parent=11 // pred_region
        _
      $region16: #{tpu_custom_call.1} parent=11 // pred_fallthru
        _
      // Predicated region
      $region17: #{tpu_custom_call.1} parent=11 // pred_check
        %p209 = pneg %p81
      $region18: #{tpu_custom_call.1} parent=11 // pred_check_branch
        %211 = sbr.rel (%p209) target = $region20
      $region19: #{tpu_custom_call.1} parent=11 // pred_region
        _
      $region20: #{tpu_custom_call.1} parent=11 // pred_fallthru
        _
      // Predicated region
      $region21: #{tpu_custom_call.1} parent=11 // pred_check
        %p212 = pneg %p102
      $region22: #{tpu_custom_call.1} parent=11 // pred_check_branch
        %214 = sbr.rel (%p212) target = $region24
      $region23: #{tpu_custom_call.1} parent=11 // pred_region
        _
      $region24: #{tpu_custom_call.1} parent=11 // pred_fallthru
        _
      // Predicated region
      $region25: #{tpu_custom_call.1} parent=11 // pred_check
        %p215 = pneg %p123
      $region26: #{tpu_custom_call.1} parent=11 // pred_check_branch
        %217 = sbr.rel (%p215) target = $region28
      $region27: #{tpu_custom_call.1} parent=11 // pred_region
        _
      $region28: #{tpu_custom_call.1} parent=11 // pred_fallthru
        _
      // Predicated region
      $region29: #{tpu_custom_call.1} parent=11 // pred_check
        %p218 = pneg %p144
      $region30: #{tpu_custom_call.1} parent=11 // pred_check_branch
        %220 = sbr.rel (%p218) target = $region32
      $region31: #{tpu_custom_call.1} parent=11 // pred_region
        _
      $region32: #{tpu_custom_call.1} parent=11 // pred_fallthru
        _
      // Predicated region
      $region33: #{tpu_custom_call.1} parent=11 // pred_check
        %p221 = pneg %p165
      $region34: #{tpu_custom_call.1} parent=11 // pred_check_branch
        %223 = sbr.rel (%p221) target = $region36
      $region35: #{tpu_custom_call.1} parent=11 // pred_region
        _
      $region36: #{tpu_custom_call.1} parent=11 // pred_fallthru
        _
    $region12: #{tpu_custom_call.1} parent=5 // pred_fallthru
      _
    %p224 = scmp.lt.s32.totalorder %s13, 2
    // Predicated region
    $region37: #{tpu_custom_call.1} parent=5 // pred_check
      %p225 = pneg %p224
    $region38: #{tpu_custom_call.1} parent=5 // pred_check_branch
      %227 = sbr.rel (%p225) target = $region40
    $region39: #{tpu_custom_call.1} parent=5 // pred_region
      // Predicated region
      $region41: #{tpu_custom_call.1} parent=39 // pred_check
        %p228 = pneg %p33
      $region42: #{tpu_custom_call.1} parent=39 // pred_check_branch
        %230 = sbr.rel (%p228) target = $region44
      $region43: #{tpu_custom_call.1} parent=39 // pred_region
        %p231 = scmp.lt.s32.totalorder %s13, 1
        %s232 = scalar_select %p231, %s13, 1
        %s233 = smul.addr %s232, 32
        %s234 = smul.addr %s233, 8
        %s235 = scalar_lea.vmem %s0, %s234
      $region44: #{tpu_custom_call.1} parent=39 // pred_fallthru
        _
    $region40: #{tpu_custom_call.1} parent=5 // pred_fallthru
      _
    %p236 = scmp.le.s32.totalorder 1, %s13
    %p237 = scmp.lt.s32.totalorder %s13, 3
    %p238 = pnand %p236, %p237
    %p239 = pneg %p238
    // Predicated region
    $region45: #{tpu_custom_call.1} parent=5 // pred_check
      _
    $region46: #{tpu_custom_call.1} parent=5 // pred_check_branch
      %241 = sbr.rel (%p238) target = $region48
    $region47: #{tpu_custom_call.1} parent=5 // pred_region
      %s242 = ssub.s32 %s13, 1
      %p243 = scmp.lt.s32.totalorder %s18, 1
      %s244 = scalar_select %p243, %s18, 1
      %s245 = smul.addr %s244, 32
      %s246 = smul.addr %s245, 8
      %s247 = scalar_lea.vmem %s0, %s246
      %p248 = pneg %p39
      %p249 = pneg %p36
      %p250 = pneg %p60
      %p251 = pneg %p57
      %p252 = pneg %p81
      %p253 = pneg %p78
      %p254 = pneg %p102
      %p255 = pneg %p99
      %p256 = pneg %p123
      %p257 = pneg %p120
      %p258 = pneg %p144
      %p259 = pneg %p141
      %p260 = pneg %p165
      %p261 = pneg %p162
      %p262 = pneg %p191
      %p263 = pneg %p188
      %p264 = scmp.lt.s32.totalorder %s18, 1
      %s265 = scalar_select %p264, %s18, 1
      %s266 = smul.addr %s265, 32
      %s267 = smul.addr %s266, 8
      %s268 = scalar_lea.vmem %s7, %s267
      %p269 = scmp.lt.s32.totalorder %s18, 1
      %s270 = scalar_select %p269, %s18, 1
      %s271 = smul.addr %s270, 32
      %s272 = smul.addr %s271, 8
      %s273 = scalar_lea.vmem %s0, %s272
      %p274 = scmp.lt.s32.totalorder %s18, 1
      %s275 = scalar_select %p274, %s18, 1
      %s276 = smul.addr %s275, 32
      %s277 = smul.addr %s276, 8
      %s278 = scalar_lea.vmem %s7, %s277
      %vm280 = vcmask 31744
      %281 = vst.msk [vmem:[#allocation2] sm:$0xff] %vm280, 0.0
      %282 = vst.msk [vmem:[#allocation2 + $0x8] sm:$0xff] %vm280, 0.0
      %vm283 = vcmask 25600
      %284 = vst.msk [vmem:[#allocation2 + $0x10] sm:$0x3] %vm283, 0.0
      %s285 = scalar_lea.vmem [#allocation2], 408
      %286 = vst.msk [vmem:[%s285] sm:$0xff] %vm280, 0.0
      %287 = vst.msk [vmem:[%s285 + $0x8] sm:$0xff] %vm280, 0.0
      %288 = vst.msk [vmem:[%s285 + $0x10] sm:$0x3] %vm283, 0.0
      %s289 = scalar_lea.vmem [#allocation2], 24
      %vm290 = vcmask 24576
      %291 = vst.msk [vmem:[%s289] sm:$0x1] %vm290, 0.0
      %292 = vst.msk [vmem:[%s289 + $0x18] sm:$0x1] %vm290, 0.0
      %293 = vst.msk [vmem:[%s289 + $0x30] sm:$0x1] %vm290, 0.0
      %294 = vst.msk [vmem:[%s289 + $0x48] sm:$0x1] %vm290, 0.0
      %295 = vst.msk [vmem:[%s289 + $0x60] sm:$0x1] %vm290, 0.0
      %296 = vst.msk [vmem:[%s289 + $0x78] sm:$0x1] %vm290, 0.0
      %297 = vst.msk [vmem:[%s289 + $0x90] sm:$0x1] %vm290, 0.0
      %298 = vst.msk [vmem:[%s289 + $0xa8] sm:$0x1] %vm290, 0.0
      %299 = vst.msk [vmem:[%s289 + $0xc0] sm:$0x1] %vm290, 0.0
      %300 = vst.msk [vmem:[%s289 + $0xd8] sm:$0x1] %vm290, 0.0
      %301 = vst.msk [vmem:[%s289 + $0xf0] sm:$0x1] %vm290, 0.0
      %302 = vst.msk [vmem:[%s289 + $0x108] sm:$0x1] %vm290, 0.0
      %303 = vst.msk [vmem:[%s289 + $0x120] sm:$0x1] %vm290, 0.0
      %304 = vst.msk [vmem:[%s289 + $0x138] sm:$0x1] %vm290, 0.0
      %305 = vst.msk [vmem:[%s289 + $0x150] sm:$0x1] %vm290, 0.0
      %306 = vst.msk [vmem:[%s289 + $0x168] sm:$0x1] %vm290, 0.0
      %307 = vst.msk [vmem:[%s289 + $0x11] sm:$0x1] %vm290, 0.0
      %308 = vst.msk [vmem:[%s289 + $0x29] sm:$0x1] %vm290, 0.0
      %309 = vst.msk [vmem:[%s289 + $0x41] sm:$0x1] %vm290, 0.0
      %310 = vst.msk [vmem:[%s289 + $0x59] sm:$0x1] %vm290, 0.0
      %311 = vst.msk [vmem:[%s289 + $0x71] sm:$0x1] %vm290, 0.0
      %312 = vst.msk [vmem:[%s289 + $0x89] sm:$0x1] %vm290, 0.0
      %313 = vst.msk [vmem:[%s289 + $0xa1] sm:$0x1] %vm290, 0.0
      %314 = vst.msk [vmem:[%s289 + $0xb9] sm:$0x1] %vm290, 0.0
      %315 = vst.msk [vmem:[%s289 + $0xd1] sm:$0x1] %vm290, 0.0
      %316 = vst.msk [vmem:[%s289 + $0xe9] sm:$0x1] %vm290, 0.0
      %317 = vst.msk [vmem:[%s289 + $0x101] sm:$0x1] %vm290, 0.0
      %318 = vst.msk [vmem:[%s289 + $0x119] sm:$0x1] %vm290, 0.0
      %319 = vst.msk [vmem:[%s289 + $0x131] sm:$0x1] %vm290, 0.0
      %320 = vst.msk [vmem:[%s289 + $0x149] sm:$0x1] %vm290, 0.0
      %321 = vst.msk [vmem:[%s289 + $0x161] sm:$0x1] %vm290, 0.0
      %322 = vst.msk [vmem:[%s289 + $0x179] sm:$0x1] %vm290, 0.0
      %v323 = vld [vmem:[%s273] sm:$0xff]
      %v324 = vld [vmem:[%s273 + $0x8] sm:$0xff]
      %v325 = vld [vmem:[%s273 + $0x10] sm:$0xff]
      %v326 = vld [vmem:[%s273 + $0x18] sm:$0xff]
      %v327 = vld [vmem:[%s273 + $0x20] sm:$0xff]
      %v328 = vld [vmem:[%s273 + $0x28] sm:$0xff]
      %v329 = vld [vmem:[%s273 + $0x30] sm:$0xff]
      %v330 = vld [vmem:[%s273 + $0x38] sm:$0xff]
      %v331 = vld [vmem:[%s273 + $0x40] sm:$0xff]
      %v332 = vld [vmem:[%s273 + $0x48] sm:$0xff]
      %v333 = vld [vmem:[%s273 + $0x50] sm:$0xff]
      %v334 = vld [vmem:[%s273 + $0x58] sm:$0xff]
      %v335 = vld [vmem:[%s273 + $0x60] sm:$0xff]
      %v336 = vld [vmem:[%s273 + $0x68] sm:$0xff]
      %v337 = vld [vmem:[%s273 + $0x70] sm:$0xff]
      %v338 = vld [vmem:[%s273 + $0x78] sm:$0xff]
      %v339 = vld [vmem:[%s273 + $0x80] sm:$0xff]
      %v340 = vld [vmem:[%s273 + $0x88] sm:$0xff]
      %v341 = vld [vmem:[%s273 + $0x90] sm:$0xff]
      %v342 = vld [vmem:[%s273 + $0x98] sm:$0xff]
      %v343 = vld [vmem:[%s273 + $0xa0] sm:$0xff]
      %v344 = vld [vmem:[%s273 + $0xa8] sm:$0xff]
      %v345 = vld [vmem:[%s273 + $0xb0] sm:$0xff]
      %v346 = vld [vmem:[%s273 + $0xb8] sm:$0xff]
      %v347 = vld [vmem:[%s273 + $0xc0] sm:$0xff]
      %v348 = vld [vmem:[%s273 + $0xc8] sm:$0xff]
      %v349 = vld [vmem:[%s273 + $0xd0] sm:$0xff]
      %v350 = vld [vmem:[%s273 + $0xd8] sm:$0xff]
      %v351 = vld [vmem:[%s273 + $0xe0] sm:$0xff]
      %v352 = vld [vmem:[%s273 + $0xe8] sm:$0xff]
      %v353 = vld [vmem:[%s273 + $0xf0] sm:$0xff]
      %v354 = vld [vmem:[%s273 + $0xf8] sm:$0xff]
      %355 = vst.msk [vmem:[%s289 + $0x1] sm:$0xff] %vm280, %v323
      %356 = vst.msk [vmem:[%s289 + $0x9] sm:$0xff] %vm280, %v324
      %357 = vst.msk [vmem:[%s289 + $0x19] sm:$0xff] %vm280, %v325
      %358 = vst.msk [vmem:[%s289 + $0x21] sm:$0xff] %vm280, %v326
      %359 = vst.msk [vmem:[%s289 + $0x31] sm:$0xff] %vm280, %v327
      %360 = vst.msk [vmem:[%s289 + $0x39] sm:$0xff] %vm280, %v328
      %361 = vst.msk [vmem:[%s289 + $0x49] sm:$0xff] %vm280, %v329
      %362 = vst.msk [vmem:[%s289 + $0x51] sm:$0xff] %vm280, %v330
      %363 = vst.msk [vmem:[%s289 + $0x61] sm:$0xff] %vm280, %v331
      %364 = vst.msk [vmem:[%s289 + $0x69] sm:$0xff] %vm280, %v332
      %365 = vst.msk [vmem:[%s289 + $0x79] sm:$0xff] %vm280, %v333
      %366 = vst.msk [vmem:[%s289 + $0x81] sm:$0xff] %vm280, %v334
      %367 = vst.msk [vmem:[%s289 + $0x91] sm:$0xff] %vm280, %v335
      %368 = vst.msk [vmem:[%s289 + $0x99] sm:$0xff] %vm280, %v336
      %369 = vst.msk [vmem:[%s289 + $0xa9] sm:$0xff] %vm280, %v337
      %370 = vst.msk [vmem:[%s289 + $0xb1] sm:$0xff] %vm280, %v338
      %371 = vst.msk [vmem:[%s289 + $0xc1] sm:$0xff] %vm280, %v339
      %372 = vst.msk [vmem:[%s289 + $0xc9] sm:$0xff] %vm280, %v340
      %373 = vst.msk [vmem:[%s289 + $0xd9] sm:$0xff] %vm280, %v341
      %374 = vst.msk [vmem:[%s289 + $0xe1] sm:$0xff] %vm280, %v342
      %375 = vst.msk [vmem:[%s289 + $0xf1] sm:$0xff] %vm280, %v343
      %376 = vst.msk [vmem:[%s289 + $0xf9] sm:$0xff] %vm280, %v344
      %377 = vst.msk [vmem:[%s289 + $0x109] sm:$0xff] %vm280, %v345
      %378 = vst.msk [vmem:[%s289 + $0x111] sm:$0xff] %vm280, %v346
      %379 = vst.msk [vmem:[%s289 + $0x121] sm:$0xff] %vm280, %v347
      %380 = vst.msk [vmem:[%s289 + $0x129] sm:$0xff] %vm280, %v348
      %381 = vst.msk [vmem:[%s289 + $0x139] sm:$0xff] %vm280, %v349
      %382 = vst.msk [vmem:[%s289 + $0x141] sm:$0xff] %vm280, %v350
      %383 = vst.msk [vmem:[%s289 + $0x151] sm:$0xff] %vm280, %v351
      %384 = vst.msk [vmem:[%s289 + $0x159] sm:$0xff] %vm280, %v352
      %385 = vst.msk [vmem:[%s289 + $0x169] sm:$0xff] %vm280, %v353
      %386 = vst.msk [vmem:[%s289 + $0x171] sm:$0xff] %vm280, %v354
      %v387 = vld [vmem:[#allocation2] sm:$0xff]
      %v388 = vld [vmem:[#allocation2 + $0x8] sm:$0xff]
      %v389 = vld [vmem:[#allocation2 + $0x18] sm:$0xff]
      %v390 = vld [vmem:[#allocation2 + $0x20] sm:$0xff]
      %v391 = vld [vmem:[#allocation2 + $0x30] sm:$0xff]
      %v392 = vld [vmem:[#allocation2 + $0x38] sm:$0xff]
      %v393 = vld [vmem:[#allocation2 + $0x48] sm:$0xff]
      %v394 = vld [vmem:[#allocation2 + $0x50] sm:$0xff]
      %v395 = vld [vmem:[#allocation2 + $0x60] sm:$0xff]
      %v396 = vld [vmem:[#allocation2 + $0x68] sm:$0xff]
      %v397 = vld [vmem:[#allocation2 + $0x78] sm:$0xff]
      %v398 = vld [vmem:[#allocation2 + $0x80] sm:$0xff]
      %v399 = vld [vmem:[#allocation2 + $0x90] sm:$0xff]
      %v400 = vld [vmem:[#allocation2 + $0x98] sm:$0xff]
      %v401 = vld [vmem:[#allocation2 + $0xa8] sm:$0xff]
      %v402 = vld [vmem:[#allocation2 + $0xb0] sm:$0xff]
      %v403 = vld [vmem:[#allocation2 + $0xc0] sm:$0xff]
      %v404 = vld [vmem:[#allocation2 + $0xc8] sm:$0xff]
      %v405 = vld [vmem:[#allocation2 + $0xd8] sm:$0xff]
      %v406 = vld [vmem:[#allocation2 + $0xe0] sm:$0xff]
      %v407 = vld [vmem:[#allocation2 + $0xf0] sm:$0xff]
      %v408 = vld [vmem:[#allocation2 + $0xf8] sm:$0xff]
      %v409 = vld [vmem:[#allocation2 + $0x108] sm:$0xff]
      %v410 = vld [vmem:[#allocation2 + $0x110] sm:$0xff]
      %v411 = vld [vmem:[#allocation2 + $0x120] sm:$0xff]
      %v412 = vld [vmem:[#allocation2 + $0x128] sm:$0xff]
      %v413 = vld [vmem:[#allocation2 + $0x138] sm:$0xff]
      %v414 = vld [vmem:[#allocation2 + $0x140] sm:$0xff]
      %v415 = vld [vmem:[#allocation2 + $0x150] sm:$0xff]
      %v416 = vld [vmem:[#allocation2 + $0x158] sm:$0xff]
      %v417 = vld [vmem:[#allocation2 + $0x168] sm:$0xff]
      %v418 = vld [vmem:[#allocation2 + $0x170] sm:$0xff]
      %419 = vst.msk [vmem:[#allocation3] sm:$0xff] %vm280, %v387
      %420 = vst.msk [vmem:[#allocation3 + $0x8] sm:$0xff] %vm280, %v388
      %421 = vst.msk [vmem:[#allocation3 + $0x10] sm:$0xff] %vm280, %v389
      %422 = vst.msk [vmem:[#allocation3 + $0x18] sm:$0xff] %vm280, %v390
      %423 = vst.msk [vmem:[#allocation3 + $0x20] sm:$0xff] %vm280, %v391
      %424 = vst.msk [vmem:[#allocation3 + $0x28] sm:$0xff] %vm280, %v392
      %425 = vst.msk [vmem:[#allocation3 + $0x30] sm:$0xff] %vm280, %v393
      %426 = vst.msk [vmem:[#allocation3 + $0x38] sm:$0xff] %vm280, %v394
      %427 = vst.msk [vmem:[#allocation3 + $0x40] sm:$0xff] %vm280, %v395
      %428 = vst.msk [vmem:[#allocation3 + $0x48] sm:$0xff] %vm280, %v396
      %429 = vst.msk [vmem:[#allocation3 + $0x50] sm:$0xff] %vm280, %v397
      %430 = vst.msk [vmem:[#allocation3 + $0x58] sm:$0xff] %vm280, %v398
      %431 = vst.msk [vmem:[#allocation3 + $0x60] sm:$0xff] %vm280, %v399
      %432 = vst.msk [vmem:[#allocation3 + $0x68] sm:$0xff] %vm280, %v400
      %433 = vst.msk [vmem:[#allocation3 + $0x70] sm:$0xff] %vm280, %v401
      %434 = vst.msk [vmem:[#allocation3 + $0x78] sm:$0xff] %vm280, %v402
      %435 = vst.msk [vmem:[#allocation3 + $0x80] sm:$0xff] %vm280, %v403
      %436 = vst.msk [vmem:[#allocation3 + $0x88] sm:$0xff] %vm280, %v404
      %437 = vst.msk [vmem:[#allocation3 + $0x90] sm:$0xff] %vm280, %v405
      %438 = vst.msk [vmem:[#allocation3 + $0x98] sm:$0xff] %vm280, %v406
      %439 = vst.msk [vmem:[#allocation3 + $0xa0] sm:$0xff] %vm280, %v407
      %440 = vst.msk [vmem:[#allocation3 + $0xa8] sm:$0xff] %vm280, %v408
      %441 = vst.msk [vmem:[#allocation3 + $0xb0] sm:$0xff] %vm280, %v409
      %442 = vst.msk [vmem:[#allocation3 + $0xb8] sm:$0xff] %vm280, %v410
      %443 = vst.msk [vmem:[#allocation3 + $0xc0] sm:$0xff] %vm280, %v411
      %444 = vst.msk [vmem:[#allocation3 + $0xc8] sm:$0xff] %vm280, %v412
      %445 = vst.msk [vmem:[#allocation3 + $0xd0] sm:$0xff] %vm280, %v413
      %446 = vst.msk [vmem:[#allocation3 + $0xd8] sm:$0xff] %vm280, %v414
      %447 = vst.msk [vmem:[#allocation3 + $0xe0] sm:$0xff] %vm280, %v415
      %448 = vst.msk [vmem:[#allocation3 + $0xe8] sm:$0xff] %vm280, %v416
      %449 = vst.msk [vmem:[#allocation3 + $0xf0] sm:$0xff] %vm280, %v417
      %450 = vst.msk [vmem:[#allocation3 + $0xf8] sm:$0xff] %vm280, %v418
      %v451 = vld [vmem:[#allocation2 + $0x1] sm:$0xff]
      %v452 = vld [vmem:[#allocation2 + $0x9] sm:$0xff]
      %v453 = vld [vmem:[#allocation2 + $0x19] sm:$0xff]
      %v454 = vld [vmem:[#allocation2 + $0x21] sm:$0xff]
      %v455 = vld [vmem:[#allocation2 + $0x31] sm:$0xff]
      %v456 = vld [vmem:[#allocation2 + $0x39] sm:$0xff]
      %v457 = vld [vmem:[#allocation2 + $0x49] sm:$0xff]
      %v458 = vld [vmem:[#allocation2 + $0x51] sm:$0xff]
      %v459 = vld [vmem:[#allocation2 + $0x61] sm:$0xff]
      %v460 = vld [vmem:[#allocation2 + $0x69] sm:$0xff]
      %v461 = vld [vmem:[#allocation2 + $0x79] sm:$0xff]
      %v462 = vld [vmem:[#allocation2 + $0x81] sm:$0xff]
      %v463 = vld [vmem:[#allocation2 + $0x91] sm:$0xff]
      %v464 = vld [vmem:[#allocation2 + $0x99] sm:$0xff]
      %v465 = vld [vmem:[#allocation2 + $0xa9] sm:$0xff]
      %v466 = vld [vmem:[#allocation2 + $0xb1] sm:$0xff]
      %v467 = vld [vmem:[#allocation2 + $0xc1] sm:$0xff]
      %v468 = vld [vmem:[#allocation2 + $0xc9] sm:$0xff]
      %v469 = vld [vmem:[#allocation2 + $0xd9] sm:$0xff]
      %v470 = vld [vmem:[#allocation2 + $0xe1] sm:$0xff]
      %v471 = vld [vmem:[#allocation2 + $0xf1] sm:$0xff]
      %v472 = vld [vmem:[#allocation2 + $0xf9] sm:$0xff]
      %v473 = vld [vmem:[#allocation2 + $0x109] sm:$0xff]
      %v474 = vld [vmem:[#allocation2 + $0x111] sm:$0xff]
      %v475 = vld [vmem:[#allocation2 + $0x121] sm:$0xff]
      %v476 = vld [vmem:[#allocation2 + $0x129] sm:$0xff]
      %v477 = vld [vmem:[#allocation2 + $0x139] sm:$0xff]
      %v478 = vld [vmem:[#allocation2 + $0x141] sm:$0xff]
      %v479 = vld [vmem:[#allocation2 + $0x151] sm:$0xff]
      %v480 = vld [vmem:[#allocation2 + $0x159] sm:$0xff]
      %v481 = vld [vmem:[#allocation2 + $0x169] sm:$0xff]
      %v482 = vld [vmem:[#allocation2 + $0x171] sm:$0xff]
      %515 = vrot.lane.b32.xlu0 %v451, 4
      %v516 = vpop.permute.xlu0 %515
      %517 = vrot.lane.b32.xlu0 %v452, 4
      %v518 = vpop.permute.xlu0 %517
      %519 = vrot.lane.b32.xlu0 %v453, 4
      %v520 = vpop.permute.xlu0 %519
      %521 = vrot.lane.b32.xlu0 %v454, 4
      %v522 = vpop.permute.xlu0 %521
      %523 = vrot.lane.b32.xlu0 %v455, 4
      %v524 = vpop.permute.xlu0 %523
      %525 = vrot.lane.b32.xlu0 %v456, 4
      %v526 = vpop.permute.xlu0 %525
      %527 = vrot.lane.b32.xlu0 %v457, 4
      %v528 = vpop.permute.xlu0 %527
      %529 = vrot.lane.b32.xlu0 %v458, 4
      %v530 = vpop.permute.xlu0 %529
      %531 = vrot.lane.b32.xlu0 %v459, 4
      %v532 = vpop.permute.xlu0 %531
      %533 = vrot.lane.b32.xlu0 %v460, 4
      %v534 = vpop.permute.xlu0 %533
      %535 = vrot.lane.b32.xlu0 %v461, 4
      %v536 = vpop.permute.xlu0 %535
      %537 = vrot.lane.b32.xlu0 %v462, 4
      %v538 = vpop.permute.xlu0 %537
      %539 = vrot.lane.b32.xlu0 %v463, 4
      %v540 = vpop.permute.xlu0 %539
      %541 = vrot.lane.b32.xlu0 %v464, 4
      %v542 = vpop.permute.xlu0 %541
      %543 = vrot.lane.b32.xlu0 %v465, 4
      %v544 = vpop.permute.xlu0 %543
      %545 = vrot.lane.b32.xlu0 %v466, 4
      %v546 = vpop.permute.xlu0 %545
      %547 = vrot.lane.b32.xlu0 %v467, 4
      %v548 = vpop.permute.xlu0 %547
      %549 = vrot.lane.b32.xlu0 %v468, 4
      %v550 = vpop.permute.xlu0 %549
      %551 = vrot.lane.b32.xlu0 %v469, 4
      %v552 = vpop.permute.xlu0 %551
      %553 = vrot.lane.b32.xlu0 %v470, 4
      %v554 = vpop.permute.xlu0 %553
      %555 = vrot.lane.b32.xlu0 %v471, 4
      %v556 = vpop.permute.xlu0 %555
      %557 = vrot.lane.b32.xlu0 %v472, 4
      %v558 = vpop.permute.xlu0 %557
      %559 = vrot.lane.b32.xlu0 %v473, 4
      %v560 = vpop.permute.xlu0 %559
      %561 = vrot.lane.b32.xlu0 %v474, 4
      %v562 = vpop.permute.xlu0 %561
      %563 = vrot.lane.b32.xlu0 %v475, 4
      %v564 = vpop.permute.xlu0 %563
      %565 = vrot.lane.b32.xlu0 %v476, 4
      %v566 = vpop.permute.xlu0 %565
      %567 = vrot.lane.b32.xlu0 %v477, 4
      %v568 = vpop.permute.xlu0 %567
      %569 = vrot.lane.b32.xlu0 %v478, 4
      %v570 = vpop.permute.xlu0 %569
      %571 = vrot.lane.b32.xlu0 %v479, 4
      %v572 = vpop.permute.xlu0 %571
      %573 = vrot.lane.b32.xlu0 %v480, 4
      %v574 = vpop.permute.xlu0 %573
      %575 = vrot.lane.b32.xlu0 %v481, 4
      %v576 = vpop.permute.xlu0 %575
      %577 = vrot.lane.b32.xlu0 %v482, 4
      %v578 = vpop.permute.xlu0 %577
      %vm611 = vcmask 64544
      %612 = vst.msk [vmem:[#allocation3] sm:$0xff] %vm611, %v516
      %613 = vst.msk [vmem:[#allocation3 + $0x8] sm:$0xff] %vm611, %v518
      %614 = vst.msk [vmem:[#allocation3 + $0x10] sm:$0xff] %vm611, %v520
      %615 = vst.msk [vmem:[#allocation3 + $0x18] sm:$0xff] %vm611, %v522
      %616 = vst.msk [vmem:[#allocation3 + $0x20] sm:$0xff] %vm611, %v524
      %617 = vst.msk [vmem:[#allocation3 + $0x28] sm:$0xff] %vm611, %v526
      %618 = vst.msk [vmem:[#allocation3 + $0x30] sm:$0xff] %vm611, %v528
      %619 = vst.msk [vmem:[#allocation3 + $0x38] sm:$0xff] %vm611, %v530
      %620 = vst.msk [vmem:[#allocation3 + $0x40] sm:$0xff] %vm611, %v532
      %621 = vst.msk [vmem:[#allocation3 + $0x48] sm:$0xff] %vm611, %v534
      %622 = vst.msk [vmem:[#allocation3 + $0x50] sm:$0xff] %vm611, %v536
      %623 = vst.msk [vmem:[#allocation3 + $0x58] sm:$0xff] %vm611, %v538
      %624 = vst.msk [vmem:[#allocation3 + $0x60] sm:$0xff] %vm611, %v540
      %625 = vst.msk [vmem:[#allocation3 + $0x68] sm:$0xff] %vm611, %v542
      %626 = vst.msk [vmem:[#allocation3 + $0x70] sm:$0xff] %vm611, %v544
      %627 = vst.msk [vmem:[#allocation3 + $0x78] sm:$0xff] %vm611, %v546
      %628 = vst.msk [vmem:[#allocation3 + $0x80] sm:$0xff] %vm611, %v548
      %629 = vst.msk [vmem:[#allocation3 + $0x88] sm:$0xff] %vm611, %v550
      %630 = vst.msk [vmem:[#allocation3 + $0x90] sm:$0xff] %vm611, %v552
      %631 = vst.msk [vmem:[#allocation3 + $0x98] sm:$0xff] %vm611, %v554
      %632 = vst.msk [vmem:[#allocation3 + $0xa0] sm:$0xff] %vm611, %v556
      %633 = vst.msk [vmem:[#allocation3 + $0xa8] sm:$0xff] %vm611, %v558
      %634 = vst.msk [vmem:[#allocation3 + $0xb0] sm:$0xff] %vm611, %v560
      %635 = vst.msk [vmem:[#allocation3 + $0xb8] sm:$0xff] %vm611, %v562
      %636 = vst.msk [vmem:[#allocation3 + $0xc0] sm:$0xff] %vm611, %v564
      %637 = vst.msk [vmem:[#allocation3 + $0xc8] sm:$0xff] %vm611, %v566
      %638 = vst.msk [vmem:[#allocation3 + $0xd0] sm:$0xff] %vm611, %v568
      %639 = vst.msk [vmem:[#allocation3 + $0xd8] sm:$0xff] %vm611, %v570
      %640 = vst.msk [vmem:[#allocation3 + $0xe0] sm:$0xff] %vm611, %v572
      %641 = vst.msk [vmem:[#allocation3 + $0xe8] sm:$0xff] %vm611, %v574
      %642 = vst.msk [vmem:[#allocation3 + $0xf0] sm:$0xff] %vm611, %v576
      %643 = vst.msk [vmem:[#allocation3 + $0xf8] sm:$0xff] %vm611, %v578
      %v644 = vld [vmem:[#allocation2 + $0x2] sm:$0xff]
      %v645 = vld [vmem:[#allocation2 + $0xa] sm:$0xff]
      %v646 = vld [vmem:[#allocation2 + $0x1a] sm:$0xff]
      %v647 = vld [vmem:[#allocation2 + $0x22] sm:$0xff]
      %v648 = vld [vmem:[#allocation2 + $0x32] sm:$0xff]
      %v649 = vld [vmem:[#allocation2 + $0x3a] sm:$0xff]
      %v650 = vld [vmem:[#allocation2 + $0x4a] sm:$0xff]
      %v651 = vld [vmem:[#allocation2 + $0x52] sm:$0xff]
      %v652 = vld [vmem:[#allocation2 + $0x62] sm:$0xff]
      %v653 = vld [vmem:[#allocation2 + $0x6a] sm:$0xff]
      %v654 = vld [vmem:[#allocation2 + $0x7a] sm:$0xff]
      %v655 = vld [vmem:[#allocation2 + $0x82] sm:$0xff]
      %v656 = vld [vmem:[#allocation2 + $0x92] sm:$0xff]
      %v657 = vld [vmem:[#allocation2 + $0x9a] sm:$0xff]
      %v658 = vld [vmem:[#allocation2 + $0xaa] sm:$0xff]
      %v659 = vld [vmem:[#allocation2 + $0xb2] sm:$0xff]
      %v660 = vld [vmem:[#allocation2 + $0xc2] sm:$0xff]
      %v661 = vld [vmem:[#allocation2 + $0xca] sm:$0xff]
      %v662 = vld [vmem:[#allocation2 + $0xda] sm:$0xff]
      %v663 = vld [vmem:[#allocation2 + $0xe2] sm:$0xff]
      %v664 = vld [vmem:[#allocation2 + $0xf2] sm:$0xff]
      %v665 = vld [vmem:[#allocation2 + $0xfa] sm:$0xff]
      %v666 = vld [vmem:[#allocation2 + $0x10a] sm:$0xff]
      %v667 = vld [vmem:[#allocation2 + $0x112] sm:$0xff]
      %v668 = vld [vmem:[#allocation2 + $0x122] sm:$0xff]
      %v669 = vld [vmem:[#allocation2 + $0x12a] sm:$0xff]
      %v670 = vld [vmem:[#allocation2 + $0x13a] sm:$0xff]
      %v671 = vld [vmem:[#allocation2 + $0x142] sm:$0xff]
      %v672 = vld [vmem:[#allocation2 + $0x152] sm:$0xff]
      %v673 = vld [vmem:[#allocation2 + $0x15a] sm:$0xff]
      %v674 = vld [vmem:[#allocation2 + $0x16a] sm:$0xff]
      %v675 = vld [vmem:[#allocation2 + $0x172] sm:$0xff]
      %708 = vrot.lane.b32.xlu0 %v644, 8
      %v709 = vpop.permute.xlu0 %708
      %710 = vrot.lane.b32.xlu0 %v645, 8
      %v711 = vpop.permute.xlu0 %710
      %712 = vrot.lane.b32.xlu0 %v646, 8
      %v713 = vpop.permute.xlu0 %712
      %714 = vrot.lane.b32.xlu0 %v647, 8
      %v715 = vpop.permute.xlu0 %714
      %716 = vrot.lane.b32.xlu0 %v648, 8
      %v717 = vpop.permute.xlu0 %716
      %718 = vrot.lane.b32.xlu0 %v649, 8
      %v719 = vpop.permute.xlu0 %718
      %720 = vrot.lane.b32.xlu0 %v650, 8
      %v721 = vpop.permute.xlu0 %720
      %722 = vrot.lane.b32.xlu0 %v651, 8
      %v723 = vpop.permute.xlu0 %722
      %724 = vrot.lane.b32.xlu0 %v652, 8
      %v725 = vpop.permute.xlu0 %724
      %726 = vrot.lane.b32.xlu0 %v653, 8
      %v727 = vpop.permute.xlu0 %726
      %728 = vrot.lane.b32.xlu0 %v654, 8
      %v729 = vpop.permute.xlu0 %728
      %730 = vrot.lane.b32.xlu0 %v655, 8
      %v731 = vpop.permute.xlu0 %730
      %732 = vrot.lane.b32.xlu0 %v656, 8
      %v733 = vpop.permute.xlu0 %732
      %734 = vrot.lane.b32.xlu0 %v657, 8
      %v735 = vpop.permute.xlu0 %734
      %736 = vrot.lane.b32.xlu0 %v658, 8
      %v737 = vpop.permute.xlu0 %736
      %738 = vrot.lane.b32.xlu0 %v659, 8
      %v739 = vpop.permute.xlu0 %738
      %740 = vrot.lane.b32.xlu0 %v660, 8
      %v741 = vpop.permute.xlu0 %740
      %742 = vrot.lane.b32.xlu0 %v661, 8
      %v743 = vpop.permute.xlu0 %742
      %744 = vrot.lane.b32.xlu0 %v662, 8
      %v745 = vpop.permute.xlu0 %744
      %746 = vrot.lane.b32.xlu0 %v663, 8
      %v747 = vpop.permute.xlu0 %746
      %748 = vrot.lane.b32.xlu0 %v664, 8
      %v749 = vpop.permute.xlu0 %748
      %750 = vrot.lane.b32.xlu0 %v665, 8
      %v751 = vpop.permute.xlu0 %750
      %752 = vrot.lane.b32.xlu0 %v666, 8
      %v753 = vpop.permute.xlu0 %752
      %754 = vrot.lane.b32.xlu0 %v667, 8
      %v755 = vpop.permute.xlu0 %754
      %756 = vrot.lane.b32.xlu0 %v668, 8
      %v757 = vpop.permute.xlu0 %756
      %758 = vrot.lane.b32.xlu0 %v669, 8
      %v759 = vpop.permute.xlu0 %758
      %760 = vrot.lane.b32.xlu0 %v670, 8
      %v761 = vpop.permute.xlu0 %760
      %762 = vrot.lane.b32.xlu0 %v671, 8
      %v763 = vpop.permute.xlu0 %762
      %764 = vrot.lane.b32.xlu0 %v672, 8
      %v765 = vpop.permute.xlu0 %764
      %766 = vrot.lane.b32.xlu0 %v673, 8
      %v767 = vpop.permute.xlu0 %766
      %768 = vrot.lane.b32.xlu0 %v674, 8
      %v769 = vpop.permute.xlu0 %768
      %770 = vrot.lane.b32.xlu0 %v675, 8
      %v771 = vpop.permute.xlu0 %770
      %vm804 = vcmask 97344
      %805 = vst.msk [vmem:[#allocation3] sm:$0xff] %vm804, %v709
      %806 = vst.msk [vmem:[#allocation3 + $0x8] sm:$0xff] %vm804, %v711
      %807 = vst.msk [vmem:[#allocation3 + $0x10] sm:$0xff] %vm804, %v713
      %808 = vst.msk [vmem:[#allocation3 + $0x18] sm:$0xff] %vm804, %v715
      %809 = vst.msk [vmem:[#allocation3 + $0x20] sm:$0xff] %vm804, %v717
      %810 = vst.msk [vmem:[#allocation3 + $0x28] sm:$0xff] %vm804, %v719
      %811 = vst.msk [vmem:[#allocation3 + $0x30] sm:$0xff] %vm804, %v721
      %812 = vst.msk [vmem:[#allocation3 + $0x38] sm:$0xff] %vm804, %v723
      %813 = vst.msk [vmem:[#allocation3 + $0x40] sm:$0xff] %vm804, %v725
      %814 = vst.msk [vmem:[#allocation3 + $0x48] sm:$0xff] %vm804, %v727
      %815 = vst.msk [vmem:[#allocation3 + $0x50] sm:$0xff] %vm804, %v729
      %816 = vst.msk [vmem:[#allocation3 + $0x58] sm:$0xff] %vm804, %v731
      %817 = vst.msk [vmem:[#allocation3 + $0x60] sm:$0xff] %vm804, %v733
      %818 = vst.msk [vmem:[#allocation3 + $0x68] sm:$0xff] %vm804, %v735
      %819 = vst.msk [vmem:[#allocation3 + $0x70] sm:$0xff] %vm804, %v737
      %820 = vst.msk [vmem:[#allocation3 + $0x78] sm:$0xff] %vm804, %v739
      %821 = vst.msk [vmem:[#allocation3 + $0x80] sm:$0xff] %vm804, %v741
      %822 = vst.msk [vmem:[#allocation3 + $0x88] sm:$0xff] %vm804, %v743
      %823 = vst.msk [vmem:[#allocation3 + $0x90] sm:$0xff] %vm804, %v745
      %824 = vst.msk [vmem:[#allocation3 + $0x98] sm:$0xff] %vm804, %v747
      %825 = vst.msk [vmem:[#allocation3 + $0xa0] sm:$0xff] %vm804, %v749
      %826 = vst.msk [vmem:[#allocation3 + $0xa8] sm:$0xff] %vm804, %v751
      %827 = vst.msk [vmem:[#allocation3 + $0xb0] sm:$0xff] %vm804, %v753
      %828 = vst.msk [vmem:[#allocation3 + $0xb8] sm:$0xff] %vm804, %v755
      %829 = vst.msk [vmem:[#allocation3 + $0xc0] sm:$0xff] %vm804, %v757
      %830 = vst.msk [vmem:[#allocation3 + $0xc8] sm:$0xff] %vm804, %v759
      %831 = vst.msk [vmem:[#allocation3 + $0xd0] sm:$0xff] %vm804, %v761
      %832 = vst.msk [vmem:[#allocation3 + $0xd8] sm:$0xff] %vm804, %v763
      %833 = vst.msk [vmem:[#allocation3 + $0xe0] sm:$0xff] %vm804, %v765
      %834 = vst.msk [vmem:[#allocation3 + $0xe8] sm:$0xff] %vm804, %v767
      %835 = vst.msk [vmem:[#allocation3 + $0xf0] sm:$0xff] %vm804, %v769
      %836 = vst.msk [vmem:[#allocation3 + $0xf8] sm:$0xff] %vm804, %v771
      %v837 = vld [vmem:[%s289] sm:$0xff]
      %v838 = vld [vmem:[%s289 + $0x8] sm:$0xff]
      %v839 = vld [vmem:[%s289 + $0x18] sm:$0xff]
      %v840 = vld [vmem:[%s289 + $0x20] sm:$0xff]
      %v841 = vld [vmem:[%s289 + $0x30] sm:$0xff]
      %v842 = vld [vmem:[%s289 + $0x38] sm:$0xff]
      %v843 = vld [vmem:[%s289 + $0x48] sm:$0xff]
      %v844 = vld [vmem:[%s289 + $0x50] sm:$0xff]
      %v845 = vld [vmem:[%s289 + $0x60] sm:$0xff]
      %v846 = vld [vmem:[%s289 + $0x68] sm:$0xff]
      %v847 = vld [vmem:[%s289 + $0x78] sm:$0xff]
      %v848 = vld [vmem:[%s289 + $0x80] sm:$0xff]
      %v849 = vld [vmem:[%s289 + $0x90] sm:$0xff]
      %v850 = vld [vmem:[%s289 + $0x98] sm:$0xff]
      %v851 = vld [vmem:[%s289 + $0xa8] sm:$0xff]
      %v852 = vld [vmem:[%s289 + $0xb0] sm:$0xff]
      %v853 = vld [vmem:[%s289 + $0xc0] sm:$0xff]
      %v854 = vld [vmem:[%s289 + $0xc8] sm:$0xff]
      %v855 = vld [vmem:[%s289 + $0xd8] sm:$0xff]
      %v856 = vld [vmem:[%s289 + $0xe0] sm:$0xff]
      %v857 = vld [vmem:[%s289 + $0xf0] sm:$0xff]
      %v858 = vld [vmem:[%s289 + $0xf8] sm:$0xff]
      %v859 = vld [vmem:[%s289 + $0x108] sm:$0xff]
      %v860 = vld [vmem:[%s289 + $0x110] sm:$0xff]
      %v861 = vld [vmem:[%s289 + $0x120] sm:$0xff]
      %v862 = vld [vmem:[%s289 + $0x128] sm:$0xff]
      %v863 = vld [vmem:[%s289 + $0x138] sm:$0xff]
      %v864 = vld [vmem:[%s289 + $0x140] sm:$0xff]
      %v865 = vld [vmem:[%s289 + $0x150] sm:$0xff]
      %v866 = vld [vmem:[%s289 + $0x158] sm:$0xff]
      %v867 = vld [vmem:[%s289 + $0x168] sm:$0xff]
      %v868 = vld [vmem:[%s289 + $0x170] sm:$0xff]
      %901 = vrot.lane.b32.xlu0 %v837, 12
      %v902 = vpop.permute.xlu0 %901
      %903 = vrot.lane.b32.xlu0 %v838, 12
      %v904 = vpop.permute.xlu0 %903
      %905 = vrot.lane.b32.xlu0 %v839, 12
      %v906 = vpop.permute.xlu0 %905
      %907 = vrot.lane.b32.xlu0 %v840, 12
      %v908 = vpop.permute.xlu0 %907
      %909 = vrot.lane.b32.xlu0 %v841, 12
      %v910 = vpop.permute.xlu0 %909
      %911 = vrot.lane.b32.xlu0 %v842, 12
      %v912 = vpop.permute.xlu0 %911
      %913 = vrot.lane.b32.xlu0 %v843, 12
      %v914 = vpop.permute.xlu0 %913
      %915 = vrot.lane.b32.xlu0 %v844, 12
      %v916 = vpop.permute.xlu0 %915
      %917 = vrot.lane.b32.xlu0 %v845, 12
      %v918 = vpop.permute.xlu0 %917
      %919 = vrot.lane.b32.xlu0 %v846, 12
      %v920 = vpop.permute.xlu0 %919
      %921 = vrot.lane.b32.xlu0 %v847, 12
      %v922 = vpop.permute.xlu0 %921
      %923 = vrot.lane.b32.xlu0 %v848, 12
      %v924 = vpop.permute.xlu0 %923
      %925 = vrot.lane.b32.xlu0 %v849, 12
      %v926 = vpop.permute.xlu0 %925
      %927 = vrot.lane.b32.xlu0 %v850, 12
      %v928 = vpop.permute.xlu0 %927
      %929 = vrot.lane.b32.xlu0 %v851, 12
      %v930 = vpop.permute.xlu0 %929
      %931 = vrot.lane.b32.xlu0 %v852, 12
      %v932 = vpop.permute.xlu0 %931
      %933 = vrot.lane.b32.xlu0 %v853, 12
      %v934 = vpop.permute.xlu0 %933
      %935 = vrot.lane.b32.xlu0 %v854, 12
      %v936 = vpop.permute.xlu0 %935
      %937 = vrot.lane.b32.xlu0 %v855, 12
      %v938 = vpop.permute.xlu0 %937
      %939 = vrot.lane.b32.xlu0 %v856, 12
      %v940 = vpop.permute.xlu0 %939
      %941 = vrot.lane.b32.xlu0 %v857, 12
      %v942 = vpop.permute.xlu0 %941
      %943 = vrot.lane.b32.xlu0 %v858, 12
      %v944 = vpop.permute.xlu0 %943
      %945 = vrot.lane.b32.xlu0 %v859, 12
      %v946 = vpop.permute.xlu0 %945
      %947 = vrot.lane.b32.xlu0 %v860, 12
      %v948 = vpop.permute.xlu0 %947
      %949 = vrot.lane.b32.xlu0 %v861, 12
      %v950 = vpop.permute.xlu0 %949
      %951 = vrot.lane.b32.xlu0 %v862, 12
      %v952 = vpop.permute.xlu0 %951
      %953 = vrot.lane.b32.xlu0 %v863, 12
      %v954 = vpop.permute.xlu0 %953
      %955 = vrot.lane.b32.xlu0 %v864, 12
      %v956 = vpop.permute.xlu0 %955
      %957 = vrot.lane.b32.xlu0 %v865, 12
      %v958 = vpop.permute.xlu0 %957
      %959 = vrot.lane.b32.xlu0 %v866, 12
      %v960 = vpop.permute.xlu0 %959
      %961 = vrot.lane.b32.xlu0 %v867, 12
      %v962 = vpop.permute.xlu0 %961
      %963 = vrot.lane.b32.xlu0 %v868, 12
      %v964 = vpop.permute.xlu0 %963
      %vm997 = vcmask 130144
      %998 = vst.msk [vmem:[#allocation3] sm:$0xff] %vm997, %v902
      %999 = vst.msk [vmem:[#allocation3 + $0x8] sm:$0xff] %vm997, %v904
      %1000 = vst.msk [vmem:[#allocation3 + $0x10] sm:$0xff] %vm997, %v906
      %1001 = vst.msk [vmem:[#allocation3 + $0x18] sm:$0xff] %vm997, %v908
      %1002 = vst.msk [vmem:[#allocation3 + $0x20] sm:$0xff] %vm997, %v910
      %1003 = vst.msk [vmem:[#allocation3 + $0x28] sm:$0xff] %vm997, %v912
      %1004 = vst.msk [vmem:[#allocation3 + $0x30] sm:$0xff] %vm997, %v914
      %1005 = vst.msk [vmem:[#allocation3 + $0x38] sm:$0xff] %vm997, %v916
      %1006 = vst.msk [vmem:[#allocation3 + $0x40] sm:$0xff] %vm997, %v918
      %1007 = vst.msk [vmem:[#allocation3 + $0x48] sm:$0xff] %vm997, %v920
      %1008 = vst.msk [vmem:[#allocation3 + $0x50] sm:$0xff] %vm997, %v922
      %1009 = vst.msk [vmem:[#allocation3 + $0x58] sm:$0xff] %vm997, %v924
      %1010 = vst.msk [vmem:[#allocation3 + $0x60] sm:$0xff] %vm997, %v926
      %1011 = vst.msk [vmem:[#allocation3 + $0x68] sm:$0xff] %vm997, %v928
      %1012 = vst.msk [vmem:[#allocation3 + $0x70] sm:$0xff] %vm997, %v930
      %1013 = vst.msk [vmem:[#allocation3 + $0x78] sm:$0xff] %vm997, %v932
      %1014 = vst.msk [vmem:[#allocation3 + $0x80] sm:$0xff] %vm997, %v934
      %1015 = vst.msk [vmem:[#allocation3 + $0x88] sm:$0xff] %vm997, %v936
      %1016 = vst.msk [vmem:[#allocation3 + $0x90] sm:$0xff] %vm997, %v938
      %1017 = vst.msk [vmem:[#allocation3 + $0x98] sm:$0xff] %vm997, %v940
      %1018 = vst.msk [vmem:[#allocation3 + $0xa0] sm:$0xff] %vm997, %v942
      %1019 = vst.msk [vmem:[#allocation3 + $0xa8] sm:$0xff] %vm997, %v944
      %1020 = vst.msk [vmem:[#allocation3 + $0xb0] sm:$0xff] %vm997, %v946
      %1021 = vst.msk [vmem:[#allocation3 + $0xb8] sm:$0xff] %vm997, %v948
      %1022 = vst.msk [vmem:[#allocation3 + $0xc0] sm:$0xff] %vm997, %v950
      %1023 = vst.msk [vmem:[#allocation3 + $0xc8] sm:$0xff] %vm997, %v952
      %1024 = vst.msk [vmem:[#allocation3 + $0xd0] sm:$0xff] %vm997, %v954
      %1025 = vst.msk [vmem:[#allocation3 + $0xd8] sm:$0xff] %vm997, %v956
      %1026 = vst.msk [vmem:[#allocation3 + $0xe0] sm:$0xff] %vm997, %v958
      %1027 = vst.msk [vmem:[#allocation3 + $0xe8] sm:$0xff] %vm997, %v960
      %1028 = vst.msk [vmem:[#allocation3 + $0xf0] sm:$0xff] %vm997, %v962
      %1029 = vst.msk [vmem:[#allocation3 + $0xf8] sm:$0xff] %vm997, %v964
      %v1030 = vld [vmem:[%s289 + $0x1] sm:$0xff]
      %v1031 = vld [vmem:[%s289 + $0x9] sm:$0xff]
      %v1032 = vld [vmem:[%s289 + $0x19] sm:$0xff]
      %v1033 = vld [vmem:[%s289 + $0x21] sm:$0xff]
      %v1034 = vld [vmem:[%s289 + $0x31] sm:$0xff]
      %v1035 = vld [vmem:[%s289 + $0x39] sm:$0xff]
      %v1036 = vld [vmem:[%s289 + $0x49] sm:$0xff]
      %v1037 = vld [vmem:[%s289 + $0x51] sm:$0xff]
      %v1038 = vld [vmem:[%s289 + $0x61] sm:$0xff]
      %v1039 = vld [vmem:[%s289 + $0x69] sm:$0xff]
      %v1040 = vld [vmem:[%s289 + $0x79] sm:$0xff]
      %v1041 = vld [vmem:[%s289 + $0x81] sm:$0xff]
      %v1042 = vld [vmem:[%s289 + $0x91] sm:$0xff]
      %v1043 = vld [vmem:[%s289 + $0x99] sm:$0xff]
      %v1044 = vld [vmem:[%s289 + $0xa9] sm:$0xff]
      %v1045 = vld [vmem:[%s289 + $0xb1] sm:$0xff]
      %v1046 = vld [vmem:[%s289 + $0xc1] sm:$0xff]
      %v1047 = vld [vmem:[%s289 + $0xc9] sm:$0xff]
      %v1048 = vld [vmem:[%s289 + $0xd9] sm:$0xff]
      %v1049 = vld [vmem:[%s289 + $0xe1] sm:$0xff]
      %v1050 = vld [vmem:[%s289 + $0xf1] sm:$0xff]
      %v1051 = vld [vmem:[%s289 + $0xf9] sm:$0xff]
      %v1052 = vld [vmem:[%s289 + $0x109] sm:$0xff]
      %v1053 = vld [vmem:[%s289 + $0x111] sm:$0xff]
      %v1054 = vld [vmem:[%s289 + $0x121] sm:$0xff]
      %v1055 = vld [vmem:[%s289 + $0x129] sm:$0xff]
      %v1056 = vld [vmem:[%s289 + $0x139] sm:$0xff]
      %v1057 = vld [vmem:[%s289 + $0x141] sm:$0xff]
      %v1058 = vld [vmem:[%s289 + $0x151] sm:$0xff]
      %v1059 = vld [vmem:[%s289 + $0x159] sm:$0xff]
      %v1060 = vld [vmem:[%s289 + $0x169] sm:$0xff]
      %v1061 = vld [vmem:[%s289 + $0x171] sm:$0xff]
      %1094 = vrot.lane.b32.xlu0 %v1030, 16
      %v1095 = vpop.permute.xlu0 %1094
      %1096 = vrot.lane.b32.xlu0 %v1031, 16
      %v1097 = vpop.permute.xlu0 %1096
      %1098 = vrot.lane.b32.xlu0 %v1032, 16
      %v1099 = vpop.permute.xlu0 %1098
      %1100 = vrot.lane.b32.xlu0 %v1033, 16
      %v1101 = vpop.permute.xlu0 %1100
      %1102 = vrot.lane.b32.xlu0 %v1034, 16
      %v1103 = vpop.permute.xlu0 %1102
      %1104 = vrot.lane.b32.xlu0 %v1035, 16
      %v1105 = vpop.permute.xlu0 %1104
      %1106 = vrot.lane.b32.xlu0 %v1036, 16
      %v1107 = vpop.permute.xlu0 %1106
      %1108 = vrot.lane.b32.xlu0 %v1037, 16
      %v1109 = vpop.permute.xlu0 %1108
      %1110 = vrot.lane.b32.xlu0 %v1038, 16
      %v1111 = vpop.permute.xlu0 %1110
      %1112 = vrot.lane.b32.xlu0 %v1039, 16
      %v1113 = vpop.permute.xlu0 %1112
      %1114 = vrot.lane.b32.xlu0 %v1040, 16
      %v1115 = vpop.permute.xlu0 %1114
      %1116 = vrot.lane.b32.xlu0 %v1041, 16
      %v1117 = vpop.permute.xlu0 %1116
      %1118 = vrot.lane.b32.xlu0 %v1042, 16
      %v1119 = vpop.permute.xlu0 %1118
      %1120 = vrot.lane.b32.xlu0 %v1043, 16
      %v1121 = vpop.permute.xlu0 %1120
      %1122 = vrot.lane.b32.xlu0 %v1044, 16
      %v1123 = vpop.permute.xlu0 %1122
      %1124 = vrot.lane.b32.xlu0 %v1045, 16
      %v1125 = vpop.permute.xlu0 %1124
      %1126 = vrot.lane.b32.xlu0 %v1046, 16
      %v1127 = vpop.permute.xlu0 %1126
      %1128 = vrot.lane.b32.xlu0 %v1047, 16
      %v1129 = vpop.permute.xlu0 %1128
      %1130 = vrot.lane.b32.xlu0 %v1048, 16
      %v1131 = vpop.permute.xlu0 %1130
      %1132 = vrot.lane.b32.xlu0 %v1049, 16
      %v1133 = vpop.permute.xlu0 %1132
      %1134 = vrot.lane.b32.xlu0 %v1050, 16
      %v1135 = vpop.permute.xlu0 %1134
      %1136 = vrot.lane.b32.xlu0 %v1051, 16
      %v1137 = vpop.permute.xlu0 %1136
      %1138 = vrot.lane.b32.xlu0 %v1052, 16
      %v1139 = vpop.permute.xlu0 %1138
      %1140 = vrot.lane.b32.xlu0 %v1053, 16
      %v1141 = vpop.permute.xlu0 %1140
      %1142 = vrot.lane.b32.xlu0 %v1054, 16
      %v1143 = vpop.permute.xlu0 %1142
      %1144 = vrot.lane.b32.xlu0 %v1055, 16
      %v1145 = vpop.permute.xlu0 %1144
      %1146 = vrot.lane.b32.xlu0 %v1056, 16
      %v1147 = vpop.permute.xlu0 %1146
      %1148 = vrot.lane.b32.xlu0 %v1057, 16
      %v1149 = vpop.permute.xlu0 %1148
      %1150 = vrot.lane.b32.xlu0 %v1058, 16
      %v1151 = vpop.permute.xlu0 %1150
      %1152 = vrot.lane.b32.xlu0 %v1059, 16
      %v1153 = vpop.permute.xlu0 %1152
      %1154 = vrot.lane.b32.xlu0 %v1060, 16
      %v1155 = vpop.permute.xlu0 %1154
      %1156 = vrot.lane.b32.xlu0 %v1061, 16
      %v1157 = vpop.permute.xlu0 %1156
      %vm1190 = vcmask 162944
      %1191 = vst.msk [vmem:[#allocation3] sm:$0xff] %vm1190, %v1095
      %1192 = vst.msk [vmem:[#allocation3 + $0x8] sm:$0xff] %vm1190, %v1097
      %1193 = vst.msk [vmem:[#allocation3 + $0x10] sm:$0xff] %vm1190, %v1099
      %1194 = vst.msk [vmem:[#allocation3 + $0x18] sm:$0xff] %vm1190, %v1101
      %1195 = vst.msk [vmem:[#allocation3 + $0x20] sm:$0xff] %vm1190, %v1103
      %1196 = vst.msk [vmem:[#allocation3 + $0x28] sm:$0xff] %vm1190, %v1105
      %1197 = vst.msk [vmem:[#allocation3 + $0x30] sm:$0xff] %vm1190, %v1107
      %1198 = vst.msk [vmem:[#allocation3 + $0x38] sm:$0xff] %vm1190, %v1109
      %1199 = vst.msk [vmem:[#allocation3 + $0x40] sm:$0xff] %vm1190, %v1111
      %1200 = vst.msk [vmem:[#allocation3 + $0x48] sm:$0xff] %vm1190, %v1113
      %1201 = vst.msk [vmem:[#allocation3 + $0x50] sm:$0xff] %vm1190, %v1115
      %1202 = vst.msk [vmem:[#allocation3 + $0x58] sm:$0xff] %vm1190, %v1117
      %1203 = vst.msk [vmem:[#allocation3 + $0x60] sm:$0xff] %vm1190, %v1119
      %1204 = vst.msk [vmem:[#allocation3 + $0x68] sm:$0xff] %vm1190, %v1121
      %1205 = vst.msk [vmem:[#allocation3 + $0x70] sm:$0xff] %vm1190, %v1123
      %1206 = vst.msk [vmem:[#allocation3 + $0x78] sm:$0xff] %vm1190, %v1125
      %1207 = vst.msk [vmem:[#allocation3 + $0x80] sm:$0xff] %vm1190, %v1127
      %1208 = vst.msk [vmem:[#allocation3 + $0x88] sm:$0xff] %vm1190, %v1129
      %1209 = vst.msk [vmem:[#allocation3 + $0x90] sm:$0xff] %vm1190, %v1131
      %1210 = vst.msk [vmem:[#allocation3 + $0x98] sm:$0xff] %vm1190, %v1133
      %1211 = vst.msk [vmem:[#allocation3 + $0xa0] sm:$0xff] %vm1190, %v1135
      %1212 = vst.msk [vmem:[#allocation3 + $0xa8] sm:$0xff] %vm1190, %v1137
      %1213 = vst.msk [vmem:[#allocation3 + $0xb0] sm:$0xff] %vm1190, %v1139
      %1214 = vst.msk [vmem:[#allocation3 + $0xb8] sm:$0xff] %vm1190, %v1141
      %1215 = vst.msk [vmem:[#allocation3 + $0xc0] sm:$0xff] %vm1190, %v1143
      %1216 = vst.msk [vmem:[#allocation3 + $0xc8] sm:$0xff] %vm1190, %v1145
      %1217 = vst.msk [vmem:[#allocation3 + $0xd0] sm:$0xff] %vm1190, %v1147
      %1218 = vst.msk [vmem:[#allocation3 + $0xd8] sm:$0xff] %vm1190, %v1149
      %1219 = vst.msk [vmem:[#allocation3 + $0xe0] sm:$0xff] %vm1190, %v1151
      %1220 = vst.msk [vmem:[#allocation3 + $0xe8] sm:$0xff] %vm1190, %v1153
      %1221 = vst.msk [vmem:[#allocation3 + $0xf0] sm:$0xff] %vm1190, %v1155
      %1222 = vst.msk [vmem:[#allocation3 + $0xf8] sm:$0xff] %vm1190, %v1157
      %v1223 = vld [vmem:[%s289 + $0x2] sm:$0xff]
      %v1224 = vld [vmem:[%s289 + $0xa] sm:$0xff]
      %v1225 = vld [vmem:[%s289 + $0x1a] sm:$0xff]
      %v1226 = vld [vmem:[%s289 + $0x22] sm:$0xff]
      %v1227 = vld [vmem:[%s289 + $0x32] sm:$0xff]
      %v1228 = vld [vmem:[%s289 + $0x3a] sm:$0xff]
      %v1229 = vld [vmem:[%s289 + $0x4a] sm:$0xff]
      %v1230 = vld [vmem:[%s289 + $0x52] sm:$0xff]
      %v1231 = vld [vmem:[%s289 + $0x62] sm:$0xff]
      %v1232 = vld [vmem:[%s289 + $0x6a] sm:$0xff]
      %v1233 = vld [vmem:[%s289 + $0x7a] sm:$0xff]
      %v1234 = vld [vmem:[%s289 + $0x82] sm:$0xff]
      %v1235 = vld [vmem:[%s289 + $0x92] sm:$0xff]
      %v1236 = vld [vmem:[%s289 + $0x9a] sm:$0xff]
      %v1237 = vld [vmem:[%s289 + $0xaa] sm:$0xff]
      %v1238 = vld [vmem:[%s289 + $0xb2] sm:$0xff]
      %v1239 = vld [vmem:[%s289 + $0xc2] sm:$0xff]
      %v1240 = vld [vmem:[%s289 + $0xca] sm:$0xff]
      %v1241 = vld [vmem:[%s289 + $0xda] sm:$0xff]
      %v1242 = vld [vmem:[%s289 + $0xe2] sm:$0xff]
      %v1243 = vld [vmem:[%s289 + $0xf2] sm:$0xff]
      %v1244 = vld [vmem:[%s289 + $0xfa] sm:$0xff]
      %v1245 = vld [vmem:[%s289 + $0x10a] sm:$0xff]
      %v1246 = vld [vmem:[%s289 + $0x112] sm:$0xff]
      %v1247 = vld [vmem:[%s289 + $0x122] sm:$0xff]
      %v1248 = vld [vmem:[%s289 + $0x12a] sm:$0xff]
      %v1249 = vld [vmem:[%s289 + $0x13a] sm:$0xff]
      %v1250 = vld [vmem:[%s289 + $0x142] sm:$0xff]
      %v1251 = vld [vmem:[%s289 + $0x152] sm:$0xff]
      %v1252 = vld [vmem:[%s289 + $0x15a] sm:$0xff]
      %v1253 = vld [vmem:[%s289 + $0x16a] sm:$0xff]
      %v1254 = vld [vmem:[%s289 + $0x172] sm:$0xff]
      %1287 = vrot.lane.b32.xlu0 %v1223, 20
      %v1288 = vpop.permute.xlu0 %1287
      %1289 = vrot.lane.b32.xlu0 %v1224, 20
      %v1290 = vpop.permute.xlu0 %1289
      %1291 = vrot.lane.b32.xlu0 %v1225, 20
      %v1292 = vpop.permute.xlu0 %1291
      %1293 = vrot.lane.b32.xlu0 %v1226, 20
      %v1294 = vpop.permute.xlu0 %1293
      %1295 = vrot.lane.b32.xlu0 %v1227, 20
      %v1296 = vpop.permute.xlu0 %1295
      %1297 = vrot.lane.b32.xlu0 %v1228, 20
      %v1298 = vpop.permute.xlu0 %1297
      %1299 = vrot.lane.b32.xlu0 %v1229, 20
      %v1300 = vpop.permute.xlu0 %1299
      %1301 = vrot.lane.b32.xlu0 %v1230, 20
      %v1302 = vpop.permute.xlu0 %1301
      %1303 = vrot.lane.b32.xlu0 %v1231, 20
      %v1304 = vpop.permute.xlu0 %1303
      %1305 = vrot.lane.b32.xlu0 %v1232, 20
      %v1306 = vpop.permute.xlu0 %1305
      %1307 = vrot.lane.b32.xlu0 %v1233, 20
      %v1308 = vpop.permute.xlu0 %1307
      %1309 = vrot.lane.b32.xlu0 %v1234, 20
      %v1310 = vpop.permute.xlu0 %1309
      %1311 = vrot.lane.b32.xlu0 %v1235, 20
      %v1312 = vpop.permute.xlu0 %1311
      %1313 = vrot.lane.b32.xlu0 %v1236, 20
      %v1314 = vpop.permute.xlu0 %1313
      %1315 = vrot.lane.b32.xlu0 %v1237, 20
      %v1316 = vpop.permute.xlu0 %1315
      %1317 = vrot.lane.b32.xlu0 %v1238, 20
      %v1318 = vpop.permute.xlu0 %1317
      %1319 = vrot.lane.b32.xlu0 %v1239, 20
      %v1320 = vpop.permute.xlu0 %1319
      %1321 = vrot.lane.b32.xlu0 %v1240, 20
      %v1322 = vpop.permute.xlu0 %1321
      %1323 = vrot.lane.b32.xlu0 %v1241, 20
      %v1324 = vpop.permute.xlu0 %1323
      %1325 = vrot.lane.b32.xlu0 %v1242, 20
      %v1326 = vpop.permute.xlu0 %1325
      %1327 = vrot.lane.b32.xlu0 %v1243, 20
      %v1328 = vpop.permute.xlu0 %1327
      %1329 = vrot.lane.b32.xlu0 %v1244, 20
      %v1330 = vpop.permute.xlu0 %1329
      %1331 = vrot.lane.b32.xlu0 %v1245, 20
      %v1332 = vpop.permute.xlu0 %1331
      %1333 = vrot.lane.b32.xlu0 %v1246, 20
      %v1334 = vpop.permute.xlu0 %1333
      %1335 = vrot.lane.b32.xlu0 %v1247, 20
      %v1336 = vpop.permute.xlu0 %1335
      %1337 = vrot.lane.b32.xlu0 %v1248, 20
      %v1338 = vpop.permute.xlu0 %1337
      %1339 = vrot.lane.b32.xlu0 %v1249, 20
      %v1340 = vpop.permute.xlu0 %1339
      %1341 = vrot.lane.b32.xlu0 %v1250, 20
      %v1342 = vpop.permute.xlu0 %1341
      %1343 = vrot.lane.b32.xlu0 %v1251, 20
      %v1344 = vpop.permute.xlu0 %1343
      %1345 = vrot.lane.b32.xlu0 %v1252, 20
      %v1346 = vpop.permute.xlu0 %1345
      %1347 = vrot.lane.b32.xlu0 %v1253, 20
      %v1348 = vpop.permute.xlu0 %1347
      %1349 = vrot.lane.b32.xlu0 %v1254, 20
      %v1350 = vpop.permute.xlu0 %1349
      %vm1383 = vcmask 195744
      %1384 = vst.msk [vmem:[#allocation3] sm:$0xff] %vm1383, %v1288
      %1385 = vst.msk [vmem:[#allocation3 + $0x8] sm:$0xff] %vm1383, %v1290
      %1386 = vst.msk [vmem:[#allocation3 + $0x10] sm:$0xff] %vm1383, %v1292
      %1387 = vst.msk [vmem:[#allocation3 + $0x18] sm:$0xff] %vm1383, %v1294
      %1388 = vst.msk [vmem:[#allocation3 + $0x20] sm:$0xff] %vm1383, %v1296
      %1389 = vst.msk [vmem:[#allocation3 + $0x28] sm:$0xff] %vm1383, %v1298
      %1390 = vst.msk [vmem:[#allocation3 + $0x30] sm:$0xff] %vm1383, %v1300
      %1391 = vst.msk [vmem:[#allocation3 + $0x38] sm:$0xff] %vm1383, %v1302
      %1392 = vst.msk [vmem:[#allocation3 + $0x40] sm:$0xff] %vm1383, %v1304
      %1393 = vst.msk [vmem:[#allocation3 + $0x48] sm:$0xff] %vm1383, %v1306
      %1394 = vst.msk [vmem:[#allocation3 + $0x50] sm:$0xff] %vm1383, %v1308
      %1395 = vst.msk [vmem:[#allocation3 + $0x58] sm:$0xff] %vm1383, %v1310
      %1396 = vst.msk [vmem:[#allocation3 + $0x60] sm:$0xff] %vm1383, %v1312
      %1397 = vst.msk [vmem:[#allocation3 + $0x68] sm:$0xff] %vm1383, %v1314
      %1398 = vst.msk [vmem:[#allocation3 + $0x70] sm:$0xff] %vm1383, %v1316
      %1399 = vst.msk [vmem:[#allocation3 + $0x78] sm:$0xff] %vm1383, %v1318
      %1400 = vst.msk [vmem:[#allocation3 + $0x80] sm:$0xff] %vm1383, %v1320
      %1401 = vst.msk [vmem:[#allocation3 + $0x88] sm:$0xff] %vm1383, %v1322
      %1402 = vst.msk [vmem:[#allocation3 + $0x90] sm:$0xff] %vm1383, %v1324
      %1403 = vst.msk [vmem:[#allocation3 + $0x98] sm:$0xff] %vm1383, %v1326
      %1404 = vst.msk [vmem:[#allocation3 + $0xa0] sm:$0xff] %vm1383, %v1328
      %1405 = vst.msk [vmem:[#allocation3 + $0xa8] sm:$0xff] %vm1383, %v1330
      %1406 = vst.msk [vmem:[#allocation3 + $0xb0] sm:$0xff] %vm1383, %v1332
      %1407 = vst.msk [vmem:[#allocation3 + $0xb8] sm:$0xff] %vm1383, %v1334
      %1408 = vst.msk [vmem:[#allocation3 + $0xc0] sm:$0xff] %vm1383, %v1336
      %1409 = vst.msk [vmem:[#allocation3 + $0xc8] sm:$0xff] %vm1383, %v1338
      %1410 = vst.msk [vmem:[#allocation3 + $0xd0] sm:$0xff] %vm1383, %v1340
      %1411 = vst.msk [vmem:[#allocation3 + $0xd8] sm:$0xff] %vm1383, %v1342
      %1412 = vst.msk [vmem:[#allocation3 + $0xe0] sm:$0xff] %vm1383, %v1344
      %1413 = vst.msk [vmem:[#allocation3 + $0xe8] sm:$0xff] %vm1383, %v1346
      %1414 = vst.msk [vmem:[#allocation3 + $0xf0] sm:$0xff] %vm1383, %v1348
      %1415 = vst.msk [vmem:[#allocation3 + $0xf8] sm:$0xff] %vm1383, %v1350
      %s1416 = scalar_lea.vmem [#allocation2], 48
      %v1417 = vld [vmem:[%s1416] sm:$0xff]
      %v1418 = vld [vmem:[%s1416 + $0x8] sm:$0xff]
      %v1419 = vld [vmem:[%s1416 + $0x18] sm:$0xff]
      %v1420 = vld [vmem:[%s1416 + $0x20] sm:$0xff]
      %v1421 = vld [vmem:[%s1416 + $0x30] sm:$0xff]
      %v1422 = vld [vmem:[%s1416 + $0x38] sm:$0xff]
      %v1423 = vld [vmem:[%s1416 + $0x48] sm:$0xff]
      %v1424 = vld [vmem:[%s1416 + $0x50] sm:$0xff]
      %v1425 = vld [vmem:[%s1416 + $0x60] sm:$0xff]
      %v1426 = vld [vmem:[%s1416 + $0x68] sm:$0xff]
      %v1427 = vld [vmem:[%s1416 + $0x78] sm:$0xff]
      %v1428 = vld [vmem:[%s1416 + $0x80] sm:$0xff]
      %v1429 = vld [vmem:[%s1416 + $0x90] sm:$0xff]
      %v1430 = vld [vmem:[%s1416 + $0x98] sm:$0xff]
      %v1431 = vld [vmem:[%s1416 + $0xa8] sm:$0xff]
      %v1432 = vld [vmem:[%s1416 + $0xb0] sm:$0xff]
      %v1433 = vld [vmem:[%s1416 + $0xc0] sm:$0xff]
      %v1434 = vld [vmem:[%s1416 + $0xc8] sm:$0xff]
      %v1435 = vld [vmem:[%s1416 + $0xd8] sm:$0xff]
      %v1436 = vld [vmem:[%s1416 + $0xe0] sm:$0xff]
      %v1437 = vld [vmem:[%s1416 + $0xf0] sm:$0xff]
      %v1438 = vld [vmem:[%s1416 + $0xf8] sm:$0xff]
      %v1439 = vld [vmem:[%s1416 + $0x108] sm:$0xff]
      %v1440 = vld [vmem:[%s1416 + $0x110] sm:$0xff]
      %v1441 = vld [vmem:[%s1416 + $0x120] sm:$0xff]
      %v1442 = vld [vmem:[%s1416 + $0x128] sm:$0xff]
      %v1443 = vld [vmem:[%s1416 + $0x138] sm:$0xff]
      %v1444 = vld [vmem:[%s1416 + $0x140] sm:$0xff]
      %v1445 = vld [vmem:[%s1416 + $0x150] sm:$0xff]
      %v1446 = vld [vmem:[%s1416 + $0x158] sm:$0xff]
      %v1447 = vld [vmem:[%s1416 + $0x168] sm:$0xff]
      %v1448 = vld [vmem:[%s1416 + $0x170] sm:$0xff]
      %1481 = vrot.lane.b32.xlu0 %v1417, 24
      %v1482 = vpop.permute.xlu0 %1481
      %1483 = vrot.lane.b32.xlu0 %v1418, 24
      %v1484 = vpop.permute.xlu0 %1483
      %1485 = vrot.lane.b32.xlu0 %v1419, 24
      %v1486 = vpop.permute.xlu0 %1485
      %1487 = vrot.lane.b32.xlu0 %v1420, 24
      %v1488 = vpop.permute.xlu0 %1487
      %1489 = vrot.lane.b32.xlu0 %v1421, 24
      %v1490 = vpop.permute.xlu0 %1489
      %1491 = vrot.lane.b32.xlu0 %v1422, 24
      %v1492 = vpop.permute.xlu0 %1491
      %1493 = vrot.lane.b32.xlu0 %v1423, 24
      %v1494 = vpop.permute.xlu0 %1493
      %1495 = vrot.lane.b32.xlu0 %v1424, 24
      %v1496 = vpop.permute.xlu0 %1495
      %1497 = vrot.lane.b32.xlu0 %v1425, 24
      %v1498 = vpop.permute.xlu0 %1497
      %1499 = vrot.lane.b32.xlu0 %v1426, 24
      %v1500 = vpop.permute.xlu0 %1499
      %1501 = vrot.lane.b32.xlu0 %v1427, 24
      %v1502 = vpop.permute.xlu0 %1501
      %1503 = vrot.lane.b32.xlu0 %v1428, 24
      %v1504 = vpop.permute.xlu0 %1503
      %1505 = vrot.lane.b32.xlu0 %v1429, 24
      %v1506 = vpop.permute.xlu0 %1505
      %1507 = vrot.lane.b32.xlu0 %v1430, 24
      %v1508 = vpop.permute.xlu0 %1507
      %1509 = vrot.lane.b32.xlu0 %v1431, 24
      %v1510 = vpop.permute.xlu0 %1509
      %1511 = vrot.lane.b32.xlu0 %v1432, 24
      %v1512 = vpop.permute.xlu0 %1511
      %1513 = vrot.lane.b32.xlu0 %v1433, 24
      %v1514 = vpop.permute.xlu0 %1513
      %1515 = vrot.lane.b32.xlu0 %v1434, 24
      %v1516 = vpop.permute.xlu0 %1515
      %1517 = vrot.lane.b32.xlu0 %v1435, 24
      %v1518 = vpop.permute.xlu0 %1517
      %1519 = vrot.lane.b32.xlu0 %v1436, 24
      %v1520 = vpop.permute.xlu0 %1519
      %1521 = vrot.lane.b32.xlu0 %v1437, 24
      %v1522 = vpop.permute.xlu0 %1521
      %1523 = vrot.lane.b32.xlu0 %v1438, 24
      %v1524 = vpop.permute.xlu0 %1523
      %1525 = vrot.lane.b32.xlu0 %v1439, 24
      %v1526 = vpop.permute.xlu0 %1525
      %1527 = vrot.lane.b32.xlu0 %v1440, 24
      %v1528 = vpop.permute.xlu0 %1527
      %1529 = vrot.lane.b32.xlu0 %v1441, 24
      %v1530 = vpop.permute.xlu0 %1529
      %1531 = vrot.lane.b32.xlu0 %v1442, 24
      %v1532 = vpop.permute.xlu0 %1531
      %1533 = vrot.lane.b32.xlu0 %v1443, 24
      %v1534 = vpop.permute.xlu0 %1533
      %1535 = vrot.lane.b32.xlu0 %v1444, 24
      %v1536 = vpop.permute.xlu0 %1535
      %1537 = vrot.lane.b32.xlu0 %v1445, 24
      %v1538 = vpop.permute.xlu0 %1537
      %1539 = vrot.lane.b32.xlu0 %v1446, 24
      %v1540 = vpop.permute.xlu0 %1539
      %1541 = vrot.lane.b32.xlu0 %v1447, 24
      %v1542 = vpop.permute.xlu0 %1541
      %1543 = vrot.lane.b32.xlu0 %v1448, 24
      %v1544 = vpop.permute.xlu0 %1543
      %vm1577 = vcmask 228544
      %1578 = vst.msk [vmem:[#allocation3] sm:$0xff] %vm1577, %v1482
      %1579 = vst.msk [vmem:[#allocation3 + $0x8] sm:$0xff] %vm1577, %v1484
      %1580 = vst.msk [vmem:[#allocation3 + $0x10] sm:$0xff] %vm1577, %v1486
      %1581 = vst.msk [vmem:[#allocation3 + $0x18] sm:$0xff] %vm1577, %v1488
      %1582 = vst.msk [vmem:[#allocation3 + $0x20] sm:$0xff] %vm1577, %v1490
      %1583 = vst.msk [vmem:[#allocation3 + $0x28] sm:$0xff] %vm1577, %v1492
      %1584 = vst.msk [vmem:[#allocation3 + $0x30] sm:$0xff] %vm1577, %v1494
      %1585 = vst.msk [vmem:[#allocation3 + $0x38] sm:$0xff] %vm1577, %v1496
      %1586 = vst.msk [vmem:[#allocation3 + $0x40] sm:$0xff] %vm1577, %v1498
      %1587 = vst.msk [vmem:[#allocation3 + $0x48] sm:$0xff] %vm1577, %v1500
      %1588 = vst.msk [vmem:[#allocation3 + $0x50] sm:$0xff] %vm1577, %v1502
      %1589 = vst.msk [vmem:[#allocation3 + $0x58] sm:$0xff] %vm1577, %v1504
      %1590 = vst.msk [vmem:[#allocation3 + $0x60] sm:$0xff] %vm1577, %v1506
      %1591 = vst.msk [vmem:[#allocation3 + $0x68] sm:$0xff] %vm1577, %v1508
      %1592 = vst.msk [vmem:[#allocation3 + $0x70] sm:$0xff] %vm1577, %v1510
      %1593 = vst.msk [vmem:[#allocation3 + $0x78] sm:$0xff] %vm1577, %v1512
      %1594 = vst.msk [vmem:[#allocation3 + $0x80] sm:$0xff] %vm1577, %v1514
      %1595 = vst.msk [vmem:[#allocation3 + $0x88] sm:$0xff] %vm1577, %v1516
      %1596 = vst.msk [vmem:[#allocation3 + $0x90] sm:$0xff] %vm1577, %v1518
      %1597 = vst.msk [vmem:[#allocation3 + $0x98] sm:$0xff] %vm1577, %v1520
      %1598 = vst.msk [vmem:[#allocation3 + $0xa0] sm:$0xff] %vm1577, %v1522
      %1599 = vst.msk [vmem:[#allocation3 + $0xa8] sm:$0xff] %vm1577, %v1524
      %1600 = vst.msk [vmem:[#allocation3 + $0xb0] sm:$0xff] %vm1577, %v1526
      %1601 = vst.msk [vmem:[#allocation3 + $0xb8] sm:$0xff] %vm1577, %v1528
      %1602 = vst.msk [vmem:[#allocation3 + $0xc0] sm:$0xff] %vm1577, %v1530
      %1603 = vst.msk [vmem:[#allocation3 + $0xc8] sm:$0xff] %vm1577, %v1532
      %1604 = vst.msk [vmem:[#allocation3 + $0xd0] sm:$0xff] %vm1577, %v1534
      %1605 = vst.msk [vmem:[#allocation3 + $0xd8] sm:$0xff] %vm1577, %v1536
      %1606 = vst.msk [vmem:[#allocation3 + $0xe0] sm:$0xff] %vm1577, %v1538
      %1607 = vst.msk [vmem:[#allocation3 + $0xe8] sm:$0xff] %vm1577, %v1540
      %1608 = vst.msk [vmem:[#allocation3 + $0xf0] sm:$0xff] %vm1577, %v1542
      %1609 = vst.msk [vmem:[#allocation3 + $0xf8] sm:$0xff] %vm1577, %v1544
      %v1610 = vld [vmem:[%s1416 + $0x1] sm:$0xff]
      %v1611 = vld [vmem:[%s1416 + $0x9] sm:$0xff]
      %v1612 = vld [vmem:[%s1416 + $0x19] sm:$0xff]
      %v1613 = vld [vmem:[%s1416 + $0x21] sm:$0xff]
      %v1614 = vld [vmem:[%s1416 + $0x31] sm:$0xff]
      %v1615 = vld [vmem:[%s1416 + $0x39] sm:$0xff]
      %v1616 = vld [vmem:[%s1416 + $0x49] sm:$0xff]
      %v1617 = vld [vmem:[%s1416 + $0x51] sm:$0xff]
      %v1618 = vld [vmem:[%s1416 + $0x61] sm:$0xff]
      %v1619 = vld [vmem:[%s1416 + $0x69] sm:$0xff]
      %v1620 = vld [vmem:[%s1416 + $0x79] sm:$0xff]
      %v1621 = vld [vmem:[%s1416 + $0x81] sm:$0xff]
      %v1622 = vld [vmem:[%s1416 + $0x91] sm:$0xff]
      %v1623 = vld [vmem:[%s1416 + $0x99] sm:$0xff]
      %v1624 = vld [vmem:[%s1416 + $0xa9] sm:$0xff]
      %v1625 = vld [vmem:[%s1416 + $0xb1] sm:$0xff]
      %v1626 = vld [vmem:[%s1416 + $0xc1] sm:$0xff]
      %v1627 = vld [vmem:[%s1416 + $0xc9] sm:$0xff]
      %v1628 = vld [vmem:[%s1416 + $0xd9] sm:$0xff]
      %v1629 = vld [vmem:[%s1416 + $0xe1] sm:$0xff]
      %v1630 = vld [vmem:[%s1416 + $0xf1] sm:$0xff]
      %v1631 = vld [vmem:[%s1416 + $0xf9] sm:$0xff]
      %v1632 = vld [vmem:[%s1416 + $0x109] sm:$0xff]
      %v1633 = vld [vmem:[%s1416 + $0x111] sm:$0xff]
      %v1634 = vld [vmem:[%s1416 + $0x121] sm:$0xff]
      %v1635 = vld [vmem:[%s1416 + $0x129] sm:$0xff]
      %v1636 = vld [vmem:[%s1416 + $0x139] sm:$0xff]
      %v1637 = vld [vmem:[%s1416 + $0x141] sm:$0xff]
      %v1638 = vld [vmem:[%s1416 + $0x151] sm:$0xff]
      %v1639 = vld [vmem:[%s1416 + $0x159] sm:$0xff]
      %v1640 = vld [vmem:[%s1416 + $0x169] sm:$0xff]
      %v1641 = vld [vmem:[%s1416 + $0x171] sm:$0xff]
      %1674 = vrot.lane.b32.xlu0 %v1610, 28
      %v1675 = vpop.permute.xlu0 %1674
      %1676 = vrot.lane.b32.xlu0 %v1611, 28
      %v1677 = vpop.permute.xlu0 %1676
      %1678 = vrot.lane.b32.xlu0 %v1612, 28
      %v1679 = vpop.permute.xlu0 %1678
      %1680 = vrot.lane.b32.xlu0 %v1613, 28
      %v1681 = vpop.permute.xlu0 %1680
      %1682 = vrot.lane.b32.xlu0 %v1614, 28
      %v1683 = vpop.permute.xlu0 %1682
      %1684 = vrot.lane.b32.xlu0 %v1615, 28
      %v1685 = vpop.permute.xlu0 %1684
      %1686 = vrot.lane.b32.xlu0 %v1616, 28
      %v1687 = vpop.permute.xlu0 %1686
      %1688 = vrot.lane.b32.xlu0 %v1617, 28
      %v1689 = vpop.permute.xlu0 %1688
      %1690 = vrot.lane.b32.xlu0 %v1618, 28
      %v1691 = vpop.permute.xlu0 %1690
      %1692 = vrot.lane.b32.xlu0 %v1619, 28
      %v1693 = vpop.permute.xlu0 %1692
      %1694 = vrot.lane.b32.xlu0 %v1620, 28
      %v1695 = vpop.permute.xlu0 %1694
      %1696 = vrot.lane.b32.xlu0 %v1621, 28
      %v1697 = vpop.permute.xlu0 %1696
      %1698 = vrot.lane.b32.xlu0 %v1622, 28
      %v1699 = vpop.permute.xlu0 %1698
      %1700 = vrot.lane.b32.xlu0 %v1623, 28
      %v1701 = vpop.permute.xlu0 %1700
      %1702 = vrot.lane.b32.xlu0 %v1624, 28
      %v1703 = vpop.permute.xlu0 %1702
      %1704 = vrot.lane.b32.xlu0 %v1625, 28
      %v1705 = vpop.permute.xlu0 %1704
      %1706 = vrot.lane.b32.xlu0 %v1626, 28
      %v1707 = vpop.permute.xlu0 %1706
      %1708 = vrot.lane.b32.xlu0 %v1627, 28
      %v1709 = vpop.permute.xlu0 %1708
      %1710 = vrot.lane.b32.xlu0 %v1628, 28
      %v1711 = vpop.permute.xlu0 %1710
      %1712 = vrot.lane.b32.xlu0 %v1629, 28
      %v1713 = vpop.permute.xlu0 %1712
      %1714 = vrot.lane.b32.xlu0 %v1630, 28
      %v1715 = vpop.permute.xlu0 %1714
      %1716 = vrot.lane.b32.xlu0 %v1631, 28
      %v1717 = vpop.permute.xlu0 %1716
      %1718 = vrot.lane.b32.xlu0 %v1632, 28
      %v1719 = vpop.permute.xlu0 %1718
      %1720 = vrot.lane.b32.xlu0 %v1633, 28
      %v1721 = vpop.permute.xlu0 %1720
      %1722 = vrot.lane.b32.xlu0 %v1634, 28
      %v1723 = vpop.permute.xlu0 %1722
      %1724 = vrot.lane.b32.xlu0 %v1635, 28
      %v1725 = vpop.permute.xlu0 %1724
      %1726 = vrot.lane.b32.xlu0 %v1636, 28
      %v1727 = vpop.permute.xlu0 %1726
      %1728 = vrot.lane.b32.xlu0 %v1637, 28
      %v1729 = vpop.permute.xlu0 %1728
      %1730 = vrot.lane.b32.xlu0 %v1638, 28
      %v1731 = vpop.permute.xlu0 %1730
      %1732 = vrot.lane.b32.xlu0 %v1639, 28
      %v1733 = vpop.permute.xlu0 %1732
      %1734 = vrot.lane.b32.xlu0 %v1640, 28
      %v1735 = vpop.permute.xlu0 %1734
      %1736 = vrot.lane.b32.xlu0 %v1641, 28
      %v1737 = vpop.permute.xlu0 %1736
      %vm1770 = vcmask 261344
      %1771 = vst.msk [vmem:[#allocation3] sm:$0xff] %vm1770, %v1675
      %1772 = vst.msk [vmem:[#allocation3 + $0x8] sm:$0xff] %vm1770, %v1677
      %1773 = vst.msk [vmem:[#allocation3 + $0x10] sm:$0xff] %vm1770, %v1679
      %1774 = vst.msk [vmem:[#allocation3 + $0x18] sm:$0xff] %vm1770, %v1681
      %1775 = vst.msk [vmem:[#allocation3 + $0x20] sm:$0xff] %vm1770, %v1683
      %1776 = vst.msk [vmem:[#allocation3 + $0x28] sm:$0xff] %vm1770, %v1685
      %1777 = vst.msk [vmem:[#allocation3 + $0x30] sm:$0xff] %vm1770, %v1687
      %1778 = vst.msk [vmem:[#allocation3 + $0x38] sm:$0xff] %vm1770, %v1689
      %1779 = vst.msk [vmem:[#allocation3 + $0x40] sm:$0xff] %vm1770, %v1691
      %1780 = vst.msk [vmem:[#allocation3 + $0x48] sm:$0xff] %vm1770, %v1693
      %1781 = vst.msk [vmem:[#allocation3 + $0x50] sm:$0xff] %vm1770, %v1695
      %1782 = vst.msk [vmem:[#allocation3 + $0x58] sm:$0xff] %vm1770, %v1697
      %1783 = vst.msk [vmem:[#allocation3 + $0x60] sm:$0xff] %vm1770, %v1699
      %1784 = vst.msk [vmem:[#allocation3 + $0x68] sm:$0xff] %vm1770, %v1701
      %1785 = vst.msk [vmem:[#allocation3 + $0x70] sm:$0xff] %vm1770, %v1703
      %1786 = vst.msk [vmem:[#allocation3 + $0x78] sm:$0xff] %vm1770, %v1705
      %1787 = vst.msk [vmem:[#allocation3 + $0x80] sm:$0xff] %vm1770, %v1707
      %1788 = vst.msk [vmem:[#allocation3 + $0x88] sm:$0xff] %vm1770, %v1709
      %1789 = vst.msk [vmem:[#allocation3 + $0x90] sm:$0xff] %vm1770, %v1711
      %1790 = vst.msk [vmem:[#allocation3 + $0x98] sm:$0xff] %vm1770, %v1713
      %1791 = vst.msk [vmem:[#allocation3 + $0xa0] sm:$0xff] %vm1770, %v1715
      %1792 = vst.msk [vmem:[#allocation3 + $0xa8] sm:$0xff] %vm1770, %v1717
      %1793 = vst.msk [vmem:[#allocation3 + $0xb0] sm:$0xff] %vm1770, %v1719
      %1794 = vst.msk [vmem:[#allocation3 + $0xb8] sm:$0xff] %vm1770, %v1721
      %1795 = vst.msk [vmem:[#allocation3 + $0xc0] sm:$0xff] %vm1770, %v1723
      %1796 = vst.msk [vmem:[#allocation3 + $0xc8] sm:$0xff] %vm1770, %v1725
      %1797 = vst.msk [vmem:[#allocation3 + $0xd0] sm:$0xff] %vm1770, %v1727
      %1798 = vst.msk [vmem:[#allocation3 + $0xd8] sm:$0xff] %vm1770, %v1729
      %1799 = vst.msk [vmem:[#allocation3 + $0xe0] sm:$0xff] %vm1770, %v1731
      %1800 = vst.msk [vmem:[#allocation3 + $0xe8] sm:$0xff] %vm1770, %v1733
      %1801 = vst.msk [vmem:[#allocation3 + $0xf0] sm:$0xff] %vm1770, %v1735
      %1802 = vst.msk [vmem:[#allocation3 + $0xf8] sm:$0xff] %vm1770, %v1737
      %v1803 = vld [vmem:[%s1416 + $0x2] sm:$0xff]
      %v1804 = vld [vmem:[%s1416 + $0xa] sm:$0xff]
      %v1805 = vld [vmem:[%s1416 + $0x1a] sm:$0xff]
      %v1806 = vld [vmem:[%s1416 + $0x22] sm:$0xff]
      %v1807 = vld [vmem:[%s1416 + $0x32] sm:$0xff]
      %v1808 = vld [vmem:[%s1416 + $0x3a] sm:$0xff]
      %v1809 = vld [vmem:[%s1416 + $0x4a] sm:$0xff]
      %v1810 = vld [vmem:[%s1416 + $0x52] sm:$0xff]
      %v1811 = vld [vmem:[%s1416 + $0x62] sm:$0xff]
      %v1812 = vld [vmem:[%s1416 + $0x6a] sm:$0xff]
      %v1813 = vld [vmem:[%s1416 + $0x7a] sm:$0xff]
      %v1814 = vld [vmem:[%s1416 + $0x82] sm:$0xff]
      %v1815 = vld [vmem:[%s1416 + $0x92] sm:$0xff]
      %v1816 = vld [vmem:[%s1416 + $0x9a] sm:$0xff]
      %v1817 = vld [vmem:[%s1416 + $0xaa] sm:$0xff]
      %v1818 = vld [vmem:[%s1416 + $0xb2] sm:$0xff]
      %v1819 = vld [vmem:[%s1416 + $0xc2] sm:$0xff]
      %v1820 = vld [vmem:[%s1416 + $0xca] sm:$0xff]
      %v1821 = vld [vmem:[%s1416 + $0xda] sm:$0xff]
      %v1822 = vld [vmem:[%s1416 + $0xe2] sm:$0xff]
      %v1823 = vld [vmem:[%s1416 + $0xf2] sm:$0xff]
      %v1824 = vld [vmem:[%s1416 + $0xfa] sm:$0xff]
      %v1825 = vld [vmem:[%s1416 + $0x10a] sm:$0xff]
      %v1826 = vld [vmem:[%s1416 + $0x112] sm:$0xff]
      %v1827 = vld [vmem:[%s1416 + $0x122] sm:$0xff]
      %v1828 = vld [vmem:[%s1416 + $0x12a] sm:$0xff]
      %v1829 = vld [vmem:[%s1416 + $0x13a] sm:$0xff]
      %v1830 = vld [vmem:[%s1416 + $0x142] sm:$0xff]
      %v1831 = vld [vmem:[%s1416 + $0x152] sm:$0xff]
      %v1832 = vld [vmem:[%s1416 + $0x15a] sm:$0xff]
      %v1833 = vld [vmem:[%s1416 + $0x16a] sm:$0xff]
      %v1834 = vld [vmem:[%s1416 + $0x172] sm:$0xff]
      %1867 = vrot.lane.b32.xlu0 %v1803, 32
      %v1868 = vpop.permute.xlu0 %1867
      %1869 = vrot.lane.b32.xlu0 %v1804, 32
      %v1870 = vpop.permute.xlu0 %1869
      %1871 = vrot.lane.b32.xlu0 %v1805, 32
      %v1872 = vpop.permute.xlu0 %1871
      %1873 = vrot.lane.b32.xlu0 %v1806, 32
      %v1874 = vpop.permute.xlu0 %1873
      %1875 = vrot.lane.b32.xlu0 %v1807, 32
      %v1876 = vpop.permute.xlu0 %1875
      %1877 = vrot.lane.b32.xlu0 %v1808, 32
      %v1878 = vpop.permute.xlu0 %1877
      %1879 = vrot.lane.b32.xlu0 %v1809, 32
      %v1880 = vpop.permute.xlu0 %1879
      %1881 = vrot.lane.b32.xlu0 %v1810, 32
      %v1882 = vpop.permute.xlu0 %1881
      %1883 = vrot.lane.b32.xlu0 %v1811, 32
      %v1884 = vpop.permute.xlu0 %1883
      %1885 = vrot.lane.b32.xlu0 %v1812, 32
      %v1886 = vpop.permute.xlu0 %1885
      %1887 = vrot.lane.b32.xlu0 %v1813, 32
      %v1888 = vpop.permute.xlu0 %1887
      %1889 = vrot.lane.b32.xlu0 %v1814, 32
      %v1890 = vpop.permute.xlu0 %1889
      %1891 = vrot.lane.b32.xlu0 %v1815, 32
      %v1892 = vpop.permute.xlu0 %1891
      %1893 = vrot.lane.b32.xlu0 %v1816, 32
      %v1894 = vpop.permute.xlu0 %1893
      %1895 = vrot.lane.b32.xlu0 %v1817, 32
      %v1896 = vpop.permute.xlu0 %1895
      %1897 = vrot.lane.b32.xlu0 %v1818, 32
      %v1898 = vpop.permute.xlu0 %1897
      %1899 = vrot.lane.b32.xlu0 %v1819, 32
      %v1900 = vpop.permute.xlu0 %1899
      %1901 = vrot.lane.b32.xlu0 %v1820, 32
      %v1902 = vpop.permute.xlu0 %1901
      %1903 = vrot.lane.b32.xlu0 %v1821, 32
      %v1904 = vpop.permute.xlu0 %1903
      %1905 = vrot.lane.b32.xlu0 %v1822, 32
      %v1906 = vpop.permute.xlu0 %1905
      %1907 = vrot.lane.b32.xlu0 %v1823, 32
      %v1908 = vpop.permute.xlu0 %1907
      %1909 = vrot.lane.b32.xlu0 %v1824, 32
      %v1910 = vpop.permute.xlu0 %1909
      %1911 = vrot.lane.b32.xlu0 %v1825, 32
      %v1912 = vpop.permute.xlu0 %1911
      %1913 = vrot.lane.b32.xlu0 %v1826, 32
      %v1914 = vpop.permute.xlu0 %1913
      %1915 = vrot.lane.b32.xlu0 %v1827, 32
      %v1916 = vpop.permute.xlu0 %1915
      %1917 = vrot.lane.b32.xlu0 %v1828, 32
      %v1918 = vpop.permute.xlu0 %1917
      %1919 = vrot.lane.b32.xlu0 %v1829, 32
      %v1920 = vpop.permute.xlu0 %1919
      %1921 = vrot.lane.b32.xlu0 %v1830, 32
      %v1922 = vpop.permute.xlu0 %1921
      %1923 = vrot.lane.b32.xlu0 %v1831, 32
      %v1924 = vpop.permute.xlu0 %1923
      %1925 = vrot.lane.b32.xlu0 %v1832, 32
      %v1926 = vpop.permute.xlu0 %1925
      %1927 = vrot.lane.b32.xlu0 %v1833, 32
      %v1928 = vpop.permute.xlu0 %1927
      %1929 = vrot.lane.b32.xlu0 %v1834, 32
      %v1930 = vpop.permute.xlu0 %1929
      %vm1963 = vcmask 294144
      %1964 = vst.msk [vmem:[#allocation3] sm:$0xff] %vm1963, %v1868
      %1965 = vst.msk [vmem:[#allocation3 + $0x8] sm:$0xff] %vm1963, %v1870
      %1966 = vst.msk [vmem:[#allocation3 + $0x10] sm:$0xff] %vm1963, %v1872
      %1967 = vst.msk [vmem:[#allocation3 + $0x18] sm:$0xff] %vm1963, %v1874
      %1968 = vst.msk [vmem:[#allocation3 + $0x20] sm:$0xff] %vm1963, %v1876
      %1969 = vst.msk [vmem:[#allocation3 + $0x28] sm:$0xff] %vm1963, %v1878
      %1970 = vst.msk [vmem:[#allocation3 + $0x30] sm:$0xff] %vm1963, %v1880
      %1971 = vst.msk [vmem:[#allocation3 + $0x38] sm:$0xff] %vm1963, %v1882
      %1972 = vst.msk [vmem:[#allocation3 + $0x40] sm:$0xff] %vm1963, %v1884
      %1973 = vst.msk [vmem:[#allocation3 + $0x48] sm:$0xff] %vm1963, %v1886
      %1974 = vst.msk [vmem:[#allocation3 + $0x50] sm:$0xff] %vm1963, %v1888
      %1975 = vst.msk [vmem:[#allocation3 + $0x58] sm:$0xff] %vm1963, %v1890
      %1976 = vst.msk [vmem:[#allocation3 + $0x60] sm:$0xff] %vm1963, %v1892
      %1977 = vst.msk [vmem:[#allocation3 + $0x68] sm:$0xff] %vm1963, %v1894
      %1978 = vst.msk [vmem:[#allocation3 + $0x70] sm:$0xff] %vm1963, %v1896
      %1979 = vst.msk [vmem:[#allocation3 + $0x78] sm:$0xff] %vm1963, %v1898
      %1980 = vst.msk [vmem:[#allocation3 + $0x80] sm:$0xff] %vm1963, %v1900
      %1981 = vst.msk [vmem:[#allocation3 + $0x88] sm:$0xff] %vm1963, %v1902
      %1982 = vst.msk [vmem:[#allocation3 + $0x90] sm:$0xff] %vm1963, %v1904
      %1983 = vst.msk [vmem:[#allocation3 + $0x98] sm:$0xff] %vm1963, %v1906
      %1984 = vst.msk [vmem:[#allocation3 + $0xa0] sm:$0xff] %vm1963, %v1908
      %1985 = vst.msk [vmem:[#allocation3 + $0xa8] sm:$0xff] %vm1963, %v1910
      %1986 = vst.msk [vmem:[#allocation3 + $0xb0] sm:$0xff] %vm1963, %v1912
      %1987 = vst.msk [vmem:[#allocation3 + $0xb8] sm:$0xff] %vm1963, %v1914
      %1988 = vst.msk [vmem:[#allocation3 + $0xc0] sm:$0xff] %vm1963, %v1916
      %1989 = vst.msk [vmem:[#allocation3 + $0xc8] sm:$0xff] %vm1963, %v1918
      %1990 = vst.msk [vmem:[#allocation3 + $0xd0] sm:$0xff] %vm1963, %v1920
      %1991 = vst.msk [vmem:[#allocation3 + $0xd8] sm:$0xff] %vm1963, %v1922
      %1992 = vst.msk [vmem:[#allocation3 + $0xe0] sm:$0xff] %vm1963, %v1924
      %1993 = vst.msk [vmem:[#allocation3 + $0xe8] sm:$0xff] %vm1963, %v1926
      %1994 = vst.msk [vmem:[#allocation3 + $0xf0] sm:$0xff] %vm1963, %v1928
      %1995 = vst.msk [vmem:[#allocation3 + $0xf8] sm:$0xff] %vm1963, %v1930
      %v1996 = vld [vmem:[#allocation3] sm:$0xff]
      %v1997 = vld [vmem:[#allocation3 + $0x8] sm:$0xff]
      %v1998 = vld [vmem:[#allocation3 + $0x10] sm:$0xff]
      %v1999 = vld [vmem:[#allocation3 + $0x18] sm:$0xff]
      %v2000 = vld [vmem:[#allocation3 + $0x20] sm:$0xff]
      %v2001 = vld [vmem:[#allocation3 + $0x28] sm:$0xff]
      %v2002 = vld [vmem:[#allocation3 + $0x30] sm:$0xff]
      %v2003 = vld [vmem:[#allocation3 + $0x38] sm:$0xff]
      %v2004 = vld [vmem:[#allocation3 + $0x40] sm:$0xff]
      %v2005 = vld [vmem:[#allocation3 + $0x48] sm:$0xff]
      %v2006 = vld [vmem:[#allocation3 + $0x50] sm:$0xff]
      %v2007 = vld [vmem:[#allocation3 + $0x58] sm:$0xff]
      %v2008 = vld [vmem:[#allocation3 + $0x60] sm:$0xff]
      %v2009 = vld [vmem:[#allocation3 + $0x68] sm:$0xff]
      %v2010 = vld [vmem:[#allocation3 + $0x70] sm:$0xff]
      %v2011 = vld [vmem:[#allocation3 + $0x78] sm:$0xff]
      %v2012 = vld [vmem:[#allocation3 + $0x80] sm:$0xff]
      %v2013 = vld [vmem:[#allocation3 + $0x88] sm:$0xff]
      %v2014 = vld [vmem:[#allocation3 + $0x90] sm:$0xff]
      %v2015 = vld [vmem:[#allocation3 + $0x98] sm:$0xff]
      %v2016 = vld [vmem:[#allocation3 + $0xa0] sm:$0xff]
      %v2017 = vld [vmem:[#allocation3 + $0xa8] sm:$0xff]
      %v2018 = vld [vmem:[#allocation3 + $0xb0] sm:$0xff]
      %v2019 = vld [vmem:[#allocation3 + $0xb8] sm:$0xff]
      %v2020 = vld [vmem:[#allocation3 + $0xc0] sm:$0xff]
      %v2021 = vld [vmem:[#allocation3 + $0xc8] sm:$0xff]
      %v2022 = vld [vmem:[#allocation3 + $0xd0] sm:$0xff]
      %v2023 = vld [vmem:[#allocation3 + $0xd8] sm:$0xff]
      %v2024 = vld [vmem:[#allocation3 + $0xe0] sm:$0xff]
      %v2025 = vld [vmem:[#allocation3 + $0xe8] sm:$0xff]
      %v2026 = vld [vmem:[#allocation3 + $0xf0] sm:$0xff]
      %v2027 = vld [vmem:[#allocation3 + $0xf8] sm:$0xff]
      %v2028 = vpack.c.bf16 %v1997, %v1996
      %v2029 = vpack.c.bf16 %v1999, %v1998
      %v2030 = vpack.c.bf16 %v2001, %v2000
      %v2031 = vpack.c.bf16 %v2003, %v2002
      %v2032 = vpack.c.bf16 %v2005, %v2004
      %v2033 = vpack.c.bf16 %v2007, %v2006
      %v2034 = vpack.c.bf16 %v2009, %v2008
      %v2035 = vpack.c.bf16 %v2011, %v2010
      %v2036 = vpack.c.bf16 %v2013, %v2012
      %v2037 = vpack.c.bf16 %v2015, %v2014
      %v2038 = vpack.c.bf16 %v2017, %v2016
      %v2039 = vpack.c.bf16 %v2019, %v2018
      %v2040 = vpack.c.bf16 %v2021, %v2020
      %v2041 = vpack.c.bf16 %v2023, %v2022
      %v2042 = vpack.c.bf16 %v2025, %v2024
      %v2043 = vpack.c.bf16 %v2027, %v2026
      %v2044 = vld [vmem:[%s1] sm:$0xf]
      %v2045 = vld [vmem:[%s1 + $0x4] sm:$0xf]
      %v2046 = vld [vmem:[%s1 + $0x8] sm:$0xf]
      %v2047 = vld [vmem:[%s1 + $0xc] sm:$0xf]
      %v2048 = vld [vmem:[%s1 + $0x10] sm:$0x3]
      %v2054 = vunpack.c.l.b16 %v2044
      %v2055 = vunpack.c.l.b16 %v2045
      %v2056 = vunpack.c.l.b16 %v2046
      %v2057 = vunpack.c.l.b16 %v2047
      %v2058 = vunpack.c.l.b16 %v2048
      %v2059 = vpack.c.b16 %v2055, %v2054
      %v2060 = vpack.c.b16 %v2057, %v2056
      %v2061 = vpack.c.b16 %v2058, %v2058
      %vm2064 = vcmask 293888
      %v2066 = vsel %vm2064, %v2028, 0
      %v2069 = vsel %vm2064, %v2029, 0
      %v2072 = vsel %vm2064, %v2030, 0
      %v2075 = vsel %vm2064, %v2031, 0
      %v2078 = vsel %vm2064, %v2032, 0
      %v2081 = vsel %vm2064, %v2033, 0
      %v2084 = vsel %vm2064, %v2034, 0
      %v2087 = vsel %vm2064, %v2035, 0
      %v2090 = vsel %vm2064, %v2036, 0
      %v2093 = vsel %vm2064, %v2037, 0
      %v2096 = vsel %vm2064, %v2038, 0
      %v2099 = vsel %vm2064, %v2039, 0
      %v2102 = vsel %vm2064, %v2040, 0
      %v2105 = vsel %vm2064, %v2041, 0
      %v2108 = vsel %vm2064, %v2042, 0
      %v2111 = vsel %vm2064, %v2043, 0
      %vm2113 = vcmask 1041408
      %v2115 = vsel %vm2113, %v2061, 0
      %2117 = vmatpush.bf16.msra.mxu0 0
      %2118 = vmatpush.bf16.msra.mxu0 0
      %2119 = vmatpush.bf16.msra.mxu0 0
      %2120 = vmatpush.bf16.msra.mxu0 0
      %2121 = vmatpush.bf16.msra.mxu0 0
      %2122 = vmatpush.bf16.msra.mxu0 %v2115
      %2123 = vmatpush.bf16.msra.mxu0 %v2060
      %2124 = vmatpush.bf16.msra.mxu0 %v2059
      %2125 = vmatmul.bf16.gmra.mxu0 %v2066
      %v2126 = vpop.f32.mrf.mxu0
      %v2127 = vadd.f32 0.0, %v2126
      %v2128 = vpop.f32.mrf.mxu0
      %v2129 = vadd.f32 0.0, %v2128
      %2130 = vmatmul.bf16.gmra.mxu0 %v2069
      %v2131 = vpop.f32.mrf.mxu0
      %v2132 = vadd.f32 0.0, %v2131
      %v2133 = vpop.f32.mrf.mxu0
      %v2134 = vadd.f32 0.0, %v2133
      %2135 = vmatmul.bf16.gmra.mxu0 %v2072
      %v2136 = vpop.f32.mrf.mxu0
      %v2137 = vadd.f32 0.0, %v2136
      %v2138 = vpop.f32.mrf.mxu0
      %v2139 = vadd.f32 0.0, %v2138
      %2140 = vmatmul.bf16.gmra.mxu0 %v2075
      %v2141 = vpop.f32.mrf.mxu0
      %v2142 = vadd.f32 0.0, %v2141
      %v2143 = vpop.f32.mrf.mxu0
      %v2144 = vadd.f32 0.0, %v2143
      %2145 = vmatmul.bf16.gmra.mxu0 %v2078
      %v2146 = vpop.f32.mrf.mxu0
      %v2147 = vadd.f32 0.0, %v2146
      %v2148 = vpop.f32.mrf.mxu0
      %v2149 = vadd.f32 0.0, %v2148
      %2150 = vmatmul.bf16.gmra.mxu0 %v2081
      %v2151 = vpop.f32.mrf.mxu0
      %v2152 = vadd.f32 0.0, %v2151
      %v2153 = vpop.f32.mrf.mxu0
      %v2154 = vadd.f32 0.0, %v2153
      %2155 = vmatmul.bf16.gmra.mxu0 %v2084
      %v2156 = vpop.f32.mrf.mxu0
      %v2157 = vadd.f32 0.0, %v2156
      %v2158 = vpop.f32.mrf.mxu0
      %v2159 = vadd.f32 0.0, %v2158
      %2160 = vmatmul.bf16.gmra.mxu0 %v2087
      %v2161 = vpop.f32.mrf.mxu0
      %v2162 = vadd.f32 0.0, %v2161
      %v2163 = vpop.f32.mrf.mxu0
      %v2164 = vadd.f32 0.0, %v2163
      %2165 = vmatmul.bf16.gmra.mxu0 %v2090
      %v2166 = vpop.f32.mrf.mxu0
      %v2167 = vadd.f32 0.0, %v2166
      %v2168 = vpop.f32.mrf.mxu0
      %v2169 = vadd.f32 0.0, %v2168
      %2170 = vmatmul.bf16.gmra.mxu0 %v2093
      %v2171 = vpop.f32.mrf.mxu0
      %v2172 = vadd.f32 0.0, %v2171
      %v2173 = vpop.f32.mrf.mxu0
      %v2174 = vadd.f32 0.0, %v2173
      %2175 = vmatmul.bf16.gmra.mxu0 %v2096
      %v2176 = vpop.f32.mrf.mxu0
      %v2177 = vadd.f32 0.0, %v2176
      %v2178 = vpop.f32.mrf.mxu0
      %v2179 = vadd.f32 0.0, %v2178
      %2180 = vmatmul.bf16.gmra.mxu0 %v2099
      %v2181 = vpop.f32.mrf.mxu0
      %v2182 = vadd.f32 0.0, %v2181
      %v2183 = vpop.f32.mrf.mxu0
      %v2184 = vadd.f32 0.0, %v2183
      %2185 = vmatmul.bf16.gmra.mxu0 %v2102
      %v2186 = vpop.f32.mrf.mxu0
      %v2187 = vadd.f32 0.0, %v2186
      %v2188 = vpop.f32.mrf.mxu0
      %v2189 = vadd.f32 0.0, %v2188
      %2190 = vmatmul.bf16.gmra.mxu0 %v2105
      %v2191 = vpop.f32.mrf.mxu0
      %v2192 = vadd.f32 0.0, %v2191
      %v2193 = vpop.f32.mrf.mxu0
      %v2194 = vadd.f32 0.0, %v2193
      %2195 = vmatmul.bf16.gmra.mxu0 %v2108
      %v2196 = vpop.f32.mrf.mxu0
      %v2197 = vadd.f32 0.0, %v2196
      %v2198 = vpop.f32.mrf.mxu0
      %v2199 = vadd.f32 0.0, %v2198
      %2200 = vmatmul.bf16.gmra.mxu0 %v2111
      %v2201 = vpop.f32.mrf.mxu0
      %v2202 = vadd.f32 0.0, %v2201
      %v2203 = vpop.f32.mrf.mxu0
      %v2204 = vadd.f32 0.0, %v2203
      %2205 = vdwg.mxu0
      %v2206 = vld [vmem:[%s3] sm:$0x1]
      %v2208 = vperm.slane %v2206, 0
      %v2210 = vmul.f32 %v2127, %v2208
      %v2211 = vmul.f32 %v2129, %v2208
      %v2212 = vmul.f32 %v2132, %v2208
      %v2213 = vmul.f32 %v2134, %v2208
      %v2214 = vmul.f32 %v2137, %v2208
      %v2215 = vmul.f32 %v2139, %v2208
      %v2216 = vmul.f32 %v2142, %v2208
      %v2217 = vmul.f32 %v2144, %v2208
      %v2218 = vmul.f32 %v2147, %v2208
      %v2219 = vmul.f32 %v2149, %v2208
      %v2220 = vmul.f32 %v2152, %v2208
      %v2221 = vmul.f32 %v2154, %v2208
      %v2222 = vmul.f32 %v2157, %v2208
      %v2223 = vmul.f32 %v2159, %v2208
      %v2224 = vmul.f32 %v2162, %v2208
      %v2225 = vmul.f32 %v2164, %v2208
      %v2226 = vmul.f32 %v2167, %v2208
      %v2227 = vmul.f32 %v2169, %v2208
      %v2228 = vmul.f32 %v2172, %v2208
      %v2229 = vmul.f32 %v2174, %v2208
      %v2230 = vmul.f32 %v2177, %v2208
      %v2231 = vmul.f32 %v2179, %v2208
      %v2232 = vmul.f32 %v2182, %v2208
      %v2233 = vmul.f32 %v2184, %v2208
      %v2234 = vmul.f32 %v2187, %v2208
      %v2235 = vmul.f32 %v2189, %v2208
      %v2236 = vmul.f32 %v2192, %v2208
      %v2237 = vmul.f32 %v2194, %v2208
      %v2238 = vmul.f32 %v2197, %v2208
      %v2239 = vmul.f32 %v2199, %v2208
      %v2240 = vmul.f32 %v2202, %v2208
      %v2241 = vmul.f32 %v2204, %v2208
      %v2242 = vld [vmem:[%s4] sm:$0x1]
      %v2244 = vperm.slane %v2242, 0
      %v2246 = vadd.f32 %v2210, %v2244
      %v2247 = vadd.f32 %v2211, %v2244
      %v2248 = vadd.f32 %v2212, %v2244
      %v2249 = vadd.f32 %v2213, %v2244
      %v2250 = vadd.f32 %v2214, %v2244
      %v2251 = vadd.f32 %v2215, %v2244
      %v2252 = vadd.f32 %v2216, %v2244
      %v2253 = vadd.f32 %v2217, %v2244
      %v2254 = vadd.f32 %v2218, %v2244
      %v2255 = vadd.f32 %v2219, %v2244
      %v2256 = vadd.f32 %v2220, %v2244
      %v2257 = vadd.f32 %v2221, %v2244
      %v2258 = vadd.f32 %v2222, %v2244
      %v2259 = vadd.f32 %v2223, %v2244
      %v2260 = vadd.f32 %v2224, %v2244
      %v2261 = vadd.f32 %v2225, %v2244
      %v2262 = vadd.f32 %v2226, %v2244
      %v2263 = vadd.f32 %v2227, %v2244
      %v2264 = vadd.f32 %v2228, %v2244
      %v2265 = vadd.f32 %v2229, %v2244
      %v2266 = vadd.f32 %v2230, %v2244
      %v2267 = vadd.f32 %v2231, %v2244
      %v2268 = vadd.f32 %v2232, %v2244
      %v2269 = vadd.f32 %v2233, %v2244
      %v2270 = vadd.f32 %v2234, %v2244
      %v2271 = vadd.f32 %v2235, %v2244
      %v2272 = vadd.f32 %v2236, %v2244
      %v2273 = vadd.f32 %v2237, %v2244
      %v2274 = vadd.f32 %v2238, %v2244
      %v2275 = vadd.f32 %v2239, %v2244
      %v2276 = vadd.f32 %v2240, %v2244
      %v2277 = vadd.f32 %v2241, %v2244
      %v2278 = vmax.f32 %v2246, 0.0
      %v2279 = vmax.f32 %v2247, 0.0
      %v2280 = vmax.f32 %v2248, 0.0
      %v2281 = vmax.f32 %v2249, 0.0
      %v2282 = vmax.f32 %v2250, 0.0
      %v2283 = vmax.f32 %v2251, 0.0
      %v2284 = vmax.f32 %v2252, 0.0
      %v2285 = vmax.f32 %v2253, 0.0
      %v2286 = vmax.f32 %v2254, 0.0
      %v2287 = vmax.f32 %v2255, 0.0
      %v2288 = vmax.f32 %v2256, 0.0
      %v2289 = vmax.f32 %v2257, 0.0
      %v2290 = vmax.f32 %v2258, 0.0
      %v2291 = vmax.f32 %v2259, 0.0
      %v2292 = vmax.f32 %v2260, 0.0
      %v2293 = vmax.f32 %v2261, 0.0
      %v2294 = vmax.f32 %v2262, 0.0
      %v2295 = vmax.f32 %v2263, 0.0
      %v2296 = vmax.f32 %v2264, 0.0
      %v2297 = vmax.f32 %v2265, 0.0
      %v2298 = vmax.f32 %v2266, 0.0
      %v2299 = vmax.f32 %v2267, 0.0
      %v2300 = vmax.f32 %v2268, 0.0
      %v2301 = vmax.f32 %v2269, 0.0
      %v2302 = vmax.f32 %v2270, 0.0
      %v2303 = vmax.f32 %v2271, 0.0
      %v2304 = vmax.f32 %v2272, 0.0
      %v2305 = vmax.f32 %v2273, 0.0
      %v2306 = vmax.f32 %v2274, 0.0
      %v2307 = vmax.f32 %v2275, 0.0
      %v2308 = vmax.f32 %v2276, 0.0
      %v2309 = vmax.f32 %v2277, 0.0
      %2310 = vst.msk [vmem:[%s289 + $0x1] sm:$0xff] %vm280, %v2278
      %2311 = vst.msk [vmem:[%s289 + $0x9] sm:$0xff] %vm280, %v2279
      %2312 = vst.msk [vmem:[%s289 + $0x19] sm:$0xff] %vm280, %v2280
      %2313 = vst.msk [vmem:[%s289 + $0x21] sm:$0xff] %vm280, %v2281
      %2314 = vst.msk [vmem:[%s289 + $0x31] sm:$0xff] %vm280, %v2282
      %2315 = vst.msk [vmem:[%s289 + $0x39] sm:$0xff] %vm280, %v2283
      %2316 = vst.msk [vmem:[%s289 + $0x49] sm:$0xff] %vm280, %v2284
      %2317 = vst.msk [vmem:[%s289 + $0x51] sm:$0xff] %vm280, %v2285
      %2318 = vst.msk [vmem:[%s289 + $0x61] sm:$0xff] %vm280, %v2286
      %2319 = vst.msk [vmem:[%s289 + $0x69] sm:$0xff] %vm280, %v2287
      %2320 = vst.msk [vmem:[%s289 + $0x79] sm:$0xff] %vm280, %v2288
      %2321 = vst.msk [vmem:[%s289 + $0x81] sm:$0xff] %vm280, %v2289
      %2322 = vst.msk [vmem:[%s289 + $0x91] sm:$0xff] %vm280, %v2290
      %2323 = vst.msk [vmem:[%s289 + $0x99] sm:$0xff] %vm280, %v2291
      %2324 = vst.msk [vmem:[%s289 + $0xa9] sm:$0xff] %vm280, %v2292
      %2325 = vst.msk [vmem:[%s289 + $0xb1] sm:$0xff] %vm280, %v2293
      %2326 = vst.msk [vmem:[%s289 + $0xc1] sm:$0xff] %vm280, %v2294
      %2327 = vst.msk [vmem:[%s289 + $0xc9] sm:$0xff] %vm280, %v2295
      %2328 = vst.msk [vmem:[%s289 + $0xd9] sm:$0xff] %vm280, %v2296
      %2329 = vst.msk [vmem:[%s289 + $0xe1] sm:$0xff] %vm280, %v2297
      %2330 = vst.msk [vmem:[%s289 + $0xf1] sm:$0xff] %vm280, %v2298
      %2331 = vst.msk [vmem:[%s289 + $0xf9] sm:$0xff] %vm280, %v2299
      %2332 = vst.msk [vmem:[%s289 + $0x109] sm:$0xff] %vm280, %v2300
      %2333 = vst.msk [vmem:[%s289 + $0x111] sm:$0xff] %vm280, %v2301
      %2334 = vst.msk [vmem:[%s289 + $0x121] sm:$0xff] %vm280, %v2302
      %2335 = vst.msk [vmem:[%s289 + $0x129] sm:$0xff] %vm280, %v2303
      %2336 = vst.msk [vmem:[%s289 + $0x139] sm:$0xff] %vm280, %v2304
      %2337 = vst.msk [vmem:[%s289 + $0x141] sm:$0xff] %vm280, %v2305
      %2338 = vst.msk [vmem:[%s289 + $0x151] sm:$0xff] %vm280, %v2306
      %2339 = vst.msk [vmem:[%s289 + $0x159] sm:$0xff] %vm280, %v2307
      %2340 = vst.msk [vmem:[%s289 + $0x169] sm:$0xff] %vm280, %v2308
      %2341 = vst.msk [vmem:[%s289 + $0x171] sm:$0xff] %vm280, %v2309
      %v2342 = vld [vmem:[#allocation2] sm:$0xff]
      %v2343 = vld [vmem:[#allocation2 + $0x8] sm:$0xff]
      %v2344 = vld [vmem:[#allocation2 + $0x18] sm:$0xff]
      %v2345 = vld [vmem:[#allocation2 + $0x20] sm:$0xff]
      %v2346 = vld [vmem:[#allocation2 + $0x30] sm:$0xff]
      %v2347 = vld [vmem:[#allocation2 + $0x38] sm:$0xff]
      %v2348 = vld [vmem:[#allocation2 + $0x48] sm:$0xff]
      %v2349 = vld [vmem:[#allocation2 + $0x50] sm:$0xff]
      %v2350 = vld [vmem:[#allocation2 + $0x60] sm:$0xff]
      %v2351 = vld [vmem:[#allocation2 + $0x68] sm:$0xff]
      %v2352 = vld [vmem:[#allocation2 + $0x78] sm:$0xff]
      %v2353 = vld [vmem:[#allocation2 + $0x80] sm:$0xff]
      %v2354 = vld [vmem:[#allocation2 + $0x90] sm:$0xff]
      %v2355 = vld [vmem:[#allocation2 + $0x98] sm:$0xff]
      %v2356 = vld [vmem:[#allocation2 + $0xa8] sm:$0xff]
      %v2357 = vld [vmem:[#allocation2 + $0xb0] sm:$0xff]
      %v2358 = vld [vmem:[#allocation2 + $0xc0] sm:$0xff]
      %v2359 = vld [vmem:[#allocation2 + $0xc8] sm:$0xff]
      %v2360 = vld [vmem:[#allocation2 + $0xd8] sm:$0xff]
      %v2361 = vld [vmem:[#allocation2 + $0xe0] sm:$0xff]
      %v2362 = vld [vmem:[#allocation2 + $0xf0] sm:$0xff]
      %v2363 = vld [vmem:[#allocation2 + $0xf8] sm:$0xff]
      %v2364 = vld [vmem:[#allocation2 + $0x108] sm:$0xff]
      %v2365 = vld [vmem:[#allocation2 + $0x110] sm:$0xff]
      %v2366 = vld [vmem:[#allocation2 + $0x120] sm:$0xff]
      %v2367 = vld [vmem:[#allocation2 + $0x128] sm:$0xff]
      %v2368 = vld [vmem:[#allocation2 + $0x138] sm:$0xff]
      %v2369 = vld [vmem:[#allocation2 + $0x140] sm:$0xff]
      %v2370 = vld [vmem:[#allocation2 + $0x150] sm:$0xff]
      %v2371 = vld [vmem:[#allocation2 + $0x158] sm:$0xff]
      %v2372 = vld [vmem:[#allocation2 + $0x168] sm:$0xff]
      %v2373 = vld [vmem:[#allocation2 + $0x170] sm:$0xff]
      %2374 = vst.msk [vmem:[#allocation3] sm:$0xff] %vm280, %v2342
      %2375 = vst.msk [vmem:[#allocation3 + $0x8] sm:$0xff] %vm280, %v2343
      %2376 = vst.msk [vmem:[#allocation3 + $0x10] sm:$0xff] %vm280, %v2344
      %2377 = vst.msk [vmem:[#allocation3 + $0x18] sm:$0xff] %vm280, %v2345
      %2378 = vst.msk [vmem:[#allocation3 + $0x20] sm:$0xff] %vm280, %v2346
      %2379 = vst.msk [vmem:[#allocation3 + $0x28] sm:$0xff] %vm280, %v2347
      %2380 = vst.msk [vmem:[#allocation3 + $0x30] sm:$0xff] %vm280, %v2348
      %2381 = vst.msk [vmem:[#allocation3 + $0x38] sm:$0xff] %vm280, %v2349
      %2382 = vst.msk [vmem:[#allocation3 + $0x40] sm:$0xff] %vm280, %v2350
      %2383 = vst.msk [vmem:[#allocation3 + $0x48] sm:$0xff] %vm280, %v2351
      %2384 = vst.msk [vmem:[#allocation3 + $0x50] sm:$0xff] %vm280, %v2352
      %2385 = vst.msk [vmem:[#allocation3 + $0x58] sm:$0xff] %vm280, %v2353
      %2386 = vst.msk [vmem:[#allocation3 + $0x60] sm:$0xff] %vm280, %v2354
      %2387 = vst.msk [vmem:[#allocation3 + $0x68] sm:$0xff] %vm280, %v2355
      %2388 = vst.msk [vmem:[#allocation3 + $0x70] sm:$0xff] %vm280, %v2356
      %2389 = vst.msk [vmem:[#allocation3 + $0x78] sm:$0xff] %vm280, %v2357
      %2390 = vst.msk [vmem:[#allocation3 + $0x80] sm:$0xff] %vm280, %v2358
      %2391 = vst.msk [vmem:[#allocation3 + $0x88] sm:$0xff] %vm280, %v2359
      %2392 = vst.msk [vmem:[#allocation3 + $0x90] sm:$0xff] %vm280, %v2360
      %2393 = vst.msk [vmem:[#allocation3 + $0x98] sm:$0xff] %vm280, %v2361
      %2394 = vst.msk [vmem:[#allocation3 + $0xa0] sm:$0xff] %vm280, %v2362
      %2395 = vst.msk [vmem:[#allocation3 + $0xa8] sm:$0xff] %vm280, %v2363
      %2396 = vst.msk [vmem:[#allocation3 + $0xb0] sm:$0xff] %vm280, %v2364
      %2397 = vst.msk [vmem:[#allocation3 + $0xb8] sm:$0xff] %vm280, %v2365
      %2398 = vst.msk [vmem:[#allocation3 + $0xc0] sm:$0xff] %vm280, %v2366
      %2399 = vst.msk [vmem:[#allocation3 + $0xc8] sm:$0xff] %vm280, %v2367
      %2400 = vst.msk [vmem:[#allocation3 + $0xd0] sm:$0xff] %vm280, %v2368
      %2401 = vst.msk [vmem:[#allocation3 + $0xd8] sm:$0xff] %vm280, %v2369
      %2402 = vst.msk [vmem:[#allocation3 + $0xe0] sm:$0xff] %vm280, %v2370
      %2403 = vst.msk [vmem:[#allocation3 + $0xe8] sm:$0xff] %vm280, %v2371
      %2404 = vst.msk [vmem:[#allocation3 + $0xf0] sm:$0xff] %vm280, %v2372
      %2405 = vst.msk [vmem:[#allocation3 + $0xf8] sm:$0xff] %vm280, %v2373
      %v2406 = vld [vmem:[#allocation2 + $0x1] sm:$0xff]
      %v2407 = vld [vmem:[#allocation2 + $0x9] sm:$0xff]
      %v2408 = vld [vmem:[#allocation2 + $0x19] sm:$0xff]
      %v2409 = vld [vmem:[#allocation2 + $0x21] sm:$0xff]
      %v2410 = vld [vmem:[#allocation2 + $0x31] sm:$0xff]
      %v2411 = vld [vmem:[#allocation2 + $0x39] sm:$0xff]
      %v2412 = vld [vmem:[#allocation2 + $0x49] sm:$0xff]
      %v2413 = vld [vmem:[#allocation2 + $0x51] sm:$0xff]
      %v2414 = vld [vmem:[#allocation2 + $0x61] sm:$0xff]
      %v2415 = vld [vmem:[#allocation2 + $0x69] sm:$0xff]
      %v2416 = vld [vmem:[#allocation2 + $0x79] sm:$0xff]
      %v2417 = vld [vmem:[#allocation2 + $0x81] sm:$0xff]
      %v2418 = vld [vmem:[#allocation2 + $0x91] sm:$0xff]
      %v2419 = vld [vmem:[#allocation2 + $0x99] sm:$0xff]
      %v2420 = vld [vmem:[#allocation2 + $0xa9] sm:$0xff]
      %v2421 = vld [vmem:[#allocation2 + $0xb1] sm:$0xff]
      %v2422 = vld [vmem:[#allocation2 + $0xc1] sm:$0xff]
      %v2423 = vld [vmem:[#allocation2 + $0xc9] sm:$0xff]
      %v2424 = vld [vmem:[#allocation2 + $0xd9] sm:$0xff]
      %v2425 = vld [vmem:[#allocation2 + $0xe1] sm:$0xff]
      %v2426 = vld [vmem:[#allocation2 + $0xf1] sm:$0xff]
      %v2427 = vld [vmem:[#allocation2 + $0xf9] sm:$0xff]
      %v2428 = vld [vmem:[#allocation2 + $0x109] sm:$0xff]
      %v2429 = vld [vmem:[#allocation2 + $0x111] sm:$0xff]
      %v2430 = vld [vmem:[#allocation2 + $0x121] sm:$0xff]
      %v2431 = vld [vmem:[#allocation2 + $0x129] sm:$0xff]
      %v2432 = vld [vmem:[#allocation2 + $0x139] sm:$0xff]
      %v2433 = vld [vmem:[#allocation2 + $0x141] sm:$0xff]
      %v2434 = vld [vmem:[#allocation2 + $0x151] sm:$0xff]
      %v2435 = vld [vmem:[#allocation2 + $0x159] sm:$0xff]
      %v2436 = vld [vmem:[#allocation2 + $0x169] sm:$0xff]
      %v2437 = vld [vmem:[#allocation2 + $0x171] sm:$0xff]
      %2470 = vrot.lane.b32.xlu0 %v2406, 4
      %v2471 = vpop.permute.xlu0 %2470
      %2472 = vrot.lane.b32.xlu0 %v2407, 4
      %v2473 = vpop.permute.xlu0 %2472
      %2474 = vrot.lane.b32.xlu0 %v2408, 4
      %v2475 = vpop.permute.xlu0 %2474
      %2476 = vrot.lane.b32.xlu0 %v2409, 4
      %v2477 = vpop.permute.xlu0 %2476
      %2478 = vrot.lane.b32.xlu0 %v2410, 4
      %v2479 = vpop.permute.xlu0 %2478
      %2480 = vrot.lane.b32.xlu0 %v2411, 4
      %v2481 = vpop.permute.xlu0 %2480
      %2482 = vrot.lane.b32.xlu0 %v2412, 4
      %v2483 = vpop.permute.xlu0 %2482
      %2484 = vrot.lane.b32.xlu0 %v2413, 4
      %v2485 = vpop.permute.xlu0 %2484
      %2486 = vrot.lane.b32.xlu0 %v2414, 4
      %v2487 = vpop.permute.xlu0 %2486
      %2488 = vrot.lane.b32.xlu0 %v2415, 4
      %v2489 = vpop.permute.xlu0 %2488
      %2490 = vrot.lane.b32.xlu0 %v2416, 4
      %v2491 = vpop.permute.xlu0 %2490
      %2492 = vrot.lane.b32.xlu0 %v2417, 4
      %v2493 = vpop.permute.xlu0 %2492
      %2494 = vrot.lane.b32.xlu0 %v2418, 4
      %v2495 = vpop.permute.xlu0 %2494
      %2496 = vrot.lane.b32.xlu0 %v2419, 4
      %v2497 = vpop.permute.xlu0 %2496
      %2498 = vrot.lane.b32.xlu0 %v2420, 4
      %v2499 = vpop.permute.xlu0 %2498
      %2500 = vrot.lane.b32.xlu0 %v2421, 4
      %v2501 = vpop.permute.xlu0 %2500
      %2502 = vrot.lane.b32.xlu0 %v2422, 4
      %v2503 = vpop.permute.xlu0 %2502
      %2504 = vrot.lane.b32.xlu0 %v2423, 4
      %v2505 = vpop.permute.xlu0 %2504
      %2506 = vrot.lane.b32.xlu0 %v2424, 4
      %v2507 = vpop.permute.xlu0 %2506
      %2508 = vrot.lane.b32.xlu0 %v2425, 4
      %v2509 = vpop.permute.xlu0 %2508
      %2510 = vrot.lane.b32.xlu0 %v2426, 4
      %v2511 = vpop.permute.xlu0 %2510
      %2512 = vrot.lane.b32.xlu0 %v2427, 4
      %v2513 = vpop.permute.xlu0 %2512
      %2514 = vrot.lane.b32.xlu0 %v2428, 4
      %v2515 = vpop.permute.xlu0 %2514
      %2516 = vrot.lane.b32.xlu0 %v2429, 4
      %v2517 = vpop.permute.xlu0 %2516
      %2518 = vrot.lane.b32.xlu0 %v2430, 4
      %v2519 = vpop.permute.xlu0 %2518
      %2520 = vrot.lane.b32.xlu0 %v2431, 4
      %v2521 = vpop.permute.xlu0 %2520
      %2522 = vrot.lane.b32.xlu0 %v2432, 4
      %v2523 = vpop.permute.xlu0 %2522
      %2524 = vrot.lane.b32.xlu0 %v2433, 4
      %v2525 = vpop.permute.xlu0 %2524
      %2526 = vrot.lane.b32.xlu0 %v2434, 4
      %v2527 = vpop.permute.xlu0 %2526
      %2528 = vrot.lane.b32.xlu0 %v2435, 4
      %v2529 = vpop.permute.xlu0 %2528
      %2530 = vrot.lane.b32.xlu0 %v2436, 4
      %v2531 = vpop.permute.xlu0 %2530
      %2532 = vrot.lane.b32.xlu0 %v2437, 4
      %v2533 = vpop.permute.xlu0 %2532
      %2566 = vst.msk [vmem:[#allocation3] sm:$0xff] %vm611, %v2471
      %2567 = vst.msk [vmem:[#allocation3 + $0x8] sm:$0xff] %vm611, %v2473
      %2568 = vst.msk [vmem:[#allocation3 + $0x10] sm:$0xff] %vm611, %v2475
      %2569 = vst.msk [vmem:[#allocation3 + $0x18] sm:$0xff] %vm611, %v2477
      %2570 = vst.msk [vmem:[#allocation3 + $0x20] sm:$0xff] %vm611, %v2479
      %2571 = vst.msk [vmem:[#allocation3 + $0x28] sm:$0xff] %vm611, %v2481
      %2572 = vst.msk [vmem:[#allocation3 + $0x30] sm:$0xff] %vm611, %v2483
      %2573 = vst.msk [vmem:[#allocation3 + $0x38] sm:$0xff] %vm611, %v2485
      %2574 = vst.msk [vmem:[#allocation3 + $0x40] sm:$0xff] %vm611, %v2487
      %2575 = vst.msk [vmem:[#allocation3 + $0x48] sm:$0xff] %vm611, %v2489
      %2576 = vst.msk [vmem:[#allocation3 + $0x50] sm:$0xff] %vm611, %v2491
      %2577 = vst.msk [vmem:[#allocation3 + $0x58] sm:$0xff] %vm611, %v2493
      %2578 = vst.msk [vmem:[#allocation3 + $0x60] sm:$0xff] %vm611, %v2495
      %2579 = vst.msk [vmem:[#allocation3 + $0x68] sm:$0xff] %vm611, %v2497
      %2580 = vst.msk [vmem:[#allocation3 + $0x70] sm:$0xff] %vm611, %v2499
      %2581 = vst.msk [vmem:[#allocation3 + $0x78] sm:$0xff] %vm611, %v2501
      %2582 = vst.msk [vmem:[#allocation3 + $0x80] sm:$0xff] %vm611, %v2503
      %2583 = vst.msk [vmem:[#allocation3 + $0x88] sm:$0xff] %vm611, %v2505
      %2584 = vst.msk [vmem:[#allocation3 + $0x90] sm:$0xff] %vm611, %v2507
      %2585 = vst.msk [vmem:[#allocation3 + $0x98] sm:$0xff] %vm611, %v2509
      %2586 = vst.msk [vmem:[#allocation3 + $0xa0] sm:$0xff] %vm611, %v2511
      %2587 = vst.msk [vmem:[#allocation3 + $0xa8] sm:$0xff] %vm611, %v2513
      %2588 = vst.msk [vmem:[#allocation3 + $0xb0] sm:$0xff] %vm611, %v2515
      %2589 = vst.msk [vmem:[#allocation3 + $0xb8] sm:$0xff] %vm611, %v2517
      %2590 = vst.msk [vmem:[#allocation3 + $0xc0] sm:$0xff] %vm611, %v2519
      %2591 = vst.msk [vmem:[#allocation3 + $0xc8] sm:$0xff] %vm611, %v2521
      %2592 = vst.msk [vmem:[#allocation3 + $0xd0] sm:$0xff] %vm611, %v2523
      %2593 = vst.msk [vmem:[#allocation3 + $0xd8] sm:$0xff] %vm611, %v2525
      %2594 = vst.msk [vmem:[#allocation3 + $0xe0] sm:$0xff] %vm611, %v2527
      %2595 = vst.msk [vmem:[#allocation3 + $0xe8] sm:$0xff] %vm611, %v2529
      %2596 = vst.msk [vmem:[#allocation3 + $0xf0] sm:$0xff] %vm611, %v2531
      %2597 = vst.msk [vmem:[#allocation3 + $0xf8] sm:$0xff] %vm611, %v2533
      %v2598 = vld [vmem:[#allocation2 + $0x2] sm:$0xff]
      %v2599 = vld [vmem:[#allocation2 + $0xa] sm:$0xff]
      %v2600 = vld [vmem:[#allocation2 + $0x1a] sm:$0xff]
      %v2601 = vld [vmem:[#allocation2 + $0x22] sm:$0xff]
      %v2602 = vld [vmem:[#allocation2 + $0x32] sm:$0xff]
      %v2603 = vld [vmem:[#allocation2 + $0x3a] sm:$0xff]
      %v2604 = vld [vmem:[#allocation2 + $0x4a] sm:$0xff]
      %v2605 = vld [vmem:[#allocation2 + $0x52] sm:$0xff]
      %v2606 = vld [vmem:[#allocation2 + $0x62] sm:$0xff]
      %v2607 = vld [vmem:[#allocation2 + $0x6a] sm:$0xff]
      %v2608 = vld [vmem:[#allocation2 + $0x7a] sm:$0xff]
      %v2609 = vld [vmem:[#allocation2 + $0x82] sm:$0xff]
      %v2610 = vld [vmem:[#allocation2 + $0x92] sm:$0xff]
      %v2611 = vld [vmem:[#allocation2 + $0x9a] sm:$0xff]
      %v2612 = vld [vmem:[#allocation2 + $0xaa] sm:$0xff]
      %v2613 = vld [vmem:[#allocation2 + $0xb2] sm:$0xff]
      %v2614 = vld [vmem:[#allocation2 + $0xc2] sm:$0xff]
      %v2615 = vld [vmem:[#allocation2 + $0xca] sm:$0xff]
      %v2616 = vld [vmem:[#allocation2 + $0xda] sm:$0xff]
      %v2617 = vld [vmem:[#allocation2 + $0xe2] sm:$0xff]
      %v2618 = vld [vmem:[#allocation2 + $0xf2] sm:$0xff]
      %v2619 = vld [vmem:[#allocation2 + $0xfa] sm:$0xff]
      %v2620 = vld [vmem:[#allocation2 + $0x10a] sm:$0xff]
      %v2621 = vld [vmem:[#allocation2 + $0x112] sm:$0xff]
      %v2622 = vld [vmem:[#allocation2 + $0x122] sm:$0xff]
      %v2623 = vld [vmem:[#allocation2 + $0x12a] sm:$0xff]
      %v2624 = vld [vmem:[#allocation2 + $0x13a] sm:$0xff]
      %v2625 = vld [vmem:[#allocation2 + $0x142] sm:$0xff]
      %v2626 = vld [vmem:[#allocation2 + $0x152] sm:$0xff]
      %v2627 = vld [vmem:[#allocation2 + $0x15a] sm:$0xff]
      %v2628 = vld [vmem:[#allocation2 + $0x16a] sm:$0xff]
      %v2629 = vld [vmem:[#allocation2 + $0x172] sm:$0xff]
      %2662 = vrot.lane.b32.xlu0 %v2598, 8
      %v2663 = vpop.permute.xlu0 %2662
      %2664 = vrot.lane.b32.xlu0 %v2599, 8
      %v2665 = vpop.permute.xlu0 %2664
      %2666 = vrot.lane.b32.xlu0 %v2600, 8
      %v2667 = vpop.permute.xlu0 %2666
      %2668 = vrot.lane.b32.xlu0 %v2601, 8
      %v2669 = vpop.permute.xlu0 %2668
      %2670 = vrot.lane.b32.xlu0 %v2602, 8
      %v2671 = vpop.permute.xlu0 %2670
      %2672 = vrot.lane.b32.xlu0 %v2603, 8
      %v2673 = vpop.permute.xlu0 %2672
      %2674 = vrot.lane.b32.xlu0 %v2604, 8
      %v2675 = vpop.permute.xlu0 %2674
      %2676 = vrot.lane.b32.xlu0 %v2605, 8
      %v2677 = vpop.permute.xlu0 %2676
      %2678 = vrot.lane.b32.xlu0 %v2606, 8
      %v2679 = vpop.permute.xlu0 %2678
      %2680 = vrot.lane.b32.xlu0 %v2607, 8
      %v2681 = vpop.permute.xlu0 %2680
      %2682 = vrot.lane.b32.xlu0 %v2608, 8
      %v2683 = vpop.permute.xlu0 %2682
      %2684 = vrot.lane.b32.xlu0 %v2609, 8
      %v2685 = vpop.permute.xlu0 %2684
      %2686 = vrot.lane.b32.xlu0 %v2610, 8
      %v2687 = vpop.permute.xlu0 %2686
      %2688 = vrot.lane.b32.xlu0 %v2611, 8
      %v2689 = vpop.permute.xlu0 %2688
      %2690 = vrot.lane.b32.xlu0 %v2612, 8
      %v2691 = vpop.permute.xlu0 %2690
      %2692 = vrot.lane.b32.xlu0 %v2613, 8
      %v2693 = vpop.permute.xlu0 %2692
      %2694 = vrot.lane.b32.xlu0 %v2614, 8
      %v2695 = vpop.permute.xlu0 %2694
      %2696 = vrot.lane.b32.xlu0 %v2615, 8
      %v2697 = vpop.permute.xlu0 %2696
      %2698 = vrot.lane.b32.xlu0 %v2616, 8
      %v2699 = vpop.permute.xlu0 %2698
      %2700 = vrot.lane.b32.xlu0 %v2617, 8
      %v2701 = vpop.permute.xlu0 %2700
      %2702 = vrot.lane.b32.xlu0 %v2618, 8
      %v2703 = vpop.permute.xlu0 %2702
      %2704 = vrot.lane.b32.xlu0 %v2619, 8
      %v2705 = vpop.permute.xlu0 %2704
      %2706 = vrot.lane.b32.xlu0 %v2620, 8
      %v2707 = vpop.permute.xlu0 %2706
      %2708 = vrot.lane.b32.xlu0 %v2621, 8
      %v2709 = vpop.permute.xlu0 %2708
      %2710 = vrot.lane.b32.xlu0 %v2622, 8
      %v2711 = vpop.permute.xlu0 %2710
      %2712 = vrot.lane.b32.xlu0 %v2623, 8
      %v2713 = vpop.permute.xlu0 %2712
      %2714 = vrot.lane.b32.xlu0 %v2624, 8
      %v2715 = vpop.permute.xlu0 %2714
      %2716 = vrot.lane.b32.xlu0 %v2625, 8
      %v2717 = vpop.permute.xlu0 %2716
      %2718 = vrot.lane.b32.xlu0 %v2626, 8
      %v2719 = vpop.permute.xlu0 %2718
      %2720 = vrot.lane.b32.xlu0 %v2627, 8
      %v2721 = vpop.permute.xlu0 %2720
      %2722 = vrot.lane.b32.xlu0 %v2628, 8
      %v2723 = vpop.permute.xlu0 %2722
      %2724 = vrot.lane.b32.xlu0 %v2629, 8
      %v2725 = vpop.permute.xlu0 %2724
      %2758 = vst.msk [vmem:[#allocation3] sm:$0xff] %vm804, %v2663
      %2759 = vst.msk [vmem:[#allocation3 + $0x8] sm:$0xff] %vm804, %v2665
      %2760 = vst.msk [vmem:[#allocation3 + $0x10] sm:$0xff] %vm804, %v2667
      %2761 = vst.msk [vmem:[#allocation3 + $0x18] sm:$0xff] %vm804, %v2669
      %2762 = vst.msk [vmem:[#allocation3 + $0x20] sm:$0xff] %vm804, %v2671
      %2763 = vst.msk [vmem:[#allocation3 + $0x28] sm:$0xff] %vm804, %v2673
      %2764 = vst.msk [vmem:[#allocation3 + $0x30] sm:$0xff] %vm804, %v2675
      %2765 = vst.msk [vmem:[#allocation3 + $0x38] sm:$0xff] %vm804, %v2677
      %2766 = vst.msk [vmem:[#allocation3 + $0x40] sm:$0xff] %vm804, %v2679
      %2767 = vst.msk [vmem:[#allocation3 + $0x48] sm:$0xff] %vm804, %v2681
      %2768 = vst.msk [vmem:[#allocation3 + $0x50] sm:$0xff] %vm804, %v2683
      %2769 = vst.msk [vmem:[#allocation3 + $0x58] sm:$0xff] %vm804, %v2685
      %2770 = vst.msk [vmem:[#allocation3 + $0x60] sm:$0xff] %vm804, %v2687
      %2771 = vst.msk [vmem:[#allocation3 + $0x68] sm:$0xff] %vm804, %v2689
      %2772 = vst.msk [vmem:[#allocation3 + $0x70] sm:$0xff] %vm804, %v2691
      %2773 = vst.msk [vmem:[#allocation3 + $0x78] sm:$0xff] %vm804, %v2693
      %2774 = vst.msk [vmem:[#allocation3 + $0x80] sm:$0xff] %vm804, %v2695
      %2775 = vst.msk [vmem:[#allocation3 + $0x88] sm:$0xff] %vm804, %v2697
      %2776 = vst.msk [vmem:[#allocation3 + $0x90] sm:$0xff] %vm804, %v2699
      %2777 = vst.msk [vmem:[#allocation3 + $0x98] sm:$0xff] %vm804, %v2701
      %2778 = vst.msk [vmem:[#allocation3 + $0xa0] sm:$0xff] %vm804, %v2703
      %2779 = vst.msk [vmem:[#allocation3 + $0xa8] sm:$0xff] %vm804, %v2705
      %2780 = vst.msk [vmem:[#allocation3 + $0xb0] sm:$0xff] %vm804, %v2707
      %2781 = vst.msk [vmem:[#allocation3 + $0xb8] sm:$0xff] %vm804, %v2709
      %2782 = vst.msk [vmem:[#allocation3 + $0xc0] sm:$0xff] %vm804, %v2711
      %2783 = vst.msk [vmem:[#allocation3 + $0xc8] sm:$0xff] %vm804, %v2713
      %2784 = vst.msk [vmem:[#allocation3 + $0xd0] sm:$0xff] %vm804, %v2715
      %2785 = vst.msk [vmem:[#allocation3 + $0xd8] sm:$0xff] %vm804, %v2717
      %2786 = vst.msk [vmem:[#allocation3 + $0xe0] sm:$0xff] %vm804, %v2719
      %2787 = vst.msk [vmem:[#allocation3 + $0xe8] sm:$0xff] %vm804, %v2721
      %2788 = vst.msk [vmem:[#allocation3 + $0xf0] sm:$0xff] %vm804, %v2723
      %2789 = vst.msk [vmem:[#allocation3 + $0xf8] sm:$0xff] %vm804, %v2725
      %v2790 = vld [vmem:[%s289] sm:$0xff]
      %v2791 = vld [vmem:[%s289 + $0x8] sm:$0xff]
      %v2792 = vld [vmem:[%s289 + $0x18] sm:$0xff]
      %v2793 = vld [vmem:[%s289 + $0x20] sm:$0xff]
      %v2794 = vld [vmem:[%s289 + $0x30] sm:$0xff]
      %v2795 = vld [vmem:[%s289 + $0x38] sm:$0xff]
      %v2796 = vld [vmem:[%s289 + $0x48] sm:$0xff]
      %v2797 = vld [vmem:[%s289 + $0x50] sm:$0xff]
      %v2798 = vld [vmem:[%s289 + $0x60] sm:$0xff]
      %v2799 = vld [vmem:[%s289 + $0x68] sm:$0xff]
      %v2800 = vld [vmem:[%s289 + $0x78] sm:$0xff]
      %v2801 = vld [vmem:[%s289 + $0x80] sm:$0xff]
      %v2802 = vld [vmem:[%s289 + $0x90] sm:$0xff]
      %v2803 = vld [vmem:[%s289 + $0x98] sm:$0xff]
      %v2804 = vld [vmem:[%s289 + $0xa8] sm:$0xff]
      %v2805 = vld [vmem:[%s289 + $0xb0] sm:$0xff]
      %v2806 = vld [vmem:[%s289 + $0xc0] sm:$0xff]
      %v2807 = vld [vmem:[%s289 + $0xc8] sm:$0xff]
      %v2808 = vld [vmem:[%s289 + $0xd8] sm:$0xff]
      %v2809 = vld [vmem:[%s289 + $0xe0] sm:$0xff]
      %v2810 = vld [vmem:[%s289 + $0xf0] sm:$0xff]
      %v2811 = vld [vmem:[%s289 + $0xf8] sm:$0xff]
      %v2812 = vld [vmem:[%s289 + $0x108] sm:$0xff]
      %v2813 = vld [vmem:[%s289 + $0x110] sm:$0xff]
      %v2814 = vld [vmem:[%s289 + $0x120] sm:$0xff]
      %v2815 = vld [vmem:[%s289 + $0x128] sm:$0xff]
      %v2816 = vld [vmem:[%s289 + $0x138] sm:$0xff]
      %v2817 = vld [vmem:[%s289 + $0x140] sm:$0xff]
      %v2818 = vld [vmem:[%s289 + $0x150] sm:$0xff]
      %v2819 = vld [vmem:[%s289 + $0x158] sm:$0xff]
      %v2820 = vld [vmem:[%s289 + $0x168] sm:$0xff]
      %v2821 = vld [vmem:[%s289 + $0x170] sm:$0xff]
      %2854 = vrot.lane.b32.xlu0 %v2790, 12
      %v2855 = vpop.permute.xlu0 %2854
      %2856 = vrot.lane.b32.xlu0 %v2791, 12
      %v2857 = vpop.permute.xlu0 %2856
      %2858 = vrot.lane.b32.xlu0 %v2792, 12
      %v2859 = vpop.permute.xlu0 %2858
      %2860 = vrot.lane.b32.xlu0 %v2793, 12
      %v2861 = vpop.permute.xlu0 %2860
      %2862 = vrot.lane.b32.xlu0 %v2794, 12
      %v2863 = vpop.permute.xlu0 %2862
      %2864 = vrot.lane.b32.xlu0 %v2795, 12
      %v2865 = vpop.permute.xlu0 %2864
      %2866 = vrot.lane.b32.xlu0 %v2796, 12
      %v2867 = vpop.permute.xlu0 %2866
      %2868 = vrot.lane.b32.xlu0 %v2797, 12
      %v2869 = vpop.permute.xlu0 %2868
      %2870 = vrot.lane.b32.xlu0 %v2798, 12
      %v2871 = vpop.permute.xlu0 %2870
      %2872 = vrot.lane.b32.xlu0 %v2799, 12
      %v2873 = vpop.permute.xlu0 %2872
      %2874 = vrot.lane.b32.xlu0 %v2800, 12
      %v2875 = vpop.permute.xlu0 %2874
      %2876 = vrot.lane.b32.xlu0 %v2801, 12
      %v2877 = vpop.permute.xlu0 %2876
      %2878 = vrot.lane.b32.xlu0 %v2802, 12
      %v2879 = vpop.permute.xlu0 %2878
      %2880 = vrot.lane.b32.xlu0 %v2803, 12
      %v2881 = vpop.permute.xlu0 %2880
      %2882 = vrot.lane.b32.xlu0 %v2804, 12
      %v2883 = vpop.permute.xlu0 %2882
      %2884 = vrot.lane.b32.xlu0 %v2805, 12
      %v2885 = vpop.permute.xlu0 %2884
      %2886 = vrot.lane.b32.xlu0 %v2806, 12
      %v2887 = vpop.permute.xlu0 %2886
      %2888 = vrot.lane.b32.xlu0 %v2807, 12
      %v2889 = vpop.permute.xlu0 %2888
      %2890 = vrot.lane.b32.xlu0 %v2808, 12
      %v2891 = vpop.permute.xlu0 %2890
      %2892 = vrot.lane.b32.xlu0 %v2809, 12
      %v2893 = vpop.permute.xlu0 %2892
      %2894 = vrot.lane.b32.xlu0 %v2810, 12
      %v2895 = vpop.permute.xlu0 %2894
      %2896 = vrot.lane.b32.xlu0 %v2811, 12
      %v2897 = vpop.permute.xlu0 %2896
      %2898 = vrot.lane.b32.xlu0 %v2812, 12
      %v2899 = vpop.permute.xlu0 %2898
      %2900 = vrot.lane.b32.xlu0 %v2813, 12
      %v2901 = vpop.permute.xlu0 %2900
      %2902 = vrot.lane.b32.xlu0 %v2814, 12
      %v2903 = vpop.permute.xlu0 %2902
      %2904 = vrot.lane.b32.xlu0 %v2815, 12
      %v2905 = vpop.permute.xlu0 %2904
      %2906 = vrot.lane.b32.xlu0 %v2816, 12
      %v2907 = vpop.permute.xlu0 %2906
      %2908 = vrot.lane.b32.xlu0 %v2817, 12
      %v2909 = vpop.permute.xlu0 %2908
      %2910 = vrot.lane.b32.xlu0 %v2818, 12
      %v2911 = vpop.permute.xlu0 %2910
      %2912 = vrot.lane.b32.xlu0 %v2819, 12
      %v2913 = vpop.permute.xlu0 %2912
      %2914 = vrot.lane.b32.xlu0 %v2820, 12
      %v2915 = vpop.permute.xlu0 %2914
      %2916 = vrot.lane.b32.xlu0 %v2821, 12
      %v2917 = vpop.permute.xlu0 %2916
      %2950 = vst.msk [vmem:[#allocation3] sm:$0xff] %vm997, %v2855
      %2951 = vst.msk [vmem:[#allocation3 + $0x8] sm:$0xff] %vm997, %v2857
      %2952 = vst.msk [vmem:[#allocation3 + $0x10] sm:$0xff] %vm997, %v2859
      %2953 = vst.msk [vmem:[#allocation3 + $0x18] sm:$0xff] %vm997, %v2861
      %2954 = vst.msk [vmem:[#allocation3 + $0x20] sm:$0xff] %vm997, %v2863
      %2955 = vst.msk [vmem:[#allocation3 + $0x28] sm:$0xff] %vm997, %v2865
      %2956 = vst.msk [vmem:[#allocation3 + $0x30] sm:$0xff] %vm997, %v2867
      %2957 = vst.msk [vmem:[#allocation3 + $0x38] sm:$0xff] %vm997, %v2869
      %2958 = vst.msk [vmem:[#allocation3 + $0x40] sm:$0xff] %vm997, %v2871
      %2959 = vst.msk [vmem:[#allocation3 + $0x48] sm:$0xff] %vm997, %v2873
      %2960 = vst.msk [vmem:[#allocation3 + $0x50] sm:$0xff] %vm997, %v2875
      %2961 = vst.msk [vmem:[#allocation3 + $0x58] sm:$0xff] %vm997, %v2877
      %2962 = vst.msk [vmem:[#allocation3 + $0x60] sm:$0xff] %vm997, %v2879
      %2963 = vst.msk [vmem:[#allocation3 + $0x68] sm:$0xff] %vm997, %v2881
      %2964 = vst.msk [vmem:[#allocation3 + $0x70] sm:$0xff] %vm997, %v2883
      %2965 = vst.msk [vmem:[#allocation3 + $0x78] sm:$0xff] %vm997, %v2885
      %2966 = vst.msk [vmem:[#allocation3 + $0x80] sm:$0xff] %vm997, %v2887
      %2967 = vst.msk [vmem:[#allocation3 + $0x88] sm:$0xff] %vm997, %v2889
      %2968 = vst.msk [vmem:[#allocation3 + $0x90] sm:$0xff] %vm997, %v2891
      %2969 = vst.msk [vmem:[#allocation3 + $0x98] sm:$0xff] %vm997, %v2893
      %2970 = vst.msk [vmem:[#allocation3 + $0xa0] sm:$0xff] %vm997, %v2895
      %2971 = vst.msk [vmem:[#allocation3 + $0xa8] sm:$0xff] %vm997, %v2897
      %2972 = vst.msk [vmem:[#allocation3 + $0xb0] sm:$0xff] %vm997, %v2899
      %2973 = vst.msk [vmem:[#allocation3 + $0xb8] sm:$0xff] %vm997, %v2901
      %2974 = vst.msk [vmem:[#allocation3 + $0xc0] sm:$0xff] %vm997, %v2903
      %2975 = vst.msk [vmem:[#allocation3 + $0xc8] sm:$0xff] %vm997, %v2905
      %2976 = vst.msk [vmem:[#allocation3 + $0xd0] sm:$0xff] %vm997, %v2907
      %2977 = vst.msk [vmem:[#allocation3 + $0xd8] sm:$0xff] %vm997, %v2909
      %2978 = vst.msk [vmem:[#allocation3 + $0xe0] sm:$0xff] %vm997, %v2911
      %2979 = vst.msk [vmem:[#allocation3 + $0xe8] sm:$0xff] %vm997, %v2913
      %2980 = vst.msk [vmem:[#allocation3 + $0xf0] sm:$0xff] %vm997, %v2915
      %2981 = vst.msk [vmem:[#allocation3 + $0xf8] sm:$0xff] %vm997, %v2917
      %v2982 = vld [vmem:[%s289 + $0x1] sm:$0xff]
      %v2983 = vld [vmem:[%s289 + $0x9] sm:$0xff]
      %v2984 = vld [vmem:[%s289 + $0x19] sm:$0xff]
      %v2985 = vld [vmem:[%s289 + $0x21] sm:$0xff]
      %v2986 = vld [vmem:[%s289 + $0x31] sm:$0xff]
      %v2987 = vld [vmem:[%s289 + $0x39] sm:$0xff]
      %v2988 = vld [vmem:[%s289 + $0x49] sm:$0xff]
      %v2989 = vld [vmem:[%s289 + $0x51] sm:$0xff]
      %v2990 = vld [vmem:[%s289 + $0x61] sm:$0xff]
      %v2991 = vld [vmem:[%s289 + $0x69] sm:$0xff]
      %v2992 = vld [vmem:[%s289 + $0x79] sm:$0xff]
      %v2993 = vld [vmem:[%s289 + $0x81] sm:$0xff]
      %v2994 = vld [vmem:[%s289 + $0x91] sm:$0xff]
      %v2995 = vld [vmem:[%s289 + $0x99] sm:$0xff]
      %v2996 = vld [vmem:[%s289 + $0xa9] sm:$0xff]
      %v2997 = vld [vmem:[%s289 + $0xb1] sm:$0xff]
      %v2998 = vld [vmem:[%s289 + $0xc1] sm:$0xff]
      %v2999 = vld [vmem:[%s289 + $0xc9] sm:$0xff]
      %v3000 = vld [vmem:[%s289 + $0xd9] sm:$0xff]
      %v3001 = vld [vmem:[%s289 + $0xe1] sm:$0xff]
      %v3002 = vld [vmem:[%s289 + $0xf1] sm:$0xff]
      %v3003 = vld [vmem:[%s289 + $0xf9] sm:$0xff]
      %v3004 = vld [vmem:[%s289 + $0x109] sm:$0xff]
      %v3005 = vld [vmem:[%s289 + $0x111] sm:$0xff]
      %v3006 = vld [vmem:[%s289 + $0x121] sm:$0xff]
      %v3007 = vld [vmem:[%s289 + $0x129] sm:$0xff]
      %v3008 = vld [vmem:[%s289 + $0x139] sm:$0xff]
      %v3009 = vld [vmem:[%s289 + $0x141] sm:$0xff]
      %v3010 = vld [vmem:[%s289 + $0x151] sm:$0xff]
      %v3011 = vld [vmem:[%s289 + $0x159] sm:$0xff]
      %v3012 = vld [vmem:[%s289 + $0x169] sm:$0xff]
      %v3013 = vld [vmem:[%s289 + $0x171] sm:$0xff]
      %3046 = vrot.lane.b32.xlu0 %v2982, 16
      %v3047 = vpop.permute.xlu0 %3046
      %3048 = vrot.lane.b32.xlu0 %v2983, 16
      %v3049 = vpop.permute.xlu0 %3048
      %3050 = vrot.lane.b32.xlu0 %v2984, 16
      %v3051 = vpop.permute.xlu0 %3050
      %3052 = vrot.lane.b32.xlu0 %v2985, 16
      %v3053 = vpop.permute.xlu0 %3052
      %3054 = vrot.lane.b32.xlu0 %v2986, 16
      %v3055 = vpop.permute.xlu0 %3054
      %3056 = vrot.lane.b32.xlu0 %v2987, 16
      %v3057 = vpop.permute.xlu0 %3056
      %3058 = vrot.lane.b32.xlu0 %v2988, 16
      %v3059 = vpop.permute.xlu0 %3058
      %3060 = vrot.lane.b32.xlu0 %v2989, 16
      %v3061 = vpop.permute.xlu0 %3060
      %3062 = vrot.lane.b32.xlu0 %v2990, 16
      %v3063 = vpop.permute.xlu0 %3062
      %3064 = vrot.lane.b32.xlu0 %v2991, 16
      %v3065 = vpop.permute.xlu0 %3064
      %3066 = vrot.lane.b32.xlu0 %v2992, 16
      %v3067 = vpop.permute.xlu0 %3066
      %3068 = vrot.lane.b32.xlu0 %v2993, 16
      %v3069 = vpop.permute.xlu0 %3068
      %3070 = vrot.lane.b32.xlu0 %v2994, 16
      %v3071 = vpop.permute.xlu0 %3070
      %3072 = vrot.lane.b32.xlu0 %v2995, 16
      %v3073 = vpop.permute.xlu0 %3072
      %3074 = vrot.lane.b32.xlu0 %v2996, 16
      %v3075 = vpop.permute.xlu0 %3074
      %3076 = vrot.lane.b32.xlu0 %v2997, 16
      %v3077 = vpop.permute.xlu0 %3076
      %3078 = vrot.lane.b32.xlu0 %v2998, 16
      %v3079 = vpop.permute.xlu0 %3078
      %3080 = vrot.lane.b32.xlu0 %v2999, 16
      %v3081 = vpop.permute.xlu0 %3080
      %3082 = vrot.lane.b32.xlu0 %v3000, 16
      %v3083 = vpop.permute.xlu0 %3082
      %3084 = vrot.lane.b32.xlu0 %v3001, 16
      %v3085 = vpop.permute.xlu0 %3084
      %3086 = vrot.lane.b32.xlu0 %v3002, 16
      %v3087 = vpop.permute.xlu0 %3086
      %3088 = vrot.lane.b32.xlu0 %v3003, 16
      %v3089 = vpop.permute.xlu0 %3088
      %3090 = vrot.lane.b32.xlu0 %v3004, 16
      %v3091 = vpop.permute.xlu0 %3090
      %3092 = vrot.lane.b32.xlu0 %v3005, 16
      %v3093 = vpop.permute.xlu0 %3092
      %3094 = vrot.lane.b32.xlu0 %v3006, 16
      %v3095 = vpop.permute.xlu0 %3094
      %3096 = vrot.lane.b32.xlu0 %v3007, 16
      %v3097 = vpop.permute.xlu0 %3096
      %3098 = vrot.lane.b32.xlu0 %v3008, 16
      %v3099 = vpop.permute.xlu0 %3098
      %3100 = vrot.lane.b32.xlu0 %v3009, 16
      %v3101 = vpop.permute.xlu0 %3100
      %3102 = vrot.lane.b32.xlu0 %v3010, 16
      %v3103 = vpop.permute.xlu0 %3102
      %3104 = vrot.lane.b32.xlu0 %v3011, 16
      %v3105 = vpop.permute.xlu0 %3104
      %3106 = vrot.lane.b32.xlu0 %v3012, 16
      %v3107 = vpop.permute.xlu0 %3106
      %3108 = vrot.lane.b32.xlu0 %v3013, 16
      %v3109 = vpop.permute.xlu0 %3108
      %3142 = vst.msk [vmem:[#allocation3] sm:$0xff] %vm1190, %v3047
      %3143 = vst.msk [vmem:[#allocation3 + $0x8] sm:$0xff] %vm1190, %v3049
      %3144 = vst.msk [vmem:[#allocation3 + $0x10] sm:$0xff] %vm1190, %v3051
      %3145 = vst.msk [vmem:[#allocation3 + $0x18] sm:$0xff] %vm1190, %v3053
      %3146 = vst.msk [vmem:[#allocation3 + $0x20] sm:$0xff] %vm1190, %v3055
      %3147 = vst.msk [vmem:[#allocation3 + $0x28] sm:$0xff] %vm1190, %v3057
      %3148 = vst.msk [vmem:[#allocation3 + $0x30] sm:$0xff] %vm1190, %v3059
      %3149 = vst.msk [vmem:[#allocation3 + $0x38] sm:$0xff] %vm1190, %v3061
      %3150 = vst.msk [vmem:[#allocation3 + $0x40] sm:$0xff] %vm1190, %v3063
      %3151 = vst.msk [vmem:[#allocation3 + $0x48] sm:$0xff] %vm1190, %v3065
      %3152 = vst.msk [vmem:[#allocation3 + $0x50] sm:$0xff] %vm1190, %v3067
      %3153 = vst.msk [vmem:[#allocation3 + $0x58] sm:$0xff] %vm1190, %v3069
      %3154 = vst.msk [vmem:[#allocation3 + $0x60] sm:$0xff] %vm1190, %v3071
      %3155 = vst.msk [vmem:[#allocation3 + $0x68] sm:$0xff] %vm1190, %v3073
      %3156 = vst.msk [vmem:[#allocation3 + $0x70] sm:$0xff] %vm1190, %v3075
      %3157 = vst.msk [vmem:[#allocation3 + $0x78] sm:$0xff] %vm1190, %v3077
      %3158 = vst.msk [vmem:[#allocation3 + $0x80] sm:$0xff] %vm1190, %v3079
      %3159 = vst.msk [vmem:[#allocation3 + $0x88] sm:$0xff] %vm1190, %v3081
      %3160 = vst.msk [vmem:[#allocation3 + $0x90] sm:$0xff] %vm1190, %v3083
      %3161 = vst.msk [vmem:[#allocation3 + $0x98] sm:$0xff] %vm1190, %v3085
      %3162 = vst.msk [vmem:[#allocation3 + $0xa0] sm:$0xff] %vm1190, %v3087
      %3163 = vst.msk [vmem:[#allocation3 + $0xa8] sm:$0xff] %vm1190, %v3089
      %3164 = vst.msk [vmem:[#allocation3 + $0xb0] sm:$0xff] %vm1190, %v3091
      %3165 = vst.msk [vmem:[#allocation3 + $0xb8] sm:$0xff] %vm1190, %v3093
      %3166 = vst.msk [vmem:[#allocation3 + $0xc0] sm:$0xff] %vm1190, %v3095
      %3167 = vst.msk [vmem:[#allocation3 + $0xc8] sm:$0xff] %vm1190, %v3097
      %3168 = vst.msk [vmem:[#allocation3 + $0xd0] sm:$0xff] %vm1190, %v3099
      %3169 = vst.msk [vmem:[#allocation3 + $0xd8] sm:$0xff] %vm1190, %v3101
      %3170 = vst.msk [vmem:[#allocation3 + $0xe0] sm:$0xff] %vm1190, %v3103
      %3171 = vst.msk [vmem:[#allocation3 + $0xe8] sm:$0xff] %vm1190, %v3105
      %3172 = vst.msk [vmem:[#allocation3 + $0xf0] sm:$0xff] %vm1190, %v3107
      %3173 = vst.msk [vmem:[#allocation3 + $0xf8] sm:$0xff] %vm1190, %v3109
      %v3174 = vld [vmem:[%s289 + $0x2] sm:$0xff]
      %v3175 = vld [vmem:[%s289 + $0xa] sm:$0xff]
      %v3176 = vld [vmem:[%s289 + $0x1a] sm:$0xff]
      %v3177 = vld [vmem:[%s289 + $0x22] sm:$0xff]
      %v3178 = vld [vmem:[%s289 + $0x32] sm:$0xff]
      %v3179 = vld [vmem:[%s289 + $0x3a] sm:$0xff]
      %v3180 = vld [vmem:[%s289 + $0x4a] sm:$0xff]
      %v3181 = vld [vmem:[%s289 + $0x52] sm:$0xff]
      %v3182 = vld [vmem:[%s289 + $0x62] sm:$0xff]
      %v3183 = vld [vmem:[%s289 + $0x6a] sm:$0xff]
      %v3184 = vld [vmem:[%s289 + $0x7a] sm:$0xff]
      %v3185 = vld [vmem:[%s289 + $0x82] sm:$0xff]
      %v3186 = vld [vmem:[%s289 + $0x92] sm:$0xff]
      %v3187 = vld [vmem:[%s289 + $0x9a] sm:$0xff]
      %v3188 = vld [vmem:[%s289 + $0xaa] sm:$0xff]
      %v3189 = vld [vmem:[%s289 + $0xb2] sm:$0xff]
      %v3190 = vld [vmem:[%s289 + $0xc2] sm:$0xff]
      %v3191 = vld [vmem:[%s289 + $0xca] sm:$0xff]
      %v3192 = vld [vmem:[%s289 + $0xda] sm:$0xff]
      %v3193 = vld [vmem:[%s289 + $0xe2] sm:$0xff]
      %v3194 = vld [vmem:[%s289 + $0xf2] sm:$0xff]
      %v3195 = vld [vmem:[%s289 + $0xfa] sm:$0xff]
      %v3196 = vld [vmem:[%s289 + $0x10a] sm:$0xff]
      %v3197 = vld [vmem:[%s289 + $0x112] sm:$0xff]
      %v3198 = vld [vmem:[%s289 + $0x122] sm:$0xff]
      %v3199 = vld [vmem:[%s289 + $0x12a] sm:$0xff]
      %v3200 = vld [vmem:[%s289 + $0x13a] sm:$0xff]
      %v3201 = vld [vmem:[%s289 + $0x142] sm:$0xff]
      %v3202 = vld [vmem:[%s289 + $0x152] sm:$0xff]
      %v3203 = vld [vmem:[%s289 + $0x15a] sm:$0xff]
      %v3204 = vld [vmem:[%s289 + $0x16a] sm:$0xff]
      %v3205 = vld [vmem:[%s289 + $0x172] sm:$0xff]
      %3238 = vrot.lane.b32.xlu0 %v3174, 20
      %v3239 = vpop.permute.xlu0 %3238
      %3240 = vrot.lane.b32.xlu0 %v3175, 20
      %v3241 = vpop.permute.xlu0 %3240
      %3242 = vrot.lane.b32.xlu0 %v3176, 20
      %v3243 = vpop.permute.xlu0 %3242
      %3244 = vrot.lane.b32.xlu0 %v3177, 20
      %v3245 = vpop.permute.xlu0 %3244
      %3246 = vrot.lane.b32.xlu0 %v3178, 20
      %v3247 = vpop.permute.xlu0 %3246
      %3248 = vrot.lane.b32.xlu0 %v3179, 20
      %v3249 = vpop.permute.xlu0 %3248
      %3250 = vrot.lane.b32.xlu0 %v3180, 20
      %v3251 = vpop.permute.xlu0 %3250
      %3252 = vrot.lane.b32.xlu0 %v3181, 20
      %v3253 = vpop.permute.xlu0 %3252
      %3254 = vrot.lane.b32.xlu0 %v3182, 20
      %v3255 = vpop.permute.xlu0 %3254
      %3256 = vrot.lane.b32.xlu0 %v3183, 20
      %v3257 = vpop.permute.xlu0 %3256
      %3258 = vrot.lane.b32.xlu0 %v3184, 20
      %v3259 = vpop.permute.xlu0 %3258
      %3260 = vrot.lane.b32.xlu0 %v3185, 20
      %v3261 = vpop.permute.xlu0 %3260
      %3262 = vrot.lane.b32.xlu0 %v3186, 20
      %v3263 = vpop.permute.xlu0 %3262
      %3264 = vrot.lane.b32.xlu0 %v3187, 20
      %v3265 = vpop.permute.xlu0 %3264
      %3266 = vrot.lane.b32.xlu0 %v3188, 20
      %v3267 = vpop.permute.xlu0 %3266
      %3268 = vrot.lane.b32.xlu0 %v3189, 20
      %v3269 = vpop.permute.xlu0 %3268
      %3270 = vrot.lane.b32.xlu0 %v3190, 20
      %v3271 = vpop.permute.xlu0 %3270
      %3272 = vrot.lane.b32.xlu0 %v3191, 20
      %v3273 = vpop.permute.xlu0 %3272
      %3274 = vrot.lane.b32.xlu0 %v3192, 20
      %v3275 = vpop.permute.xlu0 %3274
      %3276 = vrot.lane.b32.xlu0 %v3193, 20
      %v3277 = vpop.permute.xlu0 %3276
      %3278 = vrot.lane.b32.xlu0 %v3194, 20
      %v3279 = vpop.permute.xlu0 %3278
      %3280 = vrot.lane.b32.xlu0 %v3195, 20
      %v3281 = vpop.permute.xlu0 %3280
      %3282 = vrot.lane.b32.xlu0 %v3196, 20
      %v3283 = vpop.permute.xlu0 %3282
      %3284 = vrot.lane.b32.xlu0 %v3197, 20
      %v3285 = vpop.permute.xlu0 %3284
      %3286 = vrot.lane.b32.xlu0 %v3198, 20
      %v3287 = vpop.permute.xlu0 %3286
      %3288 = vrot.lane.b32.xlu0 %v3199, 20
      %v3289 = vpop.permute.xlu0 %3288
      %3290 = vrot.lane.b32.xlu0 %v3200, 20
      %v3291 = vpop.permute.xlu0 %3290
      %3292 = vrot.lane.b32.xlu0 %v3201, 20
      %v3293 = vpop.permute.xlu0 %3292
      %3294 = vrot.lane.b32.xlu0 %v3202, 20
      %v3295 = vpop.permute.xlu0 %3294
      %3296 = vrot.lane.b32.xlu0 %v3203, 20
      %v3297 = vpop.permute.xlu0 %3296
      %3298 = vrot.lane.b32.xlu0 %v3204, 20
      %v3299 = vpop.permute.xlu0 %3298
      %3300 = vrot.lane.b32.xlu0 %v3205, 20
      %v3301 = vpop.permute.xlu0 %3300
      %3334 = vst.msk [vmem:[#allocation3] sm:$0xff] %vm1383, %v3239
      %3335 = vst.msk [vmem:[#allocation3 + $0x8] sm:$0xff] %vm1383, %v3241
      %3336 = vst.msk [vmem:[#allocation3 + $0x10] sm:$0xff] %vm1383, %v3243
      %3337 = vst.msk [vmem:[#allocation3 + $0x18] sm:$0xff] %vm1383, %v3245
      %3338 = vst.msk [vmem:[#allocation3 + $0x20] sm:$0xff] %vm1383, %v3247
      %3339 = vst.msk [vmem:[#allocation3 + $0x28] sm:$0xff] %vm1383, %v3249
      %3340 = vst.msk [vmem:[#allocation3 + $0x30] sm:$0xff] %vm1383, %v3251
      %3341 = vst.msk [vmem:[#allocation3 + $0x38] sm:$0xff] %vm1383, %v3253
      %3342 = vst.msk [vmem:[#allocation3 + $0x40] sm:$0xff] %vm1383, %v3255
      %3343 = vst.msk [vmem:[#allocation3 + $0x48] sm:$0xff] %vm1383, %v3257
      %3344 = vst.msk [vmem:[#allocation3 + $0x50] sm:$0xff] %vm1383, %v3259
      %3345 = vst.msk [vmem:[#allocation3 + $0x58] sm:$0xff] %vm1383, %v3261
      %3346 = vst.msk [vmem:[#allocation3 + $0x60] sm:$0xff] %vm1383, %v3263
      %3347 = vst.msk [vmem:[#allocation3 + $0x68] sm:$0xff] %vm1383, %v3265
      %3348 = vst.msk [vmem:[#allocation3 + $0x70] sm:$0xff] %vm1383, %v3267
      %3349 = vst.msk [vmem:[#allocation3 + $0x78] sm:$0xff] %vm1383, %v3269
      %3350 = vst.msk [vmem:[#allocation3 + $0x80] sm:$0xff] %vm1383, %v3271
      %3351 = vst.msk [vmem:[#allocation3 + $0x88] sm:$0xff] %vm1383, %v3273
      %3352 = vst.msk [vmem:[#allocation3 + $0x90] sm:$0xff] %vm1383, %v3275
      %3353 = vst.msk [vmem:[#allocation3 + $0x98] sm:$0xff] %vm1383, %v3277
      %3354 = vst.msk [vmem:[#allocation3 + $0xa0] sm:$0xff] %vm1383, %v3279
      %3355 = vst.msk [vmem:[#allocation3 + $0xa8] sm:$0xff] %vm1383, %v3281
      %3356 = vst.msk [vmem:[#allocation3 + $0xb0] sm:$0xff] %vm1383, %v3283
      %3357 = vst.msk [vmem:[#allocation3 + $0xb8] sm:$0xff] %vm1383, %v3285
      %3358 = vst.msk [vmem:[#allocation3 + $0xc0] sm:$0xff] %vm1383, %v3287
      %3359 = vst.msk [vmem:[#allocation3 + $0xc8] sm:$0xff] %vm1383, %v3289
      %3360 = vst.msk [vmem:[#allocation3 + $0xd0] sm:$0xff] %vm1383, %v3291
      %3361 = vst.msk [vmem:[#allocation3 + $0xd8] sm:$0xff] %vm1383, %v3293
      %3362 = vst.msk [vmem:[#allocation3 + $0xe0] sm:$0xff] %vm1383, %v3295
      %3363 = vst.msk [vmem:[#allocation3 + $0xe8] sm:$0xff] %vm1383, %v3297
      %3364 = vst.msk [vmem:[#allocation3 + $0xf0] sm:$0xff] %vm1383, %v3299
      %3365 = vst.msk [vmem:[#allocation3 + $0xf8] sm:$0xff] %vm1383, %v3301
      %v3366 = vld [vmem:[%s1416] sm:$0xff]
      %v3367 = vld [vmem:[%s1416 + $0x8] sm:$0xff]
      %v3368 = vld [vmem:[%s1416 + $0x18] sm:$0xff]
      %v3369 = vld [vmem:[%s1416 + $0x20] sm:$0xff]
      %v3370 = vld [vmem:[%s1416 + $0x30] sm:$0xff]
      %v3371 = vld [vmem:[%s1416 + $0x38] sm:$0xff]
      %v3372 = vld [vmem:[%s1416 + $0x48] sm:$0xff]
      %v3373 = vld [vmem:[%s1416 + $0x50] sm:$0xff]
      %v3374 = vld [vmem:[%s1416 + $0x60] sm:$0xff]
      %v3375 = vld [vmem:[%s1416 + $0x68] sm:$0xff]
      %v3376 = vld [vmem:[%s1416 + $0x78] sm:$0xff]
      %v3377 = vld [vmem:[%s1416 + $0x80] sm:$0xff]
      %v3378 = vld [vmem:[%s1416 + $0x90] sm:$0xff]
      %v3379 = vld [vmem:[%s1416 + $0x98] sm:$0xff]
      %v3380 = vld [vmem:[%s1416 + $0xa8] sm:$0xff]
      %v3381 = vld [vmem:[%s1416 + $0xb0] sm:$0xff]
      %v3382 = vld [vmem:[%s1416 + $0xc0] sm:$0xff]
      %v3383 = vld [vmem:[%s1416 + $0xc8] sm:$0xff]
      %v3384 = vld [vmem:[%s1416 + $0xd8] sm:$0xff]
      %v3385 = vld [vmem:[%s1416 + $0xe0] sm:$0xff]
      %v3386 = vld [vmem:[%s1416 + $0xf0] sm:$0xff]
      %v3387 = vld [vmem:[%s1416 + $0xf8] sm:$0xff]
      %v3388 = vld [vmem:[%s1416 + $0x108] sm:$0xff]
      %v3389 = vld [vmem:[%s1416 + $0x110] sm:$0xff]
      %v3390 = vld [vmem:[%s1416 + $0x120] sm:$0xff]
      %v3391 = vld [vmem:[%s1416 + $0x128] sm:$0xff]
      %v3392 = vld [vmem:[%s1416 + $0x138] sm:$0xff]
      %v3393 = vld [vmem:[%s1416 + $0x140] sm:$0xff]
      %v3394 = vld [vmem:[%s1416 + $0x150] sm:$0xff]
      %v3395 = vld [vmem:[%s1416 + $0x158] sm:$0xff]
      %v3396 = vld [vmem:[%s1416 + $0x168] sm:$0xff]
      %v3397 = vld [vmem:[%s1416 + $0x170] sm:$0xff]
      %3430 = vrot.lane.b32.xlu0 %v3366, 24
      %v3431 = vpop.permute.xlu0 %3430
      %3432 = vrot.lane.b32.xlu0 %v3367, 24
      %v3433 = vpop.permute.xlu0 %3432
      %3434 = vrot.lane.b32.xlu0 %v3368, 24
      %v3435 = vpop.permute.xlu0 %3434
      %3436 = vrot.lane.b32.xlu0 %v3369, 24
      %v3437 = vpop.permute.xlu0 %3436
      %3438 = vrot.lane.b32.xlu0 %v3370, 24
      %v3439 = vpop.permute.xlu0 %3438
      %3440 = vrot.lane.b32.xlu0 %v3371, 24
      %v3441 = vpop.permute.xlu0 %3440
      %3442 = vrot.lane.b32.xlu0 %v3372, 24
      %v3443 = vpop.permute.xlu0 %3442
      %3444 = vrot.lane.b32.xlu0 %v3373, 24
      %v3445 = vpop.permute.xlu0 %3444
      %3446 = vrot.lane.b32.xlu0 %v3374, 24
      %v3447 = vpop.permute.xlu0 %3446
      %3448 = vrot.lane.b32.xlu0 %v3375, 24
      %v3449 = vpop.permute.xlu0 %3448
      %3450 = vrot.lane.b32.xlu0 %v3376, 24
      %v3451 = vpop.permute.xlu0 %3450
      %3452 = vrot.lane.b32.xlu0 %v3377, 24
      %v3453 = vpop.permute.xlu0 %3452
      %3454 = vrot.lane.b32.xlu0 %v3378, 24
      %v3455 = vpop.permute.xlu0 %3454
      %3456 = vrot.lane.b32.xlu0 %v3379, 24
      %v3457 = vpop.permute.xlu0 %3456
      %3458 = vrot.lane.b32.xlu0 %v3380, 24
      %v3459 = vpop.permute.xlu0 %3458
      %3460 = vrot.lane.b32.xlu0 %v3381, 24
      %v3461 = vpop.permute.xlu0 %3460
      %3462 = vrot.lane.b32.xlu0 %v3382, 24
      %v3463 = vpop.permute.xlu0 %3462
      %3464 = vrot.lane.b32.xlu0 %v3383, 24
      %v3465 = vpop.permute.xlu0 %3464
      %3466 = vrot.lane.b32.xlu0 %v3384, 24
      %v3467 = vpop.permute.xlu0 %3466
      %3468 = vrot.lane.b32.xlu0 %v3385, 24
      %v3469 = vpop.permute.xlu0 %3468
      %3470 = vrot.lane.b32.xlu0 %v3386, 24
      %v3471 = vpop.permute.xlu0 %3470
      %3472 = vrot.lane.b32.xlu0 %v3387, 24
      %v3473 = vpop.permute.xlu0 %3472
      %3474 = vrot.lane.b32.xlu0 %v3388, 24
      %v3475 = vpop.permute.xlu0 %3474
      %3476 = vrot.lane.b32.xlu0 %v3389, 24
      %v3477 = vpop.permute.xlu0 %3476
      %3478 = vrot.lane.b32.xlu0 %v3390, 24
      %v3479 = vpop.permute.xlu0 %3478
      %3480 = vrot.lane.b32.xlu0 %v3391, 24
      %v3481 = vpop.permute.xlu0 %3480
      %3482 = vrot.lane.b32.xlu0 %v3392, 24
      %v3483 = vpop.permute.xlu0 %3482
      %3484 = vrot.lane.b32.xlu0 %v3393, 24
      %v3485 = vpop.permute.xlu0 %3484
      %3486 = vrot.lane.b32.xlu0 %v3394, 24
      %v3487 = vpop.permute.xlu0 %3486
      %3488 = vrot.lane.b32.xlu0 %v3395, 24
      %v3489 = vpop.permute.xlu0 %3488
      %3490 = vrot.lane.b32.xlu0 %v3396, 24
      %v3491 = vpop.permute.xlu0 %3490
      %3492 = vrot.lane.b32.xlu0 %v3397, 24
      %v3493 = vpop.permute.xlu0 %3492
      %3526 = vst.msk [vmem:[#allocation3] sm:$0xff] %vm1577, %v3431
      %3527 = vst.msk [vmem:[#allocation3 + $0x8] sm:$0xff] %vm1577, %v3433
      %3528 = vst.msk [vmem:[#allocation3 + $0x10] sm:$0xff] %vm1577, %v3435
      %3529 = vst.msk [vmem:[#allocation3 + $0x18] sm:$0xff] %vm1577, %v3437
      %3530 = vst.msk [vmem:[#allocation3 + $0x20] sm:$0xff] %vm1577, %v3439
      %3531 = vst.msk [vmem:[#allocation3 + $0x28] sm:$0xff] %vm1577, %v3441
      %3532 = vst.msk [vmem:[#allocation3 + $0x30] sm:$0xff] %vm1577, %v3443
      %3533 = vst.msk [vmem:[#allocation3 + $0x38] sm:$0xff] %vm1577, %v3445
      %3534 = vst.msk [vmem:[#allocation3 + $0x40] sm:$0xff] %vm1577, %v3447
      %3535 = vst.msk [vmem:[#allocation3 + $0x48] sm:$0xff] %vm1577, %v3449
      %3536 = vst.msk [vmem:[#allocation3 + $0x50] sm:$0xff] %vm1577, %v3451
      %3537 = vst.msk [vmem:[#allocation3 + $0x58] sm:$0xff] %vm1577, %v3453
      %3538 = vst.msk [vmem:[#allocation3 + $0x60] sm:$0xff] %vm1577, %v3455
      %3539 = vst.msk [vmem:[#allocation3 + $0x68] sm:$0xff] %vm1577, %v3457
      %3540 = vst.msk [vmem:[#allocation3 + $0x70] sm:$0xff] %vm1577, %v3459
      %3541 = vst.msk [vmem:[#allocation3 + $0x78] sm:$0xff] %vm1577, %v3461
      %3542 = vst.msk [vmem:[#allocation3 + $0x80] sm:$0xff] %vm1577, %v3463
      %3543 = vst.msk [vmem:[#allocation3 + $0x88] sm:$0xff] %vm1577, %v3465
      %3544 = vst.msk [vmem:[#allocation3 + $0x90] sm:$0xff] %vm1577, %v3467
      %3545 = vst.msk [vmem:[#allocation3 + $0x98] sm:$0xff] %vm1577, %v3469
      %3546 = vst.msk [vmem:[#allocation3 + $0xa0] sm:$0xff] %vm1577, %v3471
      %3547 = vst.msk [vmem:[#allocation3 + $0xa8] sm:$0xff] %vm1577, %v3473
      %3548 = vst.msk [vmem:[#allocation3 + $0xb0] sm:$0xff] %vm1577, %v3475
      %3549 = vst.msk [vmem:[#allocation3 + $0xb8] sm:$0xff] %vm1577, %v3477
      %3550 = vst.msk [vmem:[#allocation3 + $0xc0] sm:$0xff] %vm1577, %v3479
      %3551 = vst.msk [vmem:[#allocation3 + $0xc8] sm:$0xff] %vm1577, %v3481
      %3552 = vst.msk [vmem:[#allocation3 + $0xd0] sm:$0xff] %vm1577, %v3483
      %3553 = vst.msk [vmem:[#allocation3 + $0xd8] sm:$0xff] %vm1577, %v3485
      %3554 = vst.msk [vmem:[#allocation3 + $0xe0] sm:$0xff] %vm1577, %v3487
      %3555 = vst.msk [vmem:[#allocation3 + $0xe8] sm:$0xff] %vm1577, %v3489
      %3556 = vst.msk [vmem:[#allocation3 + $0xf0] sm:$0xff] %vm1577, %v3491
      %3557 = vst.msk [vmem:[#allocation3 + $0xf8] sm:$0xff] %vm1577, %v3493
      %v3558 = vld [vmem:[%s1416 + $0x1] sm:$0xff]
      %v3559 = vld [vmem:[%s1416 + $0x9] sm:$0xff]
      %v3560 = vld [vmem:[%s1416 + $0x19] sm:$0xff]
      %v3561 = vld [vmem:[%s1416 + $0x21] sm:$0xff]
      %v3562 = vld [vmem:[%s1416 + $0x31] sm:$0xff]
      %v3563 = vld [vmem:[%s1416 + $0x39] sm:$0xff]
      %v3564 = vld [vmem:[%s1416 + $0x49] sm:$0xff]
      %v3565 = vld [vmem:[%s1416 + $0x51] sm:$0xff]
      %v3566 = vld [vmem:[%s1416 + $0x61] sm:$0xff]
      %v3567 = vld [vmem:[%s1416 + $0x69] sm:$0xff]
      %v3568 = vld [vmem:[%s1416 + $0x79] sm:$0xff]
      %v3569 = vld [vmem:[%s1416 + $0x81] sm:$0xff]
      %v3570 = vld [vmem:[%s1416 + $0x91] sm:$0xff]
      %v3571 = vld [vmem:[%s1416 + $0x99] sm:$0xff]
      %v3572 = vld [vmem:[%s1416 + $0xa9] sm:$0xff]
      %v3573 = vld [vmem:[%s1416 + $0xb1] sm:$0xff]
      %v3574 = vld [vmem:[%s1416 + $0xc1] sm:$0xff]
      %v3575 = vld [vmem:[%s1416 + $0xc9] sm:$0xff]
      %v3576 = vld [vmem:[%s1416 + $0xd9] sm:$0xff]
      %v3577 = vld [vmem:[%s1416 + $0xe1] sm:$0xff]
      %v3578 = vld [vmem:[%s1416 + $0xf1] sm:$0xff]
      %v3579 = vld [vmem:[%s1416 + $0xf9] sm:$0xff]
      %v3580 = vld [vmem:[%s1416 + $0x109] sm:$0xff]
      %v3581 = vld [vmem:[%s1416 + $0x111] sm:$0xff]
      %v3582 = vld [vmem:[%s1416 + $0x121] sm:$0xff]
      %v3583 = vld [vmem:[%s1416 + $0x129] sm:$0xff]
      %v3584 = vld [vmem:[%s1416 + $0x139] sm:$0xff]
      %v3585 = vld [vmem:[%s1416 + $0x141] sm:$0xff]
      %v3586 = vld [vmem:[%s1416 + $0x151] sm:$0xff]
      %v3587 = vld [vmem:[%s1416 + $0x159] sm:$0xff]
      %v3588 = vld [vmem:[%s1416 + $0x169] sm:$0xff]
      %v3589 = vld [vmem:[%s1416 + $0x171] sm:$0xff]
      %3622 = vrot.lane.b32.xlu0 %v3558, 28
      %v3623 = vpop.permute.xlu0 %3622
      %3624 = vrot.lane.b32.xlu0 %v3559, 28
      %v3625 = vpop.permute.xlu0 %3624
      %3626 = vrot.lane.b32.xlu0 %v3560, 28
      %v3627 = vpop.permute.xlu0 %3626
      %3628 = vrot.lane.b32.xlu0 %v3561, 28
      %v3629 = vpop.permute.xlu0 %3628
      %3630 = vrot.lane.b32.xlu0 %v3562, 28
      %v3631 = vpop.permute.xlu0 %3630
      %3632 = vrot.lane.b32.xlu0 %v3563, 28
      %v3633 = vpop.permute.xlu0 %3632
      %3634 = vrot.lane.b32.xlu0 %v3564, 28
      %v3635 = vpop.permute.xlu0 %3634
      %3636 = vrot.lane.b32.xlu0 %v3565, 28
      %v3637 = vpop.permute.xlu0 %3636
      %3638 = vrot.lane.b32.xlu0 %v3566, 28
      %v3639 = vpop.permute.xlu0 %3638
      %3640 = vrot.lane.b32.xlu0 %v3567, 28
      %v3641 = vpop.permute.xlu0 %3640
      %3642 = vrot.lane.b32.xlu0 %v3568, 28
      %v3643 = vpop.permute.xlu0 %3642
      %3644 = vrot.lane.b32.xlu0 %v3569, 28
      %v3645 = vpop.permute.xlu0 %3644
      %3646 = vrot.lane.b32.xlu0 %v3570, 28
      %v3647 = vpop.permute.xlu0 %3646
      %3648 = vrot.lane.b32.xlu0 %v3571, 28
      %v3649 = vpop.permute.xlu0 %3648
      %3650 = vrot.lane.b32.xlu0 %v3572, 28
      %v3651 = vpop.permute.xlu0 %3650
      %3652 = vrot.lane.b32.xlu0 %v3573, 28
      %v3653 = vpop.permute.xlu0 %3652
      %3654 = vrot.lane.b32.xlu0 %v3574, 28
      %v3655 = vpop.permute.xlu0 %3654
      %3656 = vrot.lane.b32.xlu0 %v3575, 28
      %v3657 = vpop.permute.xlu0 %3656
      %3658 = vrot.lane.b32.xlu0 %v3576, 28
      %v3659 = vpop.permute.xlu0 %3658
      %3660 = vrot.lane.b32.xlu0 %v3577, 28
      %v3661 = vpop.permute.xlu0 %3660
      %3662 = vrot.lane.b32.xlu0 %v3578, 28
      %v3663 = vpop.permute.xlu0 %3662
      %3664 = vrot.lane.b32.xlu0 %v3579, 28
      %v3665 = vpop.permute.xlu0 %3664
      %3666 = vrot.lane.b32.xlu0 %v3580, 28
      %v3667 = vpop.permute.xlu0 %3666
      %3668 = vrot.lane.b32.xlu0 %v3581, 28
      %v3669 = vpop.permute.xlu0 %3668
      %3670 = vrot.lane.b32.xlu0 %v3582, 28
      %v3671 = vpop.permute.xlu0 %3670
      %3672 = vrot.lane.b32.xlu0 %v3583, 28
      %v3673 = vpop.permute.xlu0 %3672
      %3674 = vrot.lane.b32.xlu0 %v3584, 28
      %v3675 = vpop.permute.xlu0 %3674
      %3676 = vrot.lane.b32.xlu0 %v3585, 28
      %v3677 = vpop.permute.xlu0 %3676
      %3678 = vrot.lane.b32.xlu0 %v3586, 28
      %v3679 = vpop.permute.xlu0 %3678
      %3680 = vrot.lane.b32.xlu0 %v3587, 28
      %v3681 = vpop.permute.xlu0 %3680
      %3682 = vrot.lane.b32.xlu0 %v3588, 28
      %v3683 = vpop.permute.xlu0 %3682
      %3684 = vrot.lane.b32.xlu0 %v3589, 28
      %v3685 = vpop.permute.xlu0 %3684
      %3718 = vst.msk [vmem:[#allocation3] sm:$0xff] %vm1770, %v3623
      %3719 = vst.msk [vmem:[#allocation3 + $0x8] sm:$0xff] %vm1770, %v3625
      %3720 = vst.msk [vmem:[#allocation3 + $0x10] sm:$0xff] %vm1770, %v3627
      %3721 = vst.msk [vmem:[#allocation3 + $0x18] sm:$0xff] %vm1770, %v3629
      %3722 = vst.msk [vmem:[#allocation3 + $0x20] sm:$0xff] %vm1770, %v3631
      %3723 = vst.msk [vmem:[#allocation3 + $0x28] sm:$0xff] %vm1770, %v3633
      %3724 = vst.msk [vmem:[#allocation3 + $0x30] sm:$0xff] %vm1770, %v3635
      %3725 = vst.msk [vmem:[#allocation3 + $0x38] sm:$0xff] %vm1770, %v3637
      %3726 = vst.msk [vmem:[#allocation3 + $0x40] sm:$0xff] %vm1770, %v3639
      %3727 = vst.msk [vmem:[#allocation3 + $0x48] sm:$0xff] %vm1770, %v3641
      %3728 = vst.msk [vmem:[#allocation3 + $0x50] sm:$0xff] %vm1770, %v3643
      %3729 = vst.msk [vmem:[#allocation3 + $0x58] sm:$0xff] %vm1770, %v3645
      %3730 = vst.msk [vmem:[#allocation3 + $0x60] sm:$0xff] %vm1770, %v3647
      %3731 = vst.msk [vmem:[#allocation3 + $0x68] sm:$0xff] %vm1770, %v3649
      %3732 = vst.msk [vmem:[#allocation3 + $0x70] sm:$0xff] %vm1770, %v3651
      %3733 = vst.msk [vmem:[#allocation3 + $0x78] sm:$0xff] %vm1770, %v3653
      %3734 = vst.msk [vmem:[#allocation3 + $0x80] sm:$0xff] %vm1770, %v3655
      %3735 = vst.msk [vmem:[#allocation3 + $0x88] sm:$0xff] %vm1770, %v3657
      %3736 = vst.msk [vmem:[#allocation3 + $0x90] sm:$0xff] %vm1770, %v3659
      %3737 = vst.msk [vmem:[#allocation3 + $0x98] sm:$0xff] %vm1770, %v3661
      %3738 = vst.msk [vmem:[#allocation3 + $0xa0] sm:$0xff] %vm1770, %v3663
      %3739 = vst.msk [vmem:[#allocation3 + $0xa8] sm:$0xff] %vm1770, %v3665
      %3740 = vst.msk [vmem:[#allocation3 + $0xb0] sm:$0xff] %vm1770, %v3667
      %3741 = vst.msk [vmem:[#allocation3 + $0xb8] sm:$0xff] %vm1770, %v3669
      %3742 = vst.msk [vmem:[#allocation3 + $0xc0] sm:$0xff] %vm1770, %v3671
      %3743 = vst.msk [vmem:[#allocation3 + $0xc8] sm:$0xff] %vm1770, %v3673
      %3744 = vst.msk [vmem:[#allocation3 + $0xd0] sm:$0xff] %vm1770, %v3675
      %3745 = vst.msk [vmem:[#allocation3 + $0xd8] sm:$0xff] %vm1770, %v3677
      %3746 = vst.msk [vmem:[#allocation3 + $0xe0] sm:$0xff] %vm1770, %v3679
      %3747 = vst.msk [vmem:[#allocation3 + $0xe8] sm:$0xff] %vm1770, %v3681
      %3748 = vst.msk [vmem:[#allocation3 + $0xf0] sm:$0xff] %vm1770, %v3683
      %3749 = vst.msk [vmem:[#allocation3 + $0xf8] sm:$0xff] %vm1770, %v3685
      %v3750 = vld [vmem:[%s1416 + $0x2] sm:$0xff]
      %v3751 = vld [vmem:[%s1416 + $0xa] sm:$0xff]
      %v3752 = vld [vmem:[%s1416 + $0x1a] sm:$0xff]
      %v3753 = vld [vmem:[%s1416 + $0x22] sm:$0xff]
      %v3754 = vld [vmem:[%s1416 + $0x32] sm:$0xff]
      %v3755 = vld [vmem:[%s1416 + $0x3a] sm:$0xff]
      %v3756 = vld [vmem:[%s1416 + $0x4a] sm:$0xff]
      %v3757 = vld [vmem:[%s1416 + $0x52] sm:$0xff]
      %v3758 = vld [vmem:[%s1416 + $0x62] sm:$0xff]
      %v3759 = vld [vmem:[%s1416 + $0x6a] sm:$0xff]
      %v3760 = vld [vmem:[%s1416 + $0x7a] sm:$0xff]
      %v3761 = vld [vmem:[%s1416 + $0x82] sm:$0xff]
      %v3762 = vld [vmem:[%s1416 + $0x92] sm:$0xff]
      %v3763 = vld [vmem:[%s1416 + $0x9a] sm:$0xff]
      %v3764 = vld [vmem:[%s1416 + $0xaa] sm:$0xff]
      %v3765 = vld [vmem:[%s1416 + $0xb2] sm:$0xff]
      %v3766 = vld [vmem:[%s1416 + $0xc2] sm:$0xff]
      %v3767 = vld [vmem:[%s1416 + $0xca] sm:$0xff]
      %v3768 = vld [vmem:[%s1416 + $0xda] sm:$0xff]
      %v3769 = vld [vmem:[%s1416 + $0xe2] sm:$0xff]
      %v3770 = vld [vmem:[%s1416 + $0xf2] sm:$0xff]
      %v3771 = vld [vmem:[%s1416 + $0xfa] sm:$0xff]
      %v3772 = vld [vmem:[%s1416 + $0x10a] sm:$0xff]
      %v3773 = vld [vmem:[%s1416 + $0x112] sm:$0xff]
      %v3774 = vld [vmem:[%s1416 + $0x122] sm:$0xff]
      %v3775 = vld [vmem:[%s1416 + $0x12a] sm:$0xff]
      %v3776 = vld [vmem:[%s1416 + $0x13a] sm:$0xff]
      %v3777 = vld [vmem:[%s1416 + $0x142] sm:$0xff]
      %v3778 = vld [vmem:[%s1416 + $0x152] sm:$0xff]
      %v3779 = vld [vmem:[%s1416 + $0x15a] sm:$0xff]
      %v3780 = vld [vmem:[%s1416 + $0x16a] sm:$0xff]
      %v3781 = vld [vmem:[%s1416 + $0x172] sm:$0xff]
      %3814 = vrot.lane.b32.xlu0 %v3750, 32
      %v3815 = vpop.permute.xlu0 %3814
      %3816 = vrot.lane.b32.xlu0 %v3751, 32
      %v3817 = vpop.permute.xlu0 %3816
      %3818 = vrot.lane.b32.xlu0 %v3752, 32
      %v3819 = vpop.permute.xlu0 %3818
      %3820 = vrot.lane.b32.xlu0 %v3753, 32
      %v3821 = vpop.permute.xlu0 %3820
      %3822 = vrot.lane.b32.xlu0 %v3754, 32
      %v3823 = vpop.permute.xlu0 %3822
      %3824 = vrot.lane.b32.xlu0 %v3755, 32
      %v3825 = vpop.permute.xlu0 %3824
      %3826 = vrot.lane.b32.xlu0 %v3756, 32
      %v3827 = vpop.permute.xlu0 %3826
      %3828 = vrot.lane.b32.xlu0 %v3757, 32
      %v3829 = vpop.permute.xlu0 %3828
      %3830 = vrot.lane.b32.xlu0 %v3758, 32
      %v3831 = vpop.permute.xlu0 %3830
      %3832 = vrot.lane.b32.xlu0 %v3759, 32
      %v3833 = vpop.permute.xlu0 %3832
      %3834 = vrot.lane.b32.xlu0 %v3760, 32
      %v3835 = vpop.permute.xlu0 %3834
      %3836 = vrot.lane.b32.xlu0 %v3761, 32
      %v3837 = vpop.permute.xlu0 %3836
      %3838 = vrot.lane.b32.xlu0 %v3762, 32
      %v3839 = vpop.permute.xlu0 %3838
      %3840 = vrot.lane.b32.xlu0 %v3763, 32
      %v3841 = vpop.permute.xlu0 %3840
      %3842 = vrot.lane.b32.xlu0 %v3764, 32
      %v3843 = vpop.permute.xlu0 %3842
      %3844 = vrot.lane.b32.xlu0 %v3765, 32
      %v3845 = vpop.permute.xlu0 %3844
      %3846 = vrot.lane.b32.xlu0 %v3766, 32
      %v3847 = vpop.permute.xlu0 %3846
      %3848 = vrot.lane.b32.xlu0 %v3767, 32
      %v3849 = vpop.permute.xlu0 %3848
      %3850 = vrot.lane.b32.xlu0 %v3768, 32
      %v3851 = vpop.permute.xlu0 %3850
      %3852 = vrot.lane.b32.xlu0 %v3769, 32
      %v3853 = vpop.permute.xlu0 %3852
      %3854 = vrot.lane.b32.xlu0 %v3770, 32
      %v3855 = vpop.permute.xlu0 %3854
      %3856 = vrot.lane.b32.xlu0 %v3771, 32
      %v3857 = vpop.permute.xlu0 %3856
      %3858 = vrot.lane.b32.xlu0 %v3772, 32
      %v3859 = vpop.permute.xlu0 %3858
      %3860 = vrot.lane.b32.xlu0 %v3773, 32
      %v3861 = vpop.permute.xlu0 %3860
      %3862 = vrot.lane.b32.xlu0 %v3774, 32
      %v3863 = vpop.permute.xlu0 %3862
      %3864 = vrot.lane.b32.xlu0 %v3775, 32
      %v3865 = vpop.permute.xlu0 %3864
      %3866 = vrot.lane.b32.xlu0 %v3776, 32
      %v3867 = vpop.permute.xlu0 %3866
      %3868 = vrot.lane.b32.xlu0 %v3777, 32
      %v3869 = vpop.permute.xlu0 %3868
      %3870 = vrot.lane.b32.xlu0 %v3778, 32
      %v3871 = vpop.permute.xlu0 %3870
      %3872 = vrot.lane.b32.xlu0 %v3779, 32
      %v3873 = vpop.permute.xlu0 %3872
      %3874 = vrot.lane.b32.xlu0 %v3780, 32
      %v3875 = vpop.permute.xlu0 %3874
      %3876 = vrot.lane.b32.xlu0 %v3781, 32
      %v3877 = vpop.permute.xlu0 %3876
      %3910 = vst.msk [vmem:[#allocation3] sm:$0xff] %vm1963, %v3815
      %3911 = vst.msk [vmem:[#allocation3 + $0x8] sm:$0xff] %vm1963, %v3817
      %3912 = vst.msk [vmem:[#allocation3 + $0x10] sm:$0xff] %vm1963, %v3819
      %3913 = vst.msk [vmem:[#allocation3 + $0x18] sm:$0xff] %vm1963, %v3821
      %3914 = vst.msk [vmem:[#allocation3 + $0x20] sm:$0xff] %vm1963, %v3823
      %3915 = vst.msk [vmem:[#allocation3 + $0x28] sm:$0xff] %vm1963, %v3825
      %3916 = vst.msk [vmem:[#allocation3 + $0x30] sm:$0xff] %vm1963, %v3827
      %3917 = vst.msk [vmem:[#allocation3 + $0x38] sm:$0xff] %vm1963, %v3829
      %3918 = vst.msk [vmem:[#allocation3 + $0x40] sm:$0xff] %vm1963, %v3831
      %3919 = vst.msk [vmem:[#allocation3 + $0x48] sm:$0xff] %vm1963, %v3833
      %3920 = vst.msk [vmem:[#allocation3 + $0x50] sm:$0xff] %vm1963, %v3835
      %3921 = vst.msk [vmem:[#allocation3 + $0x58] sm:$0xff] %vm1963, %v3837
      %3922 = vst.msk [vmem:[#allocation3 + $0x60] sm:$0xff] %vm1963, %v3839
      %3923 = vst.msk [vmem:[#allocation3 + $0x68] sm:$0xff] %vm1963, %v3841
      %3924 = vst.msk [vmem:[#allocation3 + $0x70] sm:$0xff] %vm1963, %v3843
      %3925 = vst.msk [vmem:[#allocation3 + $0x78] sm:$0xff] %vm1963, %v3845
      %3926 = vst.msk [vmem:[#allocation3 + $0x80] sm:$0xff] %vm1963, %v3847
      %3927 = vst.msk [vmem:[#allocation3 + $0x88] sm:$0xff] %vm1963, %v3849
      %3928 = vst.msk [vmem:[#allocation3 + $0x90] sm:$0xff] %vm1963, %v3851
      %3929 = vst.msk [vmem:[#allocation3 + $0x98] sm:$0xff] %vm1963, %v3853
      %3930 = vst.msk [vmem:[#allocation3 + $0xa0] sm:$0xff] %vm1963, %v3855
      %3931 = vst.msk [vmem:[#allocation3 + $0xa8] sm:$0xff] %vm1963, %v3857
      %3932 = vst.msk [vmem:[#allocation3 + $0xb0] sm:$0xff] %vm1963, %v3859
      %3933 = vst.msk [vmem:[#allocation3 + $0xb8] sm:$0xff] %vm1963, %v3861
      %3934 = vst.msk [vmem:[#allocation3 + $0xc0] sm:$0xff] %vm1963, %v3863
      %3935 = vst.msk [vmem:[#allocation3 + $0xc8] sm:$0xff] %vm1963, %v3865
      %3936 = vst.msk [vmem:[#allocation3 + $0xd0] sm:$0xff] %vm1963, %v3867
      %3937 = vst.msk [vmem:[#allocation3 + $0xd8] sm:$0xff] %vm1963, %v3869
      %3938 = vst.msk [vmem:[#allocation3 + $0xe0] sm:$0xff] %vm1963, %v3871
      %3939 = vst.msk [vmem:[#allocation3 + $0xe8] sm:$0xff] %vm1963, %v3873
      %3940 = vst.msk [vmem:[#allocation3 + $0xf0] sm:$0xff] %vm1963, %v3875
      %3941 = vst.msk [vmem:[#allocation3 + $0xf8] sm:$0xff] %vm1963, %v3877
      %v3942 = vld [vmem:[#allocation3] sm:$0xff]
      %v3943 = vld [vmem:[#allocation3 + $0x8] sm:$0xff]
      %v3944 = vld [vmem:[#allocation3 + $0x10] sm:$0xff]
      %v3945 = vld [vmem:[#allocation3 + $0x18] sm:$0xff]
      %v3946 = vld [vmem:[#allocation3 + $0x20] sm:$0xff]
      %v3947 = vld [vmem:[#allocation3 + $0x28] sm:$0xff]
      %v3948 = vld [vmem:[#allocation3 + $0x30] sm:$0xff]
      %v3949 = vld [vmem:[#allocation3 + $0x38] sm:$0xff]
      %v3950 = vld [vmem:[#allocation3 + $0x40] sm:$0xff]
      %v3951 = vld [vmem:[#allocation3 + $0x48] sm:$0xff]
      %v3952 = vld [vmem:[#allocation3 + $0x50] sm:$0xff]
      %v3953 = vld [vmem:[#allocation3 + $0x58] sm:$0xff]
      %v3954 = vld [vmem:[#allocation3 + $0x60] sm:$0xff]
      %v3955 = vld [vmem:[#allocation3 + $0x68] sm:$0xff]
      %v3956 = vld [vmem:[#allocation3 + $0x70] sm:$0xff]
      %v3957 = vld [vmem:[#allocation3 + $0x78] sm:$0xff]
      %v3958 = vld [vmem:[#allocation3 + $0x80] sm:$0xff]
      %v3959 = vld [vmem:[#allocation3 + $0x88] sm:$0xff]
      %v3960 = vld [vmem:[#allocation3 + $0x90] sm:$0xff]
      %v3961 = vld [vmem:[#allocation3 + $0x98] sm:$0xff]
      %v3962 = vld [vmem:[#allocation3 + $0xa0] sm:$0xff]
      %v3963 = vld [vmem:[#allocation3 + $0xa8] sm:$0xff]
      %v3964 = vld [vmem:[#allocation3 + $0xb0] sm:$0xff]
      %v3965 = vld [vmem:[#allocation3 + $0xb8] sm:$0xff]
      %v3966 = vld [vmem:[#allocation3 + $0xc0] sm:$0xff]
      %v3967 = vld [vmem:[#allocation3 + $0xc8] sm:$0xff]
      %v3968 = vld [vmem:[#allocation3 + $0xd0] sm:$0xff]
      %v3969 = vld [vmem:[#allocation3 + $0xd8] sm:$0xff]
      %v3970 = vld [vmem:[#allocation3 + $0xe0] sm:$0xff]
      %v3971 = vld [vmem:[#allocation3 + $0xe8] sm:$0xff]
      %v3972 = vld [vmem:[#allocation3 + $0xf0] sm:$0xff]
      %v3973 = vld [vmem:[#allocation3 + $0xf8] sm:$0xff]
      %v3974 = vpack.c.bf16 %v3943, %v3942
      %v3975 = vpack.c.bf16 %v3945, %v3944
      %v3976 = vpack.c.bf16 %v3947, %v3946
      %v3977 = vpack.c.bf16 %v3949, %v3948
      %v3978 = vpack.c.bf16 %v3951, %v3950
      %v3979 = vpack.c.bf16 %v3953, %v3952
      %v3980 = vpack.c.bf16 %v3955, %v3954
      %v3981 = vpack.c.bf16 %v3957, %v3956
      %v3982 = vpack.c.bf16 %v3959, %v3958
      %v3983 = vpack.c.bf16 %v3961, %v3960
      %v3984 = vpack.c.bf16 %v3963, %v3962
      %v3985 = vpack.c.bf16 %v3965, %v3964
      %v3986 = vpack.c.bf16 %v3967, %v3966
      %v3987 = vpack.c.bf16 %v3969, %v3968
      %v3988 = vpack.c.bf16 %v3971, %v3970
      %v3989 = vpack.c.bf16 %v3973, %v3972
      %v3990 = vld [vmem:[%s2] sm:$0xf]
      %v3991 = vld [vmem:[%s2 + $0x4] sm:$0xf]
      %v3992 = vld [vmem:[%s2 + $0x8] sm:$0xf]
      %v3993 = vld [vmem:[%s2 + $0xc] sm:$0xf]
      %v3994 = vld [vmem:[%s2 + $0x10] sm:$0x3]
      %v4000 = vunpack.c.l.b16 %v3990
      %v4001 = vunpack.c.l.b16 %v3991
      %v4002 = vunpack.c.l.b16 %v3992
      %v4003 = vunpack.c.l.b16 %v3993
      %v4004 = vunpack.c.l.b16 %v3994
      %v4005 = vpack.c.b16 %v4001, %v4000
      %v4006 = vpack.c.b16 %v4003, %v4002
      %v4007 = vpack.c.b16 %v4004, %v4004
      %v4011 = vsel %vm2064, %v3974, 0
      %v4014 = vsel %vm2064, %v3975, 0
      %v4017 = vsel %vm2064, %v3976, 0
      %v4020 = vsel %vm2064, %v3977, 0
      %v4023 = vsel %vm2064, %v3978, 0
      %v4026 = vsel %vm2064, %v3979, 0
      %v4029 = vsel %vm2064, %v3980, 0
      %v4032 = vsel %vm2064, %v3981, 0
      %v4035 = vsel %vm2064, %v3982, 0
      %v4038 = vsel %vm2064, %v3983, 0
      %v4041 = vsel %vm2064, %v3984, 0
      %v4044 = vsel %vm2064, %v3985, 0
      %v4047 = vsel %vm2064, %v3986, 0
      %v4050 = vsel %vm2064, %v3987, 0
      %v4053 = vsel %vm2064, %v3988, 0
      %v4056 = vsel %vm2064, %v3989, 0
      %v4059 = vsel %vm2113, %v4007, 0
      %4061 = vmatpush.bf16.msra.mxu0 0
      %4062 = vmatpush.bf16.msra.mxu0 0
      %4063 = vmatpush.bf16.msra.mxu0 0
      %4064 = vmatpush.bf16.msra.mxu0 0
      %4065 = vmatpush.bf16.msra.mxu0 0
      %4066 = vmatpush.bf16.msra.mxu0 %v4059
      %4067 = vmatpush.bf16.msra.mxu0 %v4006
      %4068 = vmatpush.bf16.msra.mxu0 %v4005
      %4069 = vmatmul.bf16.gmra.mxu0 %v4011
      %v4070 = vpop.f32.mrf.mxu0
      %v4071 = vadd.f32 0.0, %v4070
      %v4072 = vpop.f32.mrf.mxu0
      %v4073 = vadd.f32 0.0, %v4072
      %4074 = vmatmul.bf16.gmra.mxu0 %v4014
      %v4075 = vpop.f32.mrf.mxu0
      %v4076 = vadd.f32 0.0, %v4075
      %v4077 = vpop.f32.mrf.mxu0
      %v4078 = vadd.f32 0.0, %v4077
      %4079 = vmatmul.bf16.gmra.mxu0 %v4017
      %v4080 = vpop.f32.mrf.mxu0
      %v4081 = vadd.f32 0.0, %v4080
      %v4082 = vpop.f32.mrf.mxu0
      %v4083 = vadd.f32 0.0, %v4082
      %4084 = vmatmul.bf16.gmra.mxu0 %v4020
      %v4085 = vpop.f32.mrf.mxu0
      %v4086 = vadd.f32 0.0, %v4085
      %v4087 = vpop.f32.mrf.mxu0
      %v4088 = vadd.f32 0.0, %v4087
      %4089 = vmatmul.bf16.gmra.mxu0 %v4023
      %v4090 = vpop.f32.mrf.mxu0
      %v4091 = vadd.f32 0.0, %v4090
      %v4092 = vpop.f32.mrf.mxu0
      %v4093 = vadd.f32 0.0, %v4092
      %4094 = vmatmul.bf16.gmra.mxu0 %v4026
      %v4095 = vpop.f32.mrf.mxu0
      %v4096 = vadd.f32 0.0, %v4095
      %v4097 = vpop.f32.mrf.mxu0
      %v4098 = vadd.f32 0.0, %v4097
      %4099 = vmatmul.bf16.gmra.mxu0 %v4029
      %v4100 = vpop.f32.mrf.mxu0
      %v4101 = vadd.f32 0.0, %v4100
      %v4102 = vpop.f32.mrf.mxu0
      %v4103 = vadd.f32 0.0, %v4102
      %4104 = vmatmul.bf16.gmra.mxu0 %v4032
      %v4105 = vpop.f32.mrf.mxu0
      %v4106 = vadd.f32 0.0, %v4105
      %v4107 = vpop.f32.mrf.mxu0
      %v4108 = vadd.f32 0.0, %v4107
      %4109 = vmatmul.bf16.gmra.mxu0 %v4035
      %v4110 = vpop.f32.mrf.mxu0
      %v4111 = vadd.f32 0.0, %v4110
      %v4112 = vpop.f32.mrf.mxu0
      %v4113 = vadd.f32 0.0, %v4112
      %4114 = vmatmul.bf16.gmra.mxu0 %v4038
      %v4115 = vpop.f32.mrf.mxu0
      %v4116 = vadd.f32 0.0, %v4115
      %v4117 = vpop.f32.mrf.mxu0
      %v4118 = vadd.f32 0.0, %v4117
      %4119 = vmatmul.bf16.gmra.mxu0 %v4041
      %v4120 = vpop.f32.mrf.mxu0
      %v4121 = vadd.f32 0.0, %v4120
      %v4122 = vpop.f32.mrf.mxu0
      %v4123 = vadd.f32 0.0, %v4122
      %4124 = vmatmul.bf16.gmra.mxu0 %v4044
      %v4125 = vpop.f32.mrf.mxu0
      %v4126 = vadd.f32 0.0, %v4125
      %v4127 = vpop.f32.mrf.mxu0
      %v4128 = vadd.f32 0.0, %v4127
      %4129 = vmatmul.bf16.gmra.mxu0 %v4047
      %v4130 = vpop.f32.mrf.mxu0
      %v4131 = vadd.f32 0.0, %v4130
      %v4132 = vpop.f32.mrf.mxu0
      %v4133 = vadd.f32 0.0, %v4132
      %4134 = vmatmul.bf16.gmra.mxu0 %v4050
      %v4135 = vpop.f32.mrf.mxu0
      %v4136 = vadd.f32 0.0, %v4135
      %v4137 = vpop.f32.mrf.mxu0
      %v4138 = vadd.f32 0.0, %v4137
      %4139 = vmatmul.bf16.gmra.mxu0 %v4053
      %v4140 = vpop.f32.mrf.mxu0
      %v4141 = vadd.f32 0.0, %v4140
      %v4142 = vpop.f32.mrf.mxu0
      %v4143 = vadd.f32 0.0, %v4142
      %4144 = vmatmul.bf16.gmra.mxu0 %v4056
      %v4145 = vpop.f32.mrf.mxu0
      %v4146 = vadd.f32 0.0, %v4145
      %v4147 = vpop.f32.mrf.mxu0
      %v4148 = vadd.f32 0.0, %v4147
      %4149 = vdwg.mxu0
      %v4150 = vld [vmem:[%s5] sm:$0x1]
      %v4152 = vperm.slane %v4150, 0
      %v4154 = vmul.f32 %v4071, %v4152
      %v4155 = vmul.f32 %v4073, %v4152
      %v4156 = vmul.f32 %v4076, %v4152
      %v4157 = vmul.f32 %v4078, %v4152
      %v4158 = vmul.f32 %v4081, %v4152
      %v4159 = vmul.f32 %v4083, %v4152
      %v4160 = vmul.f32 %v4086, %v4152
      %v4161 = vmul.f32 %v4088, %v4152
      %v4162 = vmul.f32 %v4091, %v4152
      %v4163 = vmul.f32 %v4093, %v4152
      %v4164 = vmul.f32 %v4096, %v4152
      %v4165 = vmul.f32 %v4098, %v4152
      %v4166 = vmul.f32 %v4101, %v4152
      %v4167 = vmul.f32 %v4103, %v4152
      %v4168 = vmul.f32 %v4106, %v4152
      %v4169 = vmul.f32 %v4108, %v4152
      %v4170 = vmul.f32 %v4111, %v4152
      %v4171 = vmul.f32 %v4113, %v4152
      %v4172 = vmul.f32 %v4116, %v4152
      %v4173 = vmul.f32 %v4118, %v4152
      %v4174 = vmul.f32 %v4121, %v4152
      %v4175 = vmul.f32 %v4123, %v4152
      %v4176 = vmul.f32 %v4126, %v4152
      %v4177 = vmul.f32 %v4128, %v4152
      %v4178 = vmul.f32 %v4131, %v4152
      %v4179 = vmul.f32 %v4133, %v4152
      %v4180 = vmul.f32 %v4136, %v4152
      %v4181 = vmul.f32 %v4138, %v4152
      %v4182 = vmul.f32 %v4141, %v4152
      %v4183 = vmul.f32 %v4143, %v4152
      %v4184 = vmul.f32 %v4146, %v4152
      %v4185 = vmul.f32 %v4148, %v4152
      %v4186 = vld [vmem:[%s6] sm:$0x1]
      %v4188 = vperm.slane %v4186, 0
      %v4190 = vadd.f32 %v4154, %v4188
      %v4191 = vadd.f32 %v4155, %v4188
      %v4192 = vadd.f32 %v4156, %v4188
      %v4193 = vadd.f32 %v4157, %v4188
      %v4194 = vadd.f32 %v4158, %v4188
      %v4195 = vadd.f32 %v4159, %v4188
      %v4196 = vadd.f32 %v4160, %v4188
      %v4197 = vadd.f32 %v4161, %v4188
      %v4198 = vadd.f32 %v4162, %v4188
      %v4199 = vadd.f32 %v4163, %v4188
      %v4200 = vadd.f32 %v4164, %v4188
      %v4201 = vadd.f32 %v4165, %v4188
      %v4202 = vadd.f32 %v4166, %v4188
      %v4203 = vadd.f32 %v4167, %v4188
      %v4204 = vadd.f32 %v4168, %v4188
      %v4205 = vadd.f32 %v4169, %v4188
      %v4206 = vadd.f32 %v4170, %v4188
      %v4207 = vadd.f32 %v4171, %v4188
      %v4208 = vadd.f32 %v4172, %v4188
      %v4209 = vadd.f32 %v4173, %v4188
      %v4210 = vadd.f32 %v4174, %v4188
      %v4211 = vadd.f32 %v4175, %v4188
      %v4212 = vadd.f32 %v4176, %v4188
      %v4213 = vadd.f32 %v4177, %v4188
      %v4214 = vadd.f32 %v4178, %v4188
      %v4215 = vadd.f32 %v4179, %v4188
      %v4216 = vadd.f32 %v4180, %v4188
      %v4217 = vadd.f32 %v4181, %v4188
      %v4218 = vadd.f32 %v4182, %v4188
      %v4219 = vadd.f32 %v4183, %v4188
      %v4220 = vadd.f32 %v4184, %v4188
      %v4221 = vadd.f32 %v4185, %v4188
      %v4222 = vadd.f32 %v4190, %v323
      %v4223 = vadd.f32 %v4191, %v324
      %v4224 = vadd.f32 %v4192, %v325
      %v4225 = vadd.f32 %v4193, %v326
      %v4226 = vadd.f32 %v4194, %v327
      %v4227 = vadd.f32 %v4195, %v328
      %v4228 = vadd.f32 %v4196, %v329
      %v4229 = vadd.f32 %v4197, %v330
      %v4230 = vadd.f32 %v4198, %v331
      %v4231 = vadd.f32 %v4199, %v332
      %v4232 = vadd.f32 %v4200, %v333
      %v4233 = vadd.f32 %v4201, %v334
      %v4234 = vadd.f32 %v4202, %v335
      %v4235 = vadd.f32 %v4203, %v336
      %v4236 = vadd.f32 %v4204, %v337
      %v4237 = vadd.f32 %v4205, %v338
      %v4238 = vadd.f32 %v4206, %v339
      %v4239 = vadd.f32 %v4207, %v340
      %v4240 = vadd.f32 %v4208, %v341
      %v4241 = vadd.f32 %v4209, %v342
      %v4242 = vadd.f32 %v4210, %v343
      %v4243 = vadd.f32 %v4211, %v344
      %v4244 = vadd.f32 %v4212, %v345
      %v4245 = vadd.f32 %v4213, %v346
      %v4246 = vadd.f32 %v4214, %v347
      %v4247 = vadd.f32 %v4215, %v348
      %v4248 = vadd.f32 %v4216, %v349
      %v4249 = vadd.f32 %v4217, %v350
      %v4250 = vadd.f32 %v4218, %v351
      %v4251 = vadd.f32 %v4219, %v352
      %v4252 = vadd.f32 %v4220, %v353
      %v4253 = vadd.f32 %v4221, %v354
      %v4254 = vmax.f32 %v4222, 0.0
      %v4255 = vmax.f32 %v4223, 0.0
      %v4256 = vmax.f32 %v4224, 0.0
      %v4257 = vmax.f32 %v4225, 0.0
      %v4258 = vmax.f32 %v4226, 0.0
      %v4259 = vmax.f32 %v4227, 0.0
      %v4260 = vmax.f32 %v4228, 0.0
      %v4261 = vmax.f32 %v4229, 0.0
      %v4262 = vmax.f32 %v4230, 0.0
      %v4263 = vmax.f32 %v4231, 0.0
      %v4264 = vmax.f32 %v4232, 0.0
      %v4265 = vmax.f32 %v4233, 0.0
      %v4266 = vmax.f32 %v4234, 0.0
      %v4267 = vmax.f32 %v4235, 0.0
      %v4268 = vmax.f32 %v4236, 0.0
      %v4269 = vmax.f32 %v4237, 0.0
      %v4270 = vmax.f32 %v4238, 0.0
      %v4271 = vmax.f32 %v4239, 0.0
      %v4272 = vmax.f32 %v4240, 0.0
      %v4273 = vmax.f32 %v4241, 0.0
      %v4274 = vmax.f32 %v4242, 0.0
      %v4275 = vmax.f32 %v4243, 0.0
      %v4276 = vmax.f32 %v4244, 0.0
      %v4277 = vmax.f32 %v4245, 0.0
      %v4278 = vmax.f32 %v4246, 0.0
      %v4279 = vmax.f32 %v4247, 0.0
      %v4280 = vmax.f32 %v4248, 0.0
      %v4281 = vmax.f32 %v4249, 0.0
      %v4282 = vmax.f32 %v4250, 0.0
      %v4283 = vmax.f32 %v4251, 0.0
      %v4284 = vmax.f32 %v4252, 0.0
      %v4285 = vmax.f32 %v4253, 0.0
      %4286 = vst.msk [vmem:[%s278] sm:$0xff] %vm280, %v4254
      %4287 = vst.msk [vmem:[%s278 + $0x8] sm:$0xff] %vm280, %v4255
      %4288 = vst.msk [vmem:[%s278 + $0x10] sm:$0xff] %vm280, %v4256
      %4289 = vst.msk [vmem:[%s278 + $0x18] sm:$0xff] %vm280, %v4257
      %4290 = vst.msk [vmem:[%s278 + $0x20] sm:$0xff] %vm280, %v4258
      %4291 = vst.msk [vmem:[%s278 + $0x28] sm:$0xff] %vm280, %v4259
      %4292 = vst.msk [vmem:[%s278 + $0x30] sm:$0xff] %vm280, %v4260
      %4293 = vst.msk [vmem:[%s278 + $0x38] sm:$0xff] %vm280, %v4261
      %4294 = vst.msk [vmem:[%s278 + $0x40] sm:$0xff] %vm280, %v4262
      %4295 = vst.msk [vmem:[%s278 + $0x48] sm:$0xff] %vm280, %v4263
      %4296 = vst.msk [vmem:[%s278 + $0x50] sm:$0xff] %vm280, %v4264
      %4297 = vst.msk [vmem:[%s278 + $0x58] sm:$0xff] %vm280, %v4265
      %4298 = vst.msk [vmem:[%s278 + $0x60] sm:$0xff] %vm280, %v4266
      %4299 = vst.msk [vmem:[%s278 + $0x68] sm:$0xff] %vm280, %v4267
      %4300 = vst.msk [vmem:[%s278 + $0x70] sm:$0xff] %vm280, %v4268
      %4301 = vst.msk [vmem:[%s278 + $0x78] sm:$0xff] %vm280, %v4269
      %4302 = vst.msk [vmem:[%s278 + $0x80] sm:$0xff] %vm280, %v4270
      %4303 = vst.msk [vmem:[%s278 + $0x88] sm:$0xff] %vm280, %v4271
      %4304 = vst.msk [vmem:[%s278 + $0x90] sm:$0xff] %vm280, %v4272
      %4305 = vst.msk [vmem:[%s278 + $0x98] sm:$0xff] %vm280, %v4273
      %4306 = vst.msk [vmem:[%s278 + $0xa0] sm:$0xff] %vm280, %v4274
      %4307 = vst.msk [vmem:[%s278 + $0xa8] sm:$0xff] %vm280, %v4275
      %4308 = vst.msk [vmem:[%s278 + $0xb0] sm:$0xff] %vm280, %v4276
      %4309 = vst.msk [vmem:[%s278 + $0xb8] sm:$0xff] %vm280, %v4277
      %4310 = vst.msk [vmem:[%s278 + $0xc0] sm:$0xff] %vm280, %v4278
      %4311 = vst.msk [vmem:[%s278 + $0xc8] sm:$0xff] %vm280, %v4279
      %4312 = vst.msk [vmem:[%s278 + $0xd0] sm:$0xff] %vm280, %v4280
      %4313 = vst.msk [vmem:[%s278 + $0xd8] sm:$0xff] %vm280, %v4281
      %4314 = vst.msk [vmem:[%s278 + $0xe0] sm:$0xff] %vm280, %v4282
      %4315 = vst.msk [vmem:[%s278 + $0xe8] sm:$0xff] %vm280, %v4283
      %4316 = vst.msk [vmem:[%s278 + $0xf0] sm:$0xff] %vm280, %v4284
      %4317 = vst.msk [vmem:[%s278 + $0xf8] sm:$0xff] %vm280, %v4285
      %p4318 = scmp.lt.s32.totalorder %s18, 1
      %s4319 = scalar_select %p4318, %s18, 1
      %s4320 = smul.addr %s4319, 32
      %s4321 = smul.addr %s4320, 8
      %s4322 = scalar_lea.vmem %s7, %s4321
      // Predicated region
      $region49: #{tpu_custom_call.1} parent=47 // pred_check
        %p4323 = pneg %p188
      $region50: #{tpu_custom_call.1} parent=47 // pred_check_branch
        %4325 = sbr.rel (%p4323) target = $region52
      $region51: #{tpu_custom_call.1} parent=47 // pred_region
        _
      $region52: #{tpu_custom_call.1} parent=47 // pred_fallthru
        _
    $region48: #{tpu_custom_call.1} parent=5 // pred_fallthru
      _
    %p4326 = scmp.le.s32.totalorder 2, %s13
    // Predicated region
    $region53: #{tpu_custom_call.1} parent=5 // pred_check
      %p4327 = pneg %p4326
    $region54: #{tpu_custom_call.1} parent=5 // pred_check_branch
      %4329 = sbr.rel (%p4327) target = $region56
    $region55: #{tpu_custom_call.1} parent=5 // pred_region
      %s4330 = ssub.s32 %s13, 2
      // Predicated region
      $region57: #{tpu_custom_call.1} parent=55 // pred_check
        %p4331 = pneg %p194
      $region58: #{tpu_custom_call.1} parent=55 // pred_check_branch
        %4333 = sbr.rel (%p4331) target = $region60
      $region59: #{tpu_custom_call.1} parent=55 // pred_region
        %p4334 = scmp.lt.s32.totalorder %s19, 1
        %s4335 = scalar_select %p4334, %s19, 1
        %s4336 = smul.addr %s4335, 32
        %s4337 = smul.addr %s4336, 8
        %s4338 = scalar_lea.vmem %s7, %s4337
      $region60: #{tpu_custom_call.1} parent=55 // pred_fallthru
        _
    $region56: #{tpu_custom_call.1} parent=5 // pred_fallthru
      _
  $region6: #{tpu_custom_call.1} parent=0 // loop_footer
    %s17 = sadd.s32 1, %s13
  $region7: #{tpu_custom_call.1} parent=0 // loop_footer_branch
    %12 = sbr.rel target = $region3
  $region8: #{tpu_custom_call.1} parent=0 // loop_exit
    _

</llo_original>
